<compile_context>
chip_gen: v7x
topology: tpu7x:2x2x1
jax: 0.10.0
libtpu: 0.0.40
codegen_flags: <defaults>
</compile_context>

<pallas_src>
import jax
import jax.numpy as jnp
from jax import lax
from jax.experimental import pallas as pl
from jax.experimental.pallas import tpu as pltpu

EPS = 1e-12          # matches torch.nn.functional.normalize default eps

T_DIM = 768          # text feature dim
V_DIM = 1000         # image feature dim (used unpadded; Mosaic masks the last K tile)
HID = 512
OUT_DIM = 100        # fc_out output dim
OUT_DIM_PAD = 128    # padded for lane-dense output store


# ---------------------------------------------------------------------------
# Fused kernel: t_in+norm, v_in+norm, fc_out on implicit concat, contrastive loss
# ---------------------------------------------------------------------------
def fused_kernel(x_ref, y_ref, wt_ref, bt_ref, wv_ref, bv_ref,
                 wfx_ref, wfy_ref, bfc_ref,
                 xn_ref, yn_ref, out_ref, loss_ref):
    # activations cast to bf16 in-kernel; weights arrive bf16; accumulate in f32
    x_b = x_ref[...].astype(jnp.bfloat16)
    y_b = y_ref[...].astype(jnp.bfloat16)

    # t_in + L2 normalize (rsqrt on squared norm, eps^2 clamp == max(norm, eps))
    xh = jnp.dot(x_b, wt_ref[...], preferred_element_type=jnp.float32) + bt_ref[...]
    xn = xh * lax.rsqrt(jnp.maximum(jnp.sum(xh * xh, axis=-1, keepdims=True), EPS * EPS))
    xn_ref[...] = xn

    # v_in + L2 normalize (K = 1000, unpadded)
    yh = jnp.dot(y_b, wv_ref[...], preferred_element_type=jnp.float32) + bv_ref[...]
    yn = yh * lax.rsqrt(jnp.maximum(jnp.sum(yh * yh, axis=-1, keepdims=True), EPS * EPS))
    yn_ref[...] = yn

    xn_b = xn.astype(jnp.bfloat16)
    yn_b = yn.astype(jnp.bfloat16)

    # fc_out on the (implicit) concatenation [xn, yn]
    out = jnp.dot(xn_b, wfx_ref[...], preferred_element_type=jnp.float32)
    out = out + jnp.dot(yn_b, wfy_ref[...], preferred_element_type=jnp.float32)
    out_ref[...] = out + bfc_ref[...]

    # Two NT dots so BOTH cross-entropy terms reduce along the lane (last) axis.
    logits_t = lax.dot_general(xn_b, yn_b, (((1,), (1,)), ((), ())),
                               preferred_element_type=jnp.float32)      # (B, B) text rows
    logits_i = lax.dot_general(yn_b, xn_b, (((1,), (1,)), ((), ())),
                               preferred_element_type=jnp.float32)      # (B, B) image rows
    b = logits_t.shape[0]

    # unit-norm features -> logits in [-1, 1]; skip max-subtraction in the LSE
    lse_t = jnp.log(jnp.sum(jnp.exp(logits_t), axis=-1, keepdims=True))  # (B, 1)
    lse_i = jnp.log(jnp.sum(jnp.exp(logits_i), axis=-1, keepdims=True))  # (B, 1)

    # diagonal (matched-pair logit) computed once in f32, reused for both CE terms
    diag = jnp.sum(xn * yn, axis=-1, keepdims=True)                      # (B, 1)

    total = jnp.sum(lse_t) + jnp.sum(lse_i) - 2.0 * jnp.sum(diag)
    loss_ref[0, 0] = total / (2.0 * b)


def constractive_forward(x, y, params):
    (wt, bt), (wv, bv), (wfx, wfy, bfc_pad) = params
    B = x.shape[0]

    flops = 2 * B * (T_DIM * HID + V_DIM * HID + 2 * HID * OUT_DIM_PAD + 2 * B * HID)
    transcendentals = 2 * B * B + 4 * B
    bytes_accessed = (
        4 * B * (T_DIM + V_DIM)                                   # f32 activations in
        + 2 * (T_DIM * HID + V_DIM * HID + 2 * HID * OUT_DIM_PAD) # bf16 weights
        + 4 * (2 * HID + OUT_DIM_PAD)                             # f32 biases
        + 4 * (2 * B * HID + B * OUT_DIM_PAD + 1)                 # f32 outputs
    )

    xn, yn, out_pad, loss = pl.pallas_call(
        fused_kernel,
        out_shape=(
            jax.ShapeDtypeStruct((B, HID), jnp.float32),
            jax.ShapeDtypeStruct((B, HID), jnp.float32),
            jax.ShapeDtypeStruct((B, OUT_DIM_PAD), jnp.float32),
            jax.ShapeDtypeStruct((1, 1), jnp.float32),
        ),
        in_specs=[pl.BlockSpec(memory_space=pltpu.MemorySpace.VMEM)] * 9,
        out_specs=(
            pl.BlockSpec(memory_space=pltpu.MemorySpace.VMEM),
            pl.BlockSpec(memory_space=pltpu.MemorySpace.VMEM),
            pl.BlockSpec(memory_space=pltpu.MemorySpace.VMEM),
            pl.BlockSpec(memory_space=pltpu.MemorySpace.SMEM),
        ),
        cost_estimate=pl.CostEstimate(
            flops=flops, transcendentals=transcendentals, bytes_accessed=bytes_accessed),
    )(x, y, wt, bt, wv, bv, wfx, wfy, bfc_pad)

    # TODO(synk): drop this slice if the consumer accepts the padded (B, 128) buffer.
    return xn, yn, out_pad[:, :OUT_DIM], loss[0, 0]


# ---------------------------------------------------------------------------
# Parameter init (PyTorch-Linear-style uniform(-1/sqrt(in), 1/sqrt(in)))
# ---------------------------------------------------------------------------
def init_linear(key, d_in, d_out):
    kw, kb = jax.random.split(key)
    bound = 1.0 / jnp.sqrt(float(d_in))
    w = jax.random.uniform(kw, (d_in, d_out), jnp.float32, -bound, bound)  # stored as W^T
    b = jax.random.uniform(kb, (1, d_out), jnp.float32, -bound, bound)
    return w, b


def prepare_kernel_params(raw_params):
    """One-time bf16 cast / padding / splitting so the per-call path has no XLA prep."""
    (wt, bt), (wv, bv), (wfc, bfc) = raw_params
    wfc_pad = jnp.pad(wfc, ((0, 0), (0, OUT_DIM_PAD - wfc.shape[1])))     # (1024, 128)
    bfc_pad = jnp.pad(bfc, ((0, 0), (0, OUT_DIM_PAD - bfc.shape[1])))     # (1, 128) f32
    wfx = wfc_pad[:HID].astype(jnp.bfloat16)                              # (512, 128) bf16
    wfy = wfc_pad[HID:].astype(jnp.bfloat16)                              # (512, 128) bf16
    return ((wt.astype(jnp.bfloat16), bt),       # (768, 512) bf16, (1, 512) f32
            (wv.astype(jnp.bfloat16), bv),       # (1000, 512) bf16, (1, 512) f32
            (wfx, wfy, bfc_pad))


# pure-JAX f32 reference (on the original, unpadded parameters)
def reference_forward(x, y, raw_params):
    (wt, bt), (wv, bv), (wfc, bfc) = raw_params
    xh = x @ wt + bt
    yh = y @ wv + bv
    xn = xh / jnp.maximum(jnp.linalg.norm(xh, axis=-1, keepdims=True), EPS)
    yn = yh / jnp.maximum(jnp.linalg.norm(yh, axis=-1, keepdims=True), EPS)
    logits = xn @ yn.T
    B = x.shape[0]
    labels = jnp.arange(B)

    def ce(l):
        lse = jax.nn.logsumexp(l, axis=-1)
        return jnp.mean(lse - l[jnp.arange(B), labels])

    loss = 0.5 * (ce(logits) + ce(logits.T))
    out = jnp.concatenate([xn, yn], axis=1) @ wfc + bfc
    return xn, yn, out, loss


if __name__ == "__main__":
    key = jax.random.PRNGKey(0)
    k_t, k_v, k_fc, k_x, k_y = jax.random.split(key, 5)

    B = 8
    raw_params = (
        init_linear(k_t, T_DIM, HID),      # t_in
        init_linear(k_v, V_DIM, HID),      # v_in
        init_linear(k_fc, 1024, OUT_DIM),  # fc_out
    )
    params = prepare_kernel_params(raw_params)

    x = jax.random.normal(k_x, (B, T_DIM), jnp.float32)
    y = jax.random.normal(k_y, (B, V_DIM), jnp.float32)

    fwd = jax.jit(constractive_forward)
    xn, yn, out, loss = fwd(x, y, params)
    jax.block_until_ready((xn, yn, out, loss))

    xr, yr, outr, lossr = reference_forward(x, y, raw_params)
    # bf16 weights/activation casts in the kernel -> looser tolerances vs f32 reference
    assert jnp.allclose(xn, xr, atol=2e-2, rtol=2e-2)
    assert jnp.allclose(yn, yr, atol=2e-2, rtol=2e-2)
    assert jnp.allclose(out, outr, atol=2e-2, rtol=2e-2)
    assert jnp.allclose(loss, lossr, atol=1e-2, rtol=1e-2)

    print("KERNEL_OK")
</pallas_src>

<mosaic_0001>
module attributes {stable_mosaic.version = 11 : i64} {
  func.func @fused_kernel(%arg0: memref<8x768xf32, #tpu.memory_space<vmem>>, %arg1: memref<8x1000xf32, #tpu.memory_space<vmem>>, %arg2: memref<768x512xbf16, #tpu.memory_space<vmem>>, %arg3: memref<1x512xf32, #tpu.memory_space<vmem>>, %arg4: memref<1000x512xbf16, #tpu.memory_space<vmem>>, %arg5: memref<1x512xf32, #tpu.memory_space<vmem>>, %arg6: memref<512x128xbf16, #tpu.memory_space<vmem>>, %arg7: memref<512x128xbf16, #tpu.memory_space<vmem>>, %arg8: memref<1x128xf32, #tpu.memory_space<vmem>>, %arg9: memref<8x512xf32, #tpu.memory_space<vmem>>, %arg10: memref<8x512xf32, #tpu.memory_space<vmem>>, %arg11: memref<8x128xf32, #tpu.memory_space<vmem>>, %arg12: memref<1x1xf32, #tpu.memory_space<smem>>) attributes {dimension_semantics = [], scalar_prefetch = 0 : i64, scratch_operands = 0 : i64, tpu.core_type = #tpu.core_type<tc>} {
    %c0 = arith.constant 0 : index
    %c0_0 = arith.constant 0 : index
    %0 = vector.load %arg0[%c0, %c0_0] : memref<8x768xf32, #tpu.memory_space<vmem>>, vector<8x768xf32>
    %1 = arith.truncf %0 : vector<8x768xf32> to vector<8x768xbf16>
    %c0_1 = arith.constant 0 : index
    %c0_2 = arith.constant 0 : index
    %2 = vector.load %arg1[%c0_1, %c0_2] : memref<8x1000xf32, #tpu.memory_space<vmem>>, vector<8x1000xf32>
    %3 = arith.truncf %2 : vector<8x1000xf32> to vector<8x1000xbf16>
    %c0_3 = arith.constant 0 : index
    %c0_4 = arith.constant 0 : index
    %4 = vector.load %arg2[%c0_3, %c0_4] : memref<768x512xbf16, #tpu.memory_space<vmem>>, vector<768x512xbf16>
    %cst = arith.constant dense<0.000000e+00> : vector<8x512xf32>
    %5 = tpu.matmul %1, %4, %cst {dimension_numbers = #tpu.dot_dimension_numbers<[1], [0], [0], [1], [0, 0, 1, 1], [], []>} : vector<8x768xbf16>, vector<768x512xbf16>, vector<8x512xf32> -> vector<8x512xf32>
    %c0_5 = arith.constant 0 : index
    %c0_6 = arith.constant 0 : index
    %6 = vector.load %arg3[%c0_5, %c0_6] : memref<1x512xf32, #tpu.memory_space<vmem>>, vector<1x512xf32>
    %7 = vector.broadcast %6 : vector<1x512xf32> to vector<8x512xf32>
    %8 = arith.addf %5, %7 : vector<8x512xf32>
    %9 = arith.mulf %8, %8 : vector<8x512xf32>
    %cst_7 = arith.constant dense<0.000000e+00> : vector<8xf32>
    %10 = vector.multi_reduction <add>, %9, %cst_7 [1] : vector<8x512xf32> to vector<8xf32>
    %11 = vector.shape_cast %10 : vector<8xf32> to vector<8x1xf32>
    %cst_8 = arith.constant 1.000000e-24 : f32
    %12 = vector.broadcast %cst_8 : f32 to vector<8x1xf32>
    %13 = arith.maximumf %11, %12 : vector<8x1xf32>
    %14 = math.rsqrt %13 : vector<8x1xf32>
    %15 = vector.broadcast %14 : vector<8x1xf32> to vector<8x512xf32>
    %16 = arith.mulf %8, %15 : vector<8x512xf32>
    %c0_9 = arith.constant 0 : index
    %c0_10 = arith.constant 0 : index
    %17 = vector.load %arg9[%c0_9, %c0_10] : memref<8x512xf32, #tpu.memory_space<vmem>>, vector<8x512xf32>
    tpu.vector_store %arg9[%c0_9, %c0_10], %16 {strides = array<i32>} : memref<8x512xf32, #tpu.memory_space<vmem>>, vector<8x512xf32>,
    %c0_11 = arith.constant 0 : index
    %c0_12 = arith.constant 0 : index
    %18 = vector.load %arg4[%c0_11, %c0_12] : memref<1000x512xbf16, #tpu.memory_space<vmem>>, vector<1000x512xbf16>
    %cst_13 = arith.constant dense<0.000000e+00> : vector<8x512xf32>
    %19 = tpu.matmul %3, %18, %cst_13 {dimension_numbers = #tpu.dot_dimension_numbers<[1], [0], [0], [1], [0, 0, 1, 1], [], []>} : vector<8x1000xbf16>, vector<1000x512xbf16>, vector<8x512xf32> -> vector<8x512xf32>
    %c0_14 = arith.constant 0 : index
    %c0_15 = arith.constant 0 : index
    %20 = vector.load %arg5[%c0_14, %c0_15] : memref<1x512xf32, #tpu.memory_space<vmem>>, vector<1x512xf32>
    %21 = vector.broadcast %20 : vector<1x512xf32> to vector<8x512xf32>
    %22 = arith.addf %19, %21 : vector<8x512xf32>
    %23 = arith.mulf %22, %22 : vector<8x512xf32>
    %cst_16 = arith.constant dense<0.000000e+00> : vector<8xf32>
    %24 = vector.multi_reduction <add>, %23, %cst_16 [1] : vector<8x512xf32> to vector<8xf32>
    %25 = vector.shape_cast %24 : vector<8xf32> to vector<8x1xf32>
    %cst_17 = arith.constant 1.000000e-24 : f32
    %26 = vector.broadcast %cst_17 : f32 to vector<8x1xf32>
    %27 = arith.maximumf %25, %26 : vector<8x1xf32>
    %28 = math.rsqrt %27 : vector<8x1xf32>
    %29 = vector.broadcast %28 : vector<8x1xf32> to vector<8x512xf32>
    %30 = arith.mulf %22, %29 : vector<8x512xf32>
    %c0_18 = arith.constant 0 : index
    %c0_19 = arith.constant 0 : index
    %31 = vector.load %arg10[%c0_18, %c0_19] : memref<8x512xf32, #tpu.memory_space<vmem>>, vector<8x512xf32>
    tpu.vector_store %arg10[%c0_18, %c0_19], %30 {strides = array<i32>} : memref<8x512xf32, #tpu.memory_space<vmem>>, vector<8x512xf32>,
    %32 = arith.truncf %16 : vector<8x512xf32> to vector<8x512xbf16>
    %33 = arith.truncf %30 : vector<8x512xf32> to vector<8x512xbf16>
    %c0_20 = arith.constant 0 : index
    %c0_21 = arith.constant 0 : index
    %34 = vector.load %arg6[%c0_20, %c0_21] : memref<512x128xbf16, #tpu.memory_space<vmem>>, vector<512x128xbf16>
    %cst_22 = arith.constant dense<0.000000e+00> : vector<8x128xf32>
    %35 = tpu.matmul %32, %34, %cst_22 {dimension_numbers = #tpu.dot_dimension_numbers<[1], [0], [0], [1], [0, 0, 1, 1], [], []>} : vector<8x512xbf16>, vector<512x128xbf16>, vector<8x128xf32> -> vector<8x128xf32>
    %c0_23 = arith.constant 0 : index
    %c0_24 = arith.constant 0 : index
    %36 = vector.load %arg7[%c0_23, %c0_24] : memref<512x128xbf16, #tpu.memory_space<vmem>>, vector<512x128xbf16>
    %cst_25 = arith.constant dense<0.000000e+00> : vector<8x128xf32>
    %37 = tpu.matmul %33, %36, %cst_25 {dimension_numbers = #tpu.dot_dimension_numbers<[1], [0], [0], [1], [0, 0, 1, 1], [], []>} : vector<8x512xbf16>, vector<512x128xbf16>, vector<8x128xf32> -> vector<8x128xf32>
    %38 = arith.addf %35, %37 : vector<8x128xf32>
    %c0_26 = arith.constant 0 : index
    %c0_27 = arith.constant 0 : index
    %39 = vector.load %arg8[%c0_26, %c0_27] : memref<1x128xf32, #tpu.memory_space<vmem>>, vector<1x128xf32>
    %40 = vector.broadcast %39 : vector<1x128xf32> to vector<8x128xf32>
    %41 = arith.addf %38, %40 : vector<8x128xf32>
    %c0_28 = arith.constant 0 : index
    %c0_29 = arith.constant 0 : index
    %42 = vector.load %arg11[%c0_28, %c0_29] : memref<8x128xf32, #tpu.memory_space<vmem>>, vector<8x128xf32>
    tpu.vector_store %arg11[%c0_28, %c0_29], %41 {strides = array<i32>} : memref<8x128xf32, #tpu.memory_space<vmem>>, vector<8x128xf32>,
    %cst_30 = arith.constant dense<0.000000e+00> : vector<8x8xf32>
    %43 = tpu.matmul %32, %33, %cst_30 {dimension_numbers = #tpu.dot_dimension_numbers<[1], [1], [0], [0], [0, 0, 1, 0], [], []>} : vector<8x512xbf16>, vector<8x512xbf16>, vector<8x8xf32> -> vector<8x8xf32>
    %cst_31 = arith.constant dense<0.000000e+00> : vector<8x8xf32>
    %44 = tpu.matmul %33, %32, %cst_31 {dimension_numbers = #tpu.dot_dimension_numbers<[1], [1], [0], [0], [0, 0, 1, 0], [], []>} : vector<8x512xbf16>, vector<8x512xbf16>, vector<8x8xf32> -> vector<8x8xf32>
    %45 = math.exp %43 : vector<8x8xf32>
    %cst_32 = arith.constant dense<0.000000e+00> : vector<8xf32>
    %46 = vector.multi_reduction <add>, %45, %cst_32 [1] : vector<8x8xf32> to vector<8xf32>
    %47 = vector.shape_cast %46 : vector<8xf32> to vector<8x1xf32>
    %48 = math.log %47 : vector<8x1xf32>
    %49 = math.exp %44 : vector<8x8xf32>
    %cst_33 = arith.constant dense<0.000000e+00> : vector<8xf32>
    %50 = vector.multi_reduction <add>, %49, %cst_33 [1] : vector<8x8xf32> to vector<8xf32>
    %51 = vector.shape_cast %50 : vector<8xf32> to vector<8x1xf32>
    %52 = math.log %51 : vector<8x1xf32>
    %53 = arith.mulf %16, %30 : vector<8x512xf32>
    %cst_34 = arith.constant dense<0.000000e+00> : vector<8xf32>
    %54 = vector.multi_reduction <add>, %53, %cst_34 [1] : vector<8x512xf32> to vector<8xf32>
    %55 = vector.shape_cast %54 : vector<8xf32> to vector<8x1xf32>
    %56 = vector.shape_cast %48 : vector<8x1xf32> to vector<1x8x1xf32>
    %cst_35 = arith.constant dense<0.000000e+00> : vector<1xf32>
    %57 = vector.multi_reduction <add>, %56, %cst_35 [1, 2] : vector<1x8x1xf32> to vector<1xf32>
    %58 = vector.shape_cast %57 : vector<1xf32> to vector<1x1x1xf32>
    %59 = vector.extract %58[0, 0, 0] : f32 from vector<1x1x1xf32>
    %60 = vector.shape_cast %52 : vector<8x1xf32> to vector<1x8x1xf32>
    %cst_36 = arith.constant dense<0.000000e+00> : vector<1xf32>
    %61 = vector.multi_reduction <add>, %60, %cst_36 [1, 2] : vector<1x8x1xf32> to vector<1xf32>
    %62 = vector.shape_cast %61 : vector<1xf32> to vector<1x1x1xf32>
    %63 = vector.extract %62[0, 0, 0] : f32 from vector<1x1x1xf32>
    %64 = arith.addf %59, %63 : f32
    %65 = vector.shape_cast %55 : vector<8x1xf32> to vector<1x8x1xf32>
    %cst_37 = arith.constant dense<0.000000e+00> : vector<1xf32>
    %66 = vector.multi_reduction <add>, %65, %cst_37 [1, 2] : vector<1x8x1xf32> to vector<1xf32>
    %67 = vector.shape_cast %66 : vector<1xf32> to vector<1x1x1xf32>
    %68 = vector.extract %67[0, 0, 0] : f32 from vector<1x1x1xf32>
    %cst_38 = arith.constant 2.000000e+00 : f32
    %69 = arith.mulf %cst_38, %68 : f32
    %70 = arith.subf %64, %69 : f32
    %cst_39 = arith.constant 1.600000e+01 : f32
    %71 = arith.divf %70, %cst_39 : f32
    %c0_40 = arith.constant 0 : index
    %c0_41 = arith.constant 0 : index
    %72 = memref.load %arg12[%c0_40, %c0_41] : memref<1x1xf32, #tpu.memory_space<smem>>
    memref.store %71, %arg12[%c0_40, %c0_41] : memref<1x1xf32, #tpu.memory_space<smem>>
    return
  }
}

</mosaic_0001>

<llo_original>
// kernel: constractive_forward.1
$region0: #{constractive_forward.1}
  #allocation0 [shape = 'u32[]', space=smem, size = 0x4, offset = 0x4, fixed_abs, tag = 'smem constant byte address 0x4 - core index']
  #allocation1 [shape = 'u32[144,128]{1,0:T(1,128)}', space=vmem, size = 0x12000, scoped, tag = 'internal scratch']
  %s0 = inlined_call_operand.hbm [shape: f32[8,768], index: 0, kind: input, shape index: {}]
  %s1 = inlined_call_operand.hbm [shape: f32[8,1000], index: 1, kind: input, shape index: {}]
  %s2 = inlined_call_operand.hbm [shape: bf16[768,512], index: 2, kind: input, shape index: {}]
  %s3 = inlined_call_operand.vmem [shape: f32[1,512], index: 3, kind: input, shape index: {}]
  %s4 = inlined_call_operand.hbm [shape: bf16[1000,512], index: 4, kind: input, shape index: {}]
  %s5 = inlined_call_operand.vmem [shape: f32[1,512], index: 5, kind: input, shape index: {}]
  %s6 = inlined_call_operand.hbm [shape: bf16[512,128], index: 6, kind: input, shape index: {}]
  %s7 = inlined_call_operand.hbm [shape: bf16[512,128], index: 7, kind: input, shape index: {}]
  %s8 = inlined_call_operand.vmem [shape: f32[1,128], index: 8, kind: input, shape index: {}]
  %s9 = inlined_call_operand.hbm [shape: f32[8,512], index: 9, kind: output, shape index: {0}]
  %s10 = inlined_call_operand.hbm [shape: f32[8,512], index: 10, kind: output, shape index: {1}]
  %s11 = inlined_call_operand.hbm [shape: f32[8,128], index: 11, kind: output, shape index: {2}]
  %s12 = inlined_call_operand.hbm [shape: f32[1,1], index: 12, kind: output, shape index: {3}]
  %13 = xla_tuple %s9, %s10, %s11, %s12
  %s14 = sld [smem:[#allocation0]]
  $region94: #{constractive_forward.1} parent=0
    _
  %s16 = ssub.s32 1, %s14
  %s17 = scalar_select 0, %s16, %s14
  $region1: #{constractive_forward.1} parent=0
    #allocation2 [shape = 'u8[24576]{0}', space=vmem, size = 0x6000, scoped, tag = 'input window, operand 0, single buffered']
    #allocation3 [shape = 's32[1]{0}', space=sflag, size = 0x4, scoped, tag = 'scoped memory for constractive_forward.1']
    #allocation4 [shape = 's32[1]{0}', space=sflag, size = 0x4, scoped, tag = 'scoped memory for constractive_forward.1']
    #allocation5 [shape = 's32[1]{0}', space=sflag, size = 0x4, scoped, tag = 'scoped memory for constractive_forward.1']
    #allocation6 [shape = 'u8[32768]{0}', space=vmem, size = 0x8000, scoped, tag = 'input window, operand 1, single buffered']
    #allocation7 [shape = 's32[1]{0}', space=sflag, size = 0x4, scoped, tag = 'scoped memory for constractive_forward.1']
    #allocation8 [shape = 'u8[786432]{0}', space=vmem, size = 0xc0000, scoped, tag = 'input window, operand 2, single buffered']
    #allocation9 [shape = 'u8[1024000]{0}', space=vmem, size = 0xfa000, scoped, tag = 'input window, operand 4, single buffered']
    #allocation10 [shape = 's32[1]{0}', space=sflag, size = 0x4, scoped, tag = 'scoped memory for constractive_forward.1']
    #allocation11 [shape = 'u8[131072]{0}', space=vmem, size = 0x20000, scoped, tag = 'input window, operand 6, single buffered']
    #allocation12 [shape = 'u8[131072]{0}', space=vmem, size = 0x20000, scoped, tag = 'input window, operand 7, single buffered']
    #allocation13 [shape = 's32[1]{0}', space=sflag, size = 0x4, scoped, tag = 'scoped memory for constractive_forward.1']
    #allocation14 [shape = 'u8[16384]{0}', space=vmem, size = 0x4000, scoped, tag = 'output window, operand 0, single buffered']
    #allocation15 [shape = 'u8[16384]{0}', space=vmem, size = 0x4000, scoped, tag = 'output window, operand 1, single buffered']
    #allocation16 [shape = 's32[1]{0}', space=sflag, size = 0x4, scoped, tag = 'scoped memory for constractive_forward.1']
    #allocation17 [shape = 'u8[4096]{0}', space=vmem, size = 0x1000, scoped, tag = 'output window, operand 2, single buffered']
    #allocation18 [shape = 'u8[512]{0}', space=smem, size = 0x200, scoped, tag = 'output window, operand 3, single buffered']
    %18 = vsyncpa [#allocation3], 0
    %19 = vsyncpa [#allocation7], 0
    %20 = vsyncpa [#allocation10], 0
    %21 = vsyncpa [#allocation13], 0
    %22 = vsyncpa [#allocation4], 0
    %23 = vsyncpa [#allocation16], 0
    %24 = vsyncpa [#allocation5], 0
    // Predicated region
    $region2: #{constractive_forward.1} parent=1 // pred_check
      _
    $region3: #{constractive_forward.1} parent=1 // pred_check_branch
      %26 = sbr.rel (0) target = $region5
    $region4: #{constractive_forward.1} parent=1 // pred_region
      %s28 = ssub.s32 768, 768
      %29 = vsyncadd [#allocation3], %s28
      %s31 = sshll.u32 [#allocation2], 4
      %s32 = int_to_ptr.vmem [resolvable:$true] %s31
      %34 = dma.hbm_to_vmem [thread:$0]  %s0, 768, %s32, [#allocation3]
    $region5: #{constractive_forward.1} parent=1 // pred_fallthru
      _
    // Predicated region
    $region6: #{constractive_forward.1} parent=1 // pred_check
      _
    $region7: #{constractive_forward.1} parent=1 // pred_check_branch
      %36 = sbr.rel (0) target = $region9
    $region8: #{constractive_forward.1} parent=1 // pred_region
      %s38 = ssub.s32 1024, 1024
      %39 = vsyncadd [#allocation7], %s38
      %s41 = sshll.u32 [#allocation6], 4
      %s42 = int_to_ptr.vmem [resolvable:$true] %s41
      %44 = dma.hbm_to_vmem [thread:$0]  %s1, 1024, %s42, [#allocation7]
    $region9: #{constractive_forward.1} parent=1 // pred_fallthru
      _
    // Predicated region
    $region10: #{constractive_forward.1} parent=1 // pred_check
      _
    $region11: #{constractive_forward.1} parent=1 // pred_check_branch
      %46 = sbr.rel (0) target = $region13
    $region12: #{constractive_forward.1} parent=1 // pred_region
      %s48 = ssub.s32 24576, 24576
      %49 = vsyncadd [#allocation7], %s48
      %s50 = sshll.u32 [#allocation8], 4
      %s51 = int_to_ptr.vmem [resolvable:$true] %s50
      %56 = dma.hbm_to_vmem [thread:$0]  %s2, 24576, %s51, [#allocation7], 256, 256, 16
    $region13: #{constractive_forward.1} parent=1 // pred_fallthru
      _
    // Predicated region
    $region14: #{constractive_forward.1} parent=1 // pred_check
      _
    $region15: #{constractive_forward.1} parent=1 // pred_check_branch
      %58 = sbr.rel (0) target = $region17
    $region16: #{constractive_forward.1} parent=1 // pred_region
      _
    $region17: #{constractive_forward.1} parent=1 // pred_fallthru
      _
    // Predicated region
    $region18: #{constractive_forward.1} parent=1 // pred_check
      _
    $region19: #{constractive_forward.1} parent=1 // pred_check_branch
      %60 = sbr.rel (0) target = $region21
    $region20: #{constractive_forward.1} parent=1 // pred_region
      %s62 = ssub.s32 32000, 32000
      %63 = vsyncadd [#allocation10], %s62
      %s64 = sshll.u32 [#allocation9], 4
      %s65 = int_to_ptr.vmem [resolvable:$true] %s64
      %70 = dma.hbm_to_vmem [thread:$0]  %s4, 32000, %s65, [#allocation10], 256, 256, 16
    $region21: #{constractive_forward.1} parent=1 // pred_fallthru
      _
    // Predicated region
    $region22: #{constractive_forward.1} parent=1 // pred_check
      _
    $region23: #{constractive_forward.1} parent=1 // pred_check_branch
      %72 = sbr.rel (0) target = $region25
    $region24: #{constractive_forward.1} parent=1 // pred_region
      _
    $region25: #{constractive_forward.1} parent=1 // pred_fallthru
      _
    // Predicated region
    $region26: #{constractive_forward.1} parent=1 // pred_check
      _
    $region27: #{constractive_forward.1} parent=1 // pred_check_branch
      %74 = sbr.rel (0) target = $region29
    $region28: #{constractive_forward.1} parent=1 // pred_region
      %s76 = ssub.s32 4096, 4096
      %77 = vsyncadd [#allocation10], %s76
      %s78 = sshll.u32 [#allocation11], 4
      %s79 = int_to_ptr.vmem [resolvable:$true] %s78
      %84 = dma.hbm_to_vmem [thread:$0]  %s6, 4096, %s79, [#allocation10], 64, 64, 4
    $region29: #{constractive_forward.1} parent=1 // pred_fallthru
      _
    // Predicated region
    $region30: #{constractive_forward.1} parent=1 // pred_check
      _
    $region31: #{constractive_forward.1} parent=1 // pred_check_branch
      %86 = sbr.rel (0) target = $region33
    $region32: #{constractive_forward.1} parent=1 // pred_region
      %s88 = ssub.s32 4096, 4096
      %89 = vsyncadd [#allocation13], %s88
      %s90 = sshll.u32 [#allocation12], 4
      %s91 = int_to_ptr.vmem [resolvable:$true] %s90
      %96 = dma.hbm_to_vmem [thread:$0]  %s7, 4096, %s91, [#allocation13], 64, 64, 4
    $region33: #{constractive_forward.1} parent=1 // pred_fallthru
      _
    // Predicated region
    $region34: #{constractive_forward.1} parent=1 // pred_check
      _
    $region35: #{constractive_forward.1} parent=1 // pred_check_branch
      %98 = sbr.rel (0) target = $region37
    $region36: #{constractive_forward.1} parent=1 // pred_region
      _
    $region37: #{constractive_forward.1} parent=1 // pred_fallthru
      _
    // Predicated region
    $region38: #{constractive_forward.1} parent=1 // pred_check
      _
    $region39: #{constractive_forward.1} parent=1 // pred_check_branch
      %100 = sbr.rel (0) target = $region41
    $region40: #{constractive_forward.1} parent=1 // pred_region
      %101 = dma.done [#allocation3], 768
    $region41: #{constractive_forward.1} parent=1 // pred_fallthru
      _
    // Predicated region
    $region42: #{constractive_forward.1} parent=1 // pred_check
      _
    $region43: #{constractive_forward.1} parent=1 // pred_check_branch
      %103 = sbr.rel (0) target = $region45
    $region44: #{constractive_forward.1} parent=1 // pred_region
      %104 = dma.done [#allocation7], 1024
    $region45: #{constractive_forward.1} parent=1 // pred_fallthru
      _
    // Predicated region
    $region46: #{constractive_forward.1} parent=1 // pred_check
      _
    $region47: #{constractive_forward.1} parent=1 // pred_check_branch
      %106 = sbr.rel (0) target = $region49
    $region48: #{constractive_forward.1} parent=1 // pred_region
      %107 = dma.done [#allocation7], 24576
    $region49: #{constractive_forward.1} parent=1 // pred_fallthru
      _
    // Predicated region
    $region50: #{constractive_forward.1} parent=1 // pred_check
      _
    $region51: #{constractive_forward.1} parent=1 // pred_check_branch
      %109 = sbr.rel (0) target = $region53
    $region52: #{constractive_forward.1} parent=1 // pred_region
      %110 = dma.done [#allocation10], 32000
    $region53: #{constractive_forward.1} parent=1 // pred_fallthru
      _
    // Predicated region
    $region54: #{constractive_forward.1} parent=1 // pred_check
      _
    $region55: #{constractive_forward.1} parent=1 // pred_check_branch
      %112 = sbr.rel (0) target = $region57
    $region56: #{constractive_forward.1} parent=1 // pred_region
      %113 = dma.done [#allocation10], 4096
    $region57: #{constractive_forward.1} parent=1 // pred_fallthru
      _
    // Predicated region
    $region58: #{constractive_forward.1} parent=1 // pred_check
      _
    $region59: #{constractive_forward.1} parent=1 // pred_check_branch
      %115 = sbr.rel (0) target = $region61
    $region60: #{constractive_forward.1} parent=1 // pred_region
      %116 = dma.done [#allocation13], 4096
    $region61: #{constractive_forward.1} parent=1 // pred_fallthru
      _
    %v118 = vld [vmem:[#allocation2] sm:$0xff]
    %v119 = vld [vmem:[#allocation2 + $0x8] sm:$0xff]
    %v120 = vld [vmem:[#allocation2 + $0x10] sm:$0xff]
    %v121 = vld [vmem:[#allocation2 + $0x18] sm:$0xff]
    %v122 = vld [vmem:[#allocation2 + $0x20] sm:$0xff]
    %v123 = vld [vmem:[#allocation2 + $0x28] sm:$0xff]
    %v124 = vpack.c.bf16 %v118, %v118
    %v125 = vpack.c.bf16 %v119, %v119
    %v126 = vpack.c.bf16 %v120, %v120
    %v127 = vpack.c.bf16 %v121, %v121
    %v128 = vpack.c.bf16 %v122, %v122
    %v129 = vpack.c.bf16 %v123, %v123
    %v130 = vld [vmem:[#allocation6] sm:$0xff]
    %v131 = vld [vmem:[#allocation6 + $0x8] sm:$0xff]
    %v132 = vld [vmem:[#allocation6 + $0x10] sm:$0xff]
    %v133 = vld [vmem:[#allocation6 + $0x18] sm:$0xff]
    %v134 = vld [vmem:[#allocation6 + $0x20] sm:$0xff]
    %v135 = vld [vmem:[#allocation6 + $0x28] sm:$0xff]
    %v136 = vld [vmem:[#allocation6 + $0x30] sm:$0xff]
    %v137 = vld [vmem:[#allocation6 + $0x38] sm:$0xff]
    %v138 = vpack.c.bf16 %v130, %v130
    %v139 = vpack.c.bf16 %v131, %v131
    %v140 = vpack.c.bf16 %v132, %v132
    %v141 = vpack.c.bf16 %v133, %v133
    %v142 = vpack.c.bf16 %v134, %v134
    %v143 = vpack.c.bf16 %v135, %v135
    %v144 = vpack.c.bf16 %v136, %v136
    %v145 = vpack.c.bf16 %v137, %v137
    %v146 = vld [vmem:[#allocation8] sm:$0xff]
    %v147 = vld [vmem:[#allocation8 + $0x8] sm:$0xff]
    %v148 = vld [vmem:[#allocation8 + $0x10] sm:$0xff]
    %v149 = vld [vmem:[#allocation8 + $0x18] sm:$0xff]
    %v150 = vld [vmem:[#allocation8 + $0x20] sm:$0xff]
    %v151 = vld [vmem:[#allocation8 + $0x28] sm:$0xff]
    %v152 = vld [vmem:[#allocation8 + $0x30] sm:$0xff]
    %v153 = vld [vmem:[#allocation8 + $0x38] sm:$0xff]
    %v154 = vld [vmem:[#allocation8 + $0x40] sm:$0xff]
    %v155 = vld [vmem:[#allocation8 + $0x48] sm:$0xff]
    %v156 = vld [vmem:[#allocation8 + $0x50] sm:$0xff]
    %v157 = vld [vmem:[#allocation8 + $0x58] sm:$0xff]
    %v158 = vld [vmem:[#allocation8 + $0x60] sm:$0xff]
    %v159 = vld [vmem:[#allocation8 + $0x68] sm:$0xff]
    %v160 = vld [vmem:[#allocation8 + $0x70] sm:$0xff]
    %v161 = vld [vmem:[#allocation8 + $0x78] sm:$0xff]
    %v162 = vld [vmem:[#allocation8 + $0x80] sm:$0xff]
    %v163 = vld [vmem:[#allocation8 + $0x88] sm:$0xff]
    %v164 = vld [vmem:[#allocation8 + $0x90] sm:$0xff]
    %v165 = vld [vmem:[#allocation8 + $0x98] sm:$0xff]
    %v166 = vld [vmem:[#allocation8 + $0xa0] sm:$0xff]
    %v167 = vld [vmem:[#allocation8 + $0xa8] sm:$0xff]
    %v168 = vld [vmem:[#allocation8 + $0xb0] sm:$0xff]
    %v169 = vld [vmem:[#allocation8 + $0xb8] sm:$0xff]
    %v170 = vld [vmem:[#allocation8 + $0xc0] sm:$0xff]
    %v171 = vld [vmem:[#allocation8 + $0xc8] sm:$0xff]
    %v172 = vld [vmem:[#allocation8 + $0xd0] sm:$0xff]
    %v173 = vld [vmem:[#allocation8 + $0xd8] sm:$0xff]
    %v174 = vld [vmem:[#allocation8 + $0xe0] sm:$0xff]
    %v175 = vld [vmem:[#allocation8 + $0xe8] sm:$0xff]
    %v176 = vld [vmem:[#allocation8 + $0xf0] sm:$0xff]
    %v177 = vld [vmem:[#allocation8 + $0xf8] sm:$0xff]
    %v178 = vld [vmem:[#allocation8 + $0x100] sm:$0xff]
    %v179 = vld [vmem:[#allocation8 + $0x108] sm:$0xff]
    %v180 = vld [vmem:[#allocation8 + $0x110] sm:$0xff]
    %v181 = vld [vmem:[#allocation8 + $0x118] sm:$0xff]
    %v182 = vld [vmem:[#allocation8 + $0x120] sm:$0xff]
    %v183 = vld [vmem:[#allocation8 + $0x128] sm:$0xff]
    %v184 = vld [vmem:[#allocation8 + $0x130] sm:$0xff]
    %v185 = vld [vmem:[#allocation8 + $0x138] sm:$0xff]
    %v186 = vld [vmem:[#allocation8 + $0x140] sm:$0xff]
    %v187 = vld [vmem:[#allocation8 + $0x148] sm:$0xff]
    %v188 = vld [vmem:[#allocation8 + $0x150] sm:$0xff]
    %v189 = vld [vmem:[#allocation8 + $0x158] sm:$0xff]
    %v190 = vld [vmem:[#allocation8 + $0x160] sm:$0xff]
    %v191 = vld [vmem:[#allocation8 + $0x168] sm:$0xff]
    %v192 = vld [vmem:[#allocation8 + $0x170] sm:$0xff]
    %v193 = vld [vmem:[#allocation8 + $0x178] sm:$0xff]
    %v194 = vld [vmem:[#allocation8 + $0x180] sm:$0xff]
    %v195 = vld [vmem:[#allocation8 + $0x188] sm:$0xff]
    %v196 = vld [vmem:[#allocation8 + $0x190] sm:$0xff]
    %v197 = vld [vmem:[#allocation8 + $0x198] sm:$0xff]
    %v198 = vld [vmem:[#allocation8 + $0x1a0] sm:$0xff]
    %v199 = vld [vmem:[#allocation8 + $0x1a8] sm:$0xff]
    %v200 = vld [vmem:[#allocation8 + $0x1b0] sm:$0xff]
    %v201 = vld [vmem:[#allocation8 + $0x1b8] sm:$0xff]
    %v202 = vld [vmem:[#allocation8 + $0x1c0] sm:$0xff]
    %v203 = vld [vmem:[#allocation8 + $0x1c8] sm:$0xff]
    %v204 = vld [vmem:[#allocation8 + $0x1d0] sm:$0xff]
    %v205 = vld [vmem:[#allocation8 + $0x1d8] sm:$0xff]
    %v206 = vld [vmem:[#allocation8 + $0x1e0] sm:$0xff]
    %v207 = vld [vmem:[#allocation8 + $0x1e8] sm:$0xff]
    %v208 = vld [vmem:[#allocation8 + $0x1f0] sm:$0xff]
    %v209 = vld [vmem:[#allocation8 + $0x1f8] sm:$0xff]
    %v210 = vld [vmem:[#allocation8 + $0x200] sm:$0xff]
    %v211 = vld [vmem:[#allocation8 + $0x208] sm:$0xff]
    %v212 = vld [vmem:[#allocation8 + $0x210] sm:$0xff]
    %v213 = vld [vmem:[#allocation8 + $0x218] sm:$0xff]
    %v214 = vld [vmem:[#allocation8 + $0x220] sm:$0xff]
    %v215 = vld [vmem:[#allocation8 + $0x228] sm:$0xff]
    %v216 = vld [vmem:[#allocation8 + $0x230] sm:$0xff]
    %v217 = vld [vmem:[#allocation8 + $0x238] sm:$0xff]
    %v218 = vld [vmem:[#allocation8 + $0x240] sm:$0xff]
    %v219 = vld [vmem:[#allocation8 + $0x248] sm:$0xff]
    %v220 = vld [vmem:[#allocation8 + $0x250] sm:$0xff]
    %v221 = vld [vmem:[#allocation8 + $0x258] sm:$0xff]
    %v222 = vld [vmem:[#allocation8 + $0x260] sm:$0xff]
    %v223 = vld [vmem:[#allocation8 + $0x268] sm:$0xff]
    %v224 = vld [vmem:[#allocation8 + $0x270] sm:$0xff]
    %v225 = vld [vmem:[#allocation8 + $0x278] sm:$0xff]
    %v226 = vld [vmem:[#allocation8 + $0x280] sm:$0xff]
    %v227 = vld [vmem:[#allocation8 + $0x288] sm:$0xff]
    %v228 = vld [vmem:[#allocation8 + $0x290] sm:$0xff]
    %v229 = vld [vmem:[#allocation8 + $0x298] sm:$0xff]
    %v230 = vld [vmem:[#allocation8 + $0x2a0] sm:$0xff]
    %v231 = vld [vmem:[#allocation8 + $0x2a8] sm:$0xff]
    %v232 = vld [vmem:[#allocation8 + $0x2b0] sm:$0xff]
    %v233 = vld [vmem:[#allocation8 + $0x2b8] sm:$0xff]
    %v234 = vld [vmem:[#allocation8 + $0x2c0] sm:$0xff]
    %v235 = vld [vmem:[#allocation8 + $0x2c8] sm:$0xff]
    %v236 = vld [vmem:[#allocation8 + $0x2d0] sm:$0xff]
    %v237 = vld [vmem:[#allocation8 + $0x2d8] sm:$0xff]
    %v238 = vld [vmem:[#allocation8 + $0x2e0] sm:$0xff]
    %v239 = vld [vmem:[#allocation8 + $0x2e8] sm:$0xff]
    %v240 = vld [vmem:[#allocation8 + $0x2f0] sm:$0xff]
    %v241 = vld [vmem:[#allocation8 + $0x2f8] sm:$0xff]
    %v242 = vld [vmem:[#allocation8 + $0x300] sm:$0xff]
    %v243 = vld [vmem:[#allocation8 + $0x308] sm:$0xff]
    %v244 = vld [vmem:[#allocation8 + $0x310] sm:$0xff]
    %v245 = vld [vmem:[#allocation8 + $0x318] sm:$0xff]
    %v246 = vld [vmem:[#allocation8 + $0x320] sm:$0xff]
    %v247 = vld [vmem:[#allocation8 + $0x328] sm:$0xff]
    %v248 = vld [vmem:[#allocation8 + $0x330] sm:$0xff]
    %v249 = vld [vmem:[#allocation8 + $0x338] sm:$0xff]
    %v250 = vld [vmem:[#allocation8 + $0x340] sm:$0xff]
    %v251 = vld [vmem:[#allocation8 + $0x348] sm:$0xff]
    %v252 = vld [vmem:[#allocation8 + $0x350] sm:$0xff]
    %v253 = vld [vmem:[#allocation8 + $0x358] sm:$0xff]
    %v254 = vld [vmem:[#allocation8 + $0x360] sm:$0xff]
    %v255 = vld [vmem:[#allocation8 + $0x368] sm:$0xff]
    %v256 = vld [vmem:[#allocation8 + $0x370] sm:$0xff]
    %v257 = vld [vmem:[#allocation8 + $0x378] sm:$0xff]
    %v258 = vld [vmem:[#allocation8 + $0x380] sm:$0xff]
    %v259 = vld [vmem:[#allocation8 + $0x388] sm:$0xff]
    %v260 = vld [vmem:[#allocation8 + $0x390] sm:$0xff]
    %v261 = vld [vmem:[#allocation8 + $0x398] sm:$0xff]
    %v262 = vld [vmem:[#allocation8 + $0x3a0] sm:$0xff]
    %v263 = vld [vmem:[#allocation8 + $0x3a8] sm:$0xff]
    %v264 = vld [vmem:[#allocation8 + $0x3b0] sm:$0xff]
    %v265 = vld [vmem:[#allocation8 + $0x3b8] sm:$0xff]
    %v266 = vld [vmem:[#allocation8 + $0x3c0] sm:$0xff]
    %v267 = vld [vmem:[#allocation8 + $0x3c8] sm:$0xff]
    %v268 = vld [vmem:[#allocation8 + $0x3d0] sm:$0xff]
    %v269 = vld [vmem:[#allocation8 + $0x3d8] sm:$0xff]
    %v270 = vld [vmem:[#allocation8 + $0x3e0] sm:$0xff]
    %v271 = vld [vmem:[#allocation8 + $0x3e8] sm:$0xff]
    %v272 = vld [vmem:[#allocation8 + $0x3f0] sm:$0xff]
    %v273 = vld [vmem:[#allocation8 + $0x3f8] sm:$0xff]
    %v274 = vld [vmem:[#allocation8 + $0x400] sm:$0xff]
    %v275 = vld [vmem:[#allocation8 + $0x408] sm:$0xff]
    %v276 = vld [vmem:[#allocation8 + $0x410] sm:$0xff]
    %v277 = vld [vmem:[#allocation8 + $0x418] sm:$0xff]
    %v278 = vld [vmem:[#allocation8 + $0x420] sm:$0xff]
    %v279 = vld [vmem:[#allocation8 + $0x428] sm:$0xff]
    %v280 = vld [vmem:[#allocation8 + $0x430] sm:$0xff]
    %v281 = vld [vmem:[#allocation8 + $0x438] sm:$0xff]
    %v282 = vld [vmem:[#allocation8 + $0x440] sm:$0xff]
    %v283 = vld [vmem:[#allocation8 + $0x448] sm:$0xff]
    %v284 = vld [vmem:[#allocation8 + $0x450] sm:$0xff]
    %v285 = vld [vmem:[#allocation8 + $0x458] sm:$0xff]
    %v286 = vld [vmem:[#allocation8 + $0x460] sm:$0xff]
    %v287 = vld [vmem:[#allocation8 + $0x468] sm:$0xff]
    %v288 = vld [vmem:[#allocation8 + $0x470] sm:$0xff]
    %v289 = vld [vmem:[#allocation8 + $0x478] sm:$0xff]
    %v290 = vld [vmem:[#allocation8 + $0x480] sm:$0xff]
    %v291 = vld [vmem:[#allocation8 + $0x488] sm:$0xff]
    %v292 = vld [vmem:[#allocation8 + $0x490] sm:$0xff]
    %v293 = vld [vmem:[#allocation8 + $0x498] sm:$0xff]
    %v294 = vld [vmem:[#allocation8 + $0x4a0] sm:$0xff]
    %v295 = vld [vmem:[#allocation8 + $0x4a8] sm:$0xff]
    %v296 = vld [vmem:[#allocation8 + $0x4b0] sm:$0xff]
    %v297 = vld [vmem:[#allocation8 + $0x4b8] sm:$0xff]
    %v298 = vld [vmem:[#allocation8 + $0x4c0] sm:$0xff]
    %v299 = vld [vmem:[#allocation8 + $0x4c8] sm:$0xff]
    %v300 = vld [vmem:[#allocation8 + $0x4d0] sm:$0xff]
    %v301 = vld [vmem:[#allocation8 + $0x4d8] sm:$0xff]
    %v302 = vld [vmem:[#allocation8 + $0x4e0] sm:$0xff]
    %v303 = vld [vmem:[#allocation8 + $0x4e8] sm:$0xff]
    %v304 = vld [vmem:[#allocation8 + $0x4f0] sm:$0xff]
    %v305 = vld [vmem:[#allocation8 + $0x4f8] sm:$0xff]
    %v306 = vld [vmem:[#allocation8 + $0x500] sm:$0xff]
    %v307 = vld [vmem:[#allocation8 + $0x508] sm:$0xff]
    %v308 = vld [vmem:[#allocation8 + $0x510] sm:$0xff]
    %v309 = vld [vmem:[#allocation8 + $0x518] sm:$0xff]
    %v310 = vld [vmem:[#allocation8 + $0x520] sm:$0xff]
    %v311 = vld [vmem:[#allocation8 + $0x528] sm:$0xff]
    %v312 = vld [vmem:[#allocation8 + $0x530] sm:$0xff]
    %v313 = vld [vmem:[#allocation8 + $0x538] sm:$0xff]
    %v314 = vld [vmem:[#allocation8 + $0x540] sm:$0xff]
    %v315 = vld [vmem:[#allocation8 + $0x548] sm:$0xff]
    %v316 = vld [vmem:[#allocation8 + $0x550] sm:$0xff]
    %v317 = vld [vmem:[#allocation8 + $0x558] sm:$0xff]
    %v318 = vld [vmem:[#allocation8 + $0x560] sm:$0xff]
    %v319 = vld [vmem:[#allocation8 + $0x568] sm:$0xff]
    %v320 = vld [vmem:[#allocation8 + $0x570] sm:$0xff]
    %v321 = vld [vmem:[#allocation8 + $0x578] sm:$0xff]
    %v322 = vld [vmem:[#allocation8 + $0x580] sm:$0xff]
    %v323 = vld [vmem:[#allocation8 + $0x588] sm:$0xff]
    %v324 = vld [vmem:[#allocation8 + $0x590] sm:$0xff]
    %v325 = vld [vmem:[#allocation8 + $0x598] sm:$0xff]
    %v326 = vld [vmem:[#allocation8 + $0x5a0] sm:$0xff]
    %v327 = vld [vmem:[#allocation8 + $0x5a8] sm:$0xff]
    %v328 = vld [vmem:[#allocation8 + $0x5b0] sm:$0xff]
    %v329 = vld [vmem:[#allocation8 + $0x5b8] sm:$0xff]
    %v330 = vld [vmem:[#allocation8 + $0x5c0] sm:$0xff]
    %v331 = vld [vmem:[#allocation8 + $0x5c8] sm:$0xff]
    %v332 = vld [vmem:[#allocation8 + $0x5d0] sm:$0xff]
    %v333 = vld [vmem:[#allocation8 + $0x5d8] sm:$0xff]
    %v334 = vld [vmem:[#allocation8 + $0x5e0] sm:$0xff]
    %v335 = vld [vmem:[#allocation8 + $0x5e8] sm:$0xff]
    %v336 = vld [vmem:[#allocation8 + $0x5f0] sm:$0xff]
    %v337 = vld [vmem:[#allocation8 + $0x5f8] sm:$0xff]
    %v338 = vld [vmem:[%s3] sm:$0xf]
    %v340 = vlaneseq
    %v341 = vshrl.u32 %v340, 7
    %v342 = vsub.s32 0, %v341
    %v343 = vrot.slane %v338, %v342
    %v344 = vlaneseq
    %v345 = vshrl.u32 %v344, 7
    %v346 = vsub.s32 1, %v345
    %v347 = vrot.slane %v338, %v346
    %v348 = vlaneseq
    %v349 = vshrl.u32 %v348, 7
    %v350 = vsub.s32 2, %v349
    %v351 = vrot.slane %v338, %v350
    %v352 = vlaneseq
    %v353 = vshrl.u32 %v352, 7
    %v354 = vsub.s32 3, %v353
    %v355 = vrot.slane %v338, %v354
    %v552 = vunpack.c.l.b16 %v146
    %v553 = vunpack.c.h.b16 %v146
    %v554 = vunpack.c.l.b16 %v147
    %v555 = vunpack.c.h.b16 %v147
    %v556 = vunpack.c.l.b16 %v148
    %v557 = vunpack.c.h.b16 %v148
    %v558 = vunpack.c.l.b16 %v149
    %v559 = vunpack.c.h.b16 %v149
    %v560 = vunpack.c.l.b16 %v150
    %v561 = vunpack.c.h.b16 %v150
    %v562 = vunpack.c.l.b16 %v151
    %v563 = vunpack.c.h.b16 %v151
    %v564 = vunpack.c.l.b16 %v152
    %v565 = vunpack.c.h.b16 %v152
    %v566 = vunpack.c.l.b16 %v153
    %v567 = vunpack.c.h.b16 %v153
    %v568 = vunpack.c.l.b16 %v154
    %v569 = vunpack.c.h.b16 %v154
    %v570 = vunpack.c.l.b16 %v155
    %v571 = vunpack.c.h.b16 %v155
    %v572 = vunpack.c.l.b16 %v156
    %v573 = vunpack.c.h.b16 %v156
    %v574 = vunpack.c.l.b16 %v157
    %v575 = vunpack.c.h.b16 %v157
    %v576 = vunpack.c.l.b16 %v158
    %v577 = vunpack.c.h.b16 %v158
    %v578 = vunpack.c.l.b16 %v159
    %v579 = vunpack.c.h.b16 %v159
    %v580 = vunpack.c.l.b16 %v160
    %v581 = vunpack.c.h.b16 %v160
    %v582 = vunpack.c.l.b16 %v161
    %v583 = vunpack.c.h.b16 %v161
    %v584 = vunpack.c.l.b16 %v162
    %v585 = vunpack.c.h.b16 %v162
    %v586 = vunpack.c.l.b16 %v163
    %v587 = vunpack.c.h.b16 %v163
    %v588 = vunpack.c.l.b16 %v164
    %v589 = vunpack.c.h.b16 %v164
    %v590 = vunpack.c.l.b16 %v165
    %v591 = vunpack.c.h.b16 %v165
    %v592 = vunpack.c.l.b16 %v166
    %v593 = vunpack.c.h.b16 %v166
    %v594 = vunpack.c.l.b16 %v167
    %v595 = vunpack.c.h.b16 %v167
    %v596 = vunpack.c.l.b16 %v168
    %v597 = vunpack.c.h.b16 %v168
    %v598 = vunpack.c.l.b16 %v169
    %v599 = vunpack.c.h.b16 %v169
    %v600 = vunpack.c.l.b16 %v170
    %v601 = vunpack.c.h.b16 %v170
    %v602 = vunpack.c.l.b16 %v171
    %v603 = vunpack.c.h.b16 %v171
    %v604 = vunpack.c.l.b16 %v172
    %v605 = vunpack.c.h.b16 %v172
    %v606 = vunpack.c.l.b16 %v173
    %v607 = vunpack.c.h.b16 %v173
    %v608 = vunpack.c.l.b16 %v174
    %v609 = vunpack.c.h.b16 %v174
    %v610 = vunpack.c.l.b16 %v175
    %v611 = vunpack.c.h.b16 %v175
    %v612 = vunpack.c.l.b16 %v176
    %v613 = vunpack.c.h.b16 %v176
    %v614 = vunpack.c.l.b16 %v177
    %v615 = vunpack.c.h.b16 %v177
    %v616 = vunpack.c.l.b16 %v178
    %v617 = vunpack.c.h.b16 %v178
    %v618 = vunpack.c.l.b16 %v179
    %v619 = vunpack.c.h.b16 %v179
    %v620 = vunpack.c.l.b16 %v180
    %v621 = vunpack.c.h.b16 %v180
    %v622 = vunpack.c.l.b16 %v181
    %v623 = vunpack.c.h.b16 %v181
    %v624 = vunpack.c.l.b16 %v182
    %v625 = vunpack.c.h.b16 %v182
    %v626 = vunpack.c.l.b16 %v183
    %v627 = vunpack.c.h.b16 %v183
    %v628 = vunpack.c.l.b16 %v184
    %v629 = vunpack.c.h.b16 %v184
    %v630 = vunpack.c.l.b16 %v185
    %v631 = vunpack.c.h.b16 %v185
    %v632 = vunpack.c.l.b16 %v186
    %v633 = vunpack.c.h.b16 %v186
    %v634 = vunpack.c.l.b16 %v187
    %v635 = vunpack.c.h.b16 %v187
    %v636 = vunpack.c.l.b16 %v188
    %v637 = vunpack.c.h.b16 %v188
    %v638 = vunpack.c.l.b16 %v189
    %v639 = vunpack.c.h.b16 %v189
    %v640 = vunpack.c.l.b16 %v190
    %v641 = vunpack.c.h.b16 %v190
    %v642 = vunpack.c.l.b16 %v191
    %v643 = vunpack.c.h.b16 %v191
    %v644 = vunpack.c.l.b16 %v192
    %v645 = vunpack.c.h.b16 %v192
    %v646 = vunpack.c.l.b16 %v193
    %v647 = vunpack.c.h.b16 %v193
    %v648 = vunpack.c.l.b16 %v194
    %v649 = vunpack.c.h.b16 %v194
    %v650 = vunpack.c.l.b16 %v195
    %v651 = vunpack.c.h.b16 %v195
    %v652 = vunpack.c.l.b16 %v196
    %v653 = vunpack.c.h.b16 %v196
    %v654 = vunpack.c.l.b16 %v197
    %v655 = vunpack.c.h.b16 %v197
    %v656 = vunpack.c.l.b16 %v198
    %v657 = vunpack.c.h.b16 %v198
    %v658 = vunpack.c.l.b16 %v199
    %v659 = vunpack.c.h.b16 %v199
    %v660 = vunpack.c.l.b16 %v200
    %v661 = vunpack.c.h.b16 %v200
    %v662 = vunpack.c.l.b16 %v201
    %v663 = vunpack.c.h.b16 %v201
    %v664 = vunpack.c.l.b16 %v202
    %v665 = vunpack.c.h.b16 %v202
    %v666 = vunpack.c.l.b16 %v203
    %v667 = vunpack.c.h.b16 %v203
    %v668 = vunpack.c.l.b16 %v204
    %v669 = vunpack.c.h.b16 %v204
    %v670 = vunpack.c.l.b16 %v205
    %v671 = vunpack.c.h.b16 %v205
    %v672 = vunpack.c.l.b16 %v206
    %v673 = vunpack.c.h.b16 %v206
    %v674 = vunpack.c.l.b16 %v207
    %v675 = vunpack.c.h.b16 %v207
    %v676 = vunpack.c.l.b16 %v208
    %v677 = vunpack.c.h.b16 %v208
    %v678 = vunpack.c.l.b16 %v209
    %v679 = vunpack.c.h.b16 %v209
    %v680 = vunpack.c.l.b16 %v210
    %v681 = vunpack.c.h.b16 %v210
    %v682 = vunpack.c.l.b16 %v211
    %v683 = vunpack.c.h.b16 %v211
    %v684 = vunpack.c.l.b16 %v212
    %v685 = vunpack.c.h.b16 %v212
    %v686 = vunpack.c.l.b16 %v213
    %v687 = vunpack.c.h.b16 %v213
    %v688 = vunpack.c.l.b16 %v214
    %v689 = vunpack.c.h.b16 %v214
    %v690 = vunpack.c.l.b16 %v215
    %v691 = vunpack.c.h.b16 %v215
    %v692 = vunpack.c.l.b16 %v216
    %v693 = vunpack.c.h.b16 %v216
    %v694 = vunpack.c.l.b16 %v217
    %v695 = vunpack.c.h.b16 %v217
    %v696 = vunpack.c.l.b16 %v218
    %v697 = vunpack.c.h.b16 %v218
    %v698 = vunpack.c.l.b16 %v219
    %v699 = vunpack.c.h.b16 %v219
    %v700 = vunpack.c.l.b16 %v220
    %v701 = vunpack.c.h.b16 %v220
    %v702 = vunpack.c.l.b16 %v221
    %v703 = vunpack.c.h.b16 %v221
    %v704 = vunpack.c.l.b16 %v222
    %v705 = vunpack.c.h.b16 %v222
    %v706 = vunpack.c.l.b16 %v223
    %v707 = vunpack.c.h.b16 %v223
    %v708 = vunpack.c.l.b16 %v224
    %v709 = vunpack.c.h.b16 %v224
    %v710 = vunpack.c.l.b16 %v225
    %v711 = vunpack.c.h.b16 %v225
    %v712 = vunpack.c.l.b16 %v226
    %v713 = vunpack.c.h.b16 %v226
    %v714 = vunpack.c.l.b16 %v227
    %v715 = vunpack.c.h.b16 %v227
    %v716 = vunpack.c.l.b16 %v228
    %v717 = vunpack.c.h.b16 %v228
    %v718 = vunpack.c.l.b16 %v229
    %v719 = vunpack.c.h.b16 %v229
    %v720 = vunpack.c.l.b16 %v230
    %v721 = vunpack.c.h.b16 %v230
    %v722 = vunpack.c.l.b16 %v231
    %v723 = vunpack.c.h.b16 %v231
    %v724 = vunpack.c.l.b16 %v232
    %v725 = vunpack.c.h.b16 %v232
    %v726 = vunpack.c.l.b16 %v233
    %v727 = vunpack.c.h.b16 %v233
    %v728 = vunpack.c.l.b16 %v234
    %v729 = vunpack.c.h.b16 %v234
    %v730 = vunpack.c.l.b16 %v235
    %v731 = vunpack.c.h.b16 %v235
    %v732 = vunpack.c.l.b16 %v236
    %v733 = vunpack.c.h.b16 %v236
    %v734 = vunpack.c.l.b16 %v237
    %v735 = vunpack.c.h.b16 %v237
    %v736 = vunpack.c.l.b16 %v238
    %v737 = vunpack.c.h.b16 %v238
    %v738 = vunpack.c.l.b16 %v239
    %v739 = vunpack.c.h.b16 %v239
    %v740 = vunpack.c.l.b16 %v240
    %v741 = vunpack.c.h.b16 %v240
    %v742 = vunpack.c.l.b16 %v241
    %v743 = vunpack.c.h.b16 %v241
    %v744 = vunpack.c.l.b16 %v242
    %v745 = vunpack.c.h.b16 %v242
    %v746 = vunpack.c.l.b16 %v243
    %v747 = vunpack.c.h.b16 %v243
    %v748 = vunpack.c.l.b16 %v244
    %v749 = vunpack.c.h.b16 %v244
    %v750 = vunpack.c.l.b16 %v245
    %v751 = vunpack.c.h.b16 %v245
    %v752 = vunpack.c.l.b16 %v246
    %v753 = vunpack.c.h.b16 %v246
    %v754 = vunpack.c.l.b16 %v247
    %v755 = vunpack.c.h.b16 %v247
    %v756 = vunpack.c.l.b16 %v248
    %v757 = vunpack.c.h.b16 %v248
    %v758 = vunpack.c.l.b16 %v249
    %v759 = vunpack.c.h.b16 %v249
    %v760 = vunpack.c.l.b16 %v250
    %v761 = vunpack.c.h.b16 %v250
    %v762 = vunpack.c.l.b16 %v251
    %v763 = vunpack.c.h.b16 %v251
    %v764 = vunpack.c.l.b16 %v252
    %v765 = vunpack.c.h.b16 %v252
    %v766 = vunpack.c.l.b16 %v253
    %v767 = vunpack.c.h.b16 %v253
    %v768 = vunpack.c.l.b16 %v254
    %v769 = vunpack.c.h.b16 %v254
    %v770 = vunpack.c.l.b16 %v255
    %v771 = vunpack.c.h.b16 %v255
    %v772 = vunpack.c.l.b16 %v256
    %v773 = vunpack.c.h.b16 %v256
    %v774 = vunpack.c.l.b16 %v257
    %v775 = vunpack.c.h.b16 %v257
    %v776 = vunpack.c.l.b16 %v258
    %v777 = vunpack.c.h.b16 %v258
    %v778 = vunpack.c.l.b16 %v259
    %v779 = vunpack.c.h.b16 %v259
    %v780 = vunpack.c.l.b16 %v260
    %v781 = vunpack.c.h.b16 %v260
    %v782 = vunpack.c.l.b16 %v261
    %v783 = vunpack.c.h.b16 %v261
    %v784 = vunpack.c.l.b16 %v262
    %v785 = vunpack.c.h.b16 %v262
    %v786 = vunpack.c.l.b16 %v263
    %v787 = vunpack.c.h.b16 %v263
    %v788 = vunpack.c.l.b16 %v264
    %v789 = vunpack.c.h.b16 %v264
    %v790 = vunpack.c.l.b16 %v265
    %v791 = vunpack.c.h.b16 %v265
    %v792 = vunpack.c.l.b16 %v266
    %v793 = vunpack.c.h.b16 %v266
    %v794 = vunpack.c.l.b16 %v267
    %v795 = vunpack.c.h.b16 %v267
    %v796 = vunpack.c.l.b16 %v268
    %v797 = vunpack.c.h.b16 %v268
    %v798 = vunpack.c.l.b16 %v269
    %v799 = vunpack.c.h.b16 %v269
    %v800 = vunpack.c.l.b16 %v270
    %v801 = vunpack.c.h.b16 %v270
    %v802 = vunpack.c.l.b16 %v271
    %v803 = vunpack.c.h.b16 %v271
    %v804 = vunpack.c.l.b16 %v272
    %v805 = vunpack.c.h.b16 %v272
    %v806 = vunpack.c.l.b16 %v273
    %v807 = vunpack.c.h.b16 %v273
    %v808 = vunpack.c.l.b16 %v274
    %v809 = vunpack.c.h.b16 %v274
    %v810 = vunpack.c.l.b16 %v275
    %v811 = vunpack.c.h.b16 %v275
    %v812 = vunpack.c.l.b16 %v276
    %v813 = vunpack.c.h.b16 %v276
    %v814 = vunpack.c.l.b16 %v277
    %v815 = vunpack.c.h.b16 %v277
    %v816 = vunpack.c.l.b16 %v278
    %v817 = vunpack.c.h.b16 %v278
    %v818 = vunpack.c.l.b16 %v279
    %v819 = vunpack.c.h.b16 %v279
    %v820 = vunpack.c.l.b16 %v280
    %v821 = vunpack.c.h.b16 %v280
    %v822 = vunpack.c.l.b16 %v281
    %v823 = vunpack.c.h.b16 %v281
    %v824 = vunpack.c.l.b16 %v282
    %v825 = vunpack.c.h.b16 %v282
    %v826 = vunpack.c.l.b16 %v283
    %v827 = vunpack.c.h.b16 %v283
    %v828 = vunpack.c.l.b16 %v284
    %v829 = vunpack.c.h.b16 %v284
    %v830 = vunpack.c.l.b16 %v285
    %v831 = vunpack.c.h.b16 %v285
    %v832 = vunpack.c.l.b16 %v286
    %v833 = vunpack.c.h.b16 %v286
    %v834 = vunpack.c.l.b16 %v287
    %v835 = vunpack.c.h.b16 %v287
    %v836 = vunpack.c.l.b16 %v288
    %v837 = vunpack.c.h.b16 %v288
    %v838 = vunpack.c.l.b16 %v289
    %v839 = vunpack.c.h.b16 %v289
    %v840 = vunpack.c.l.b16 %v290
    %v841 = vunpack.c.h.b16 %v290
    %v842 = vunpack.c.l.b16 %v291
    %v843 = vunpack.c.h.b16 %v291
    %v844 = vunpack.c.l.b16 %v292
    %v845 = vunpack.c.h.b16 %v292
    %v846 = vunpack.c.l.b16 %v293
    %v847 = vunpack.c.h.b16 %v293
    %v848 = vunpack.c.l.b16 %v294
    %v849 = vunpack.c.h.b16 %v294
    %v850 = vunpack.c.l.b16 %v295
    %v851 = vunpack.c.h.b16 %v295
    %v852 = vunpack.c.l.b16 %v296
    %v853 = vunpack.c.h.b16 %v296
    %v854 = vunpack.c.l.b16 %v297
    %v855 = vunpack.c.h.b16 %v297
    %v856 = vunpack.c.l.b16 %v298
    %v857 = vunpack.c.h.b16 %v298
    %v858 = vunpack.c.l.b16 %v299
    %v859 = vunpack.c.h.b16 %v299
    %v860 = vunpack.c.l.b16 %v300
    %v861 = vunpack.c.h.b16 %v300
    %v862 = vunpack.c.l.b16 %v301
    %v863 = vunpack.c.h.b16 %v301
    %v864 = vunpack.c.l.b16 %v302
    %v865 = vunpack.c.h.b16 %v302
    %v866 = vunpack.c.l.b16 %v303
    %v867 = vunpack.c.h.b16 %v303
    %v868 = vunpack.c.l.b16 %v304
    %v869 = vunpack.c.h.b16 %v304
    %v870 = vunpack.c.l.b16 %v305
    %v871 = vunpack.c.h.b16 %v305
    %v872 = vunpack.c.l.b16 %v306
    %v873 = vunpack.c.h.b16 %v306
    %v874 = vunpack.c.l.b16 %v307
    %v875 = vunpack.c.h.b16 %v307
    %v876 = vunpack.c.l.b16 %v308
    %v877 = vunpack.c.h.b16 %v308
    %v878 = vunpack.c.l.b16 %v309
    %v879 = vunpack.c.h.b16 %v309
    %v880 = vunpack.c.l.b16 %v310
    %v881 = vunpack.c.h.b16 %v310
    %v882 = vunpack.c.l.b16 %v311
    %v883 = vunpack.c.h.b16 %v311
    %v884 = vunpack.c.l.b16 %v312
    %v885 = vunpack.c.h.b16 %v312
    %v886 = vunpack.c.l.b16 %v313
    %v887 = vunpack.c.h.b16 %v313
    %v888 = vunpack.c.l.b16 %v314
    %v889 = vunpack.c.h.b16 %v314
    %v890 = vunpack.c.l.b16 %v315
    %v891 = vunpack.c.h.b16 %v315
    %v892 = vunpack.c.l.b16 %v316
    %v893 = vunpack.c.h.b16 %v316
    %v894 = vunpack.c.l.b16 %v317
    %v895 = vunpack.c.h.b16 %v317
    %v896 = vunpack.c.l.b16 %v318
    %v897 = vunpack.c.h.b16 %v318
    %v898 = vunpack.c.l.b16 %v319
    %v899 = vunpack.c.h.b16 %v319
    %v900 = vunpack.c.l.b16 %v320
    %v901 = vunpack.c.h.b16 %v320
    %v902 = vunpack.c.l.b16 %v321
    %v903 = vunpack.c.h.b16 %v321
    %v904 = vunpack.c.l.b16 %v322
    %v905 = vunpack.c.h.b16 %v322
    %v906 = vunpack.c.l.b16 %v323
    %v907 = vunpack.c.h.b16 %v323
    %v908 = vunpack.c.l.b16 %v324
    %v909 = vunpack.c.h.b16 %v324
    %v910 = vunpack.c.l.b16 %v325
    %v911 = vunpack.c.h.b16 %v325
    %v912 = vunpack.c.l.b16 %v326
    %v913 = vunpack.c.h.b16 %v326
    %v914 = vunpack.c.l.b16 %v327
    %v915 = vunpack.c.h.b16 %v327
    %v916 = vunpack.c.l.b16 %v328
    %v917 = vunpack.c.h.b16 %v328
    %v918 = vunpack.c.l.b16 %v329
    %v919 = vunpack.c.h.b16 %v329
    %v920 = vunpack.c.l.b16 %v330
    %v921 = vunpack.c.h.b16 %v330
    %v922 = vunpack.c.l.b16 %v331
    %v923 = vunpack.c.h.b16 %v331
    %v924 = vunpack.c.l.b16 %v332
    %v925 = vunpack.c.h.b16 %v332
    %v926 = vunpack.c.l.b16 %v333
    %v927 = vunpack.c.h.b16 %v333
    %v928 = vunpack.c.l.b16 %v334
    %v929 = vunpack.c.h.b16 %v334
    %v930 = vunpack.c.l.b16 %v335
    %v931 = vunpack.c.h.b16 %v335
    %v932 = vunpack.c.l.b16 %v336
    %v933 = vunpack.c.h.b16 %v336
    %v934 = vunpack.c.l.b16 %v337
    %v935 = vunpack.c.h.b16 %v337
    %v936 = vpack.c.b16 %v556, %v552
    %v937 = vpack.c.b16 %v557, %v553
    %v938 = vpack.c.b16 %v558, %v554
    %v939 = vpack.c.b16 %v559, %v555
    %v940 = vpack.c.b16 %v564, %v560
    %v941 = vpack.c.b16 %v565, %v561
    %v942 = vpack.c.b16 %v566, %v562
    %v943 = vpack.c.b16 %v567, %v563
    %v944 = vpack.c.b16 %v572, %v568
    %v945 = vpack.c.b16 %v573, %v569
    %v946 = vpack.c.b16 %v574, %v570
    %v947 = vpack.c.b16 %v575, %v571
    %v948 = vpack.c.b16 %v580, %v576
    %v949 = vpack.c.b16 %v581, %v577
    %v950 = vpack.c.b16 %v582, %v578
    %v951 = vpack.c.b16 %v583, %v579
    %v952 = vpack.c.b16 %v588, %v584
    %v953 = vpack.c.b16 %v589, %v585
    %v954 = vpack.c.b16 %v590, %v586
    %v955 = vpack.c.b16 %v591, %v587
    %v956 = vpack.c.b16 %v596, %v592
    %v957 = vpack.c.b16 %v597, %v593
    %v958 = vpack.c.b16 %v598, %v594
    %v959 = vpack.c.b16 %v599, %v595
    %v960 = vpack.c.b16 %v604, %v600
    %v961 = vpack.c.b16 %v605, %v601
    %v962 = vpack.c.b16 %v606, %v602
    %v963 = vpack.c.b16 %v607, %v603
    %v964 = vpack.c.b16 %v612, %v608
    %v965 = vpack.c.b16 %v613, %v609
    %v966 = vpack.c.b16 %v614, %v610
    %v967 = vpack.c.b16 %v615, %v611
    %v968 = vpack.c.b16 %v620, %v616
    %v969 = vpack.c.b16 %v621, %v617
    %v970 = vpack.c.b16 %v622, %v618
    %v971 = vpack.c.b16 %v623, %v619
    %v972 = vpack.c.b16 %v628, %v624
    %v973 = vpack.c.b16 %v629, %v625
    %v974 = vpack.c.b16 %v630, %v626
    %v975 = vpack.c.b16 %v631, %v627
    %v976 = vpack.c.b16 %v636, %v632
    %v977 = vpack.c.b16 %v637, %v633
    %v978 = vpack.c.b16 %v638, %v634
    %v979 = vpack.c.b16 %v639, %v635
    %v980 = vpack.c.b16 %v644, %v640
    %v981 = vpack.c.b16 %v645, %v641
    %v982 = vpack.c.b16 %v646, %v642
    %v983 = vpack.c.b16 %v647, %v643
    %v984 = vpack.c.b16 %v652, %v648
    %v985 = vpack.c.b16 %v653, %v649
    %v986 = vpack.c.b16 %v654, %v650
    %v987 = vpack.c.b16 %v655, %v651
    %v988 = vpack.c.b16 %v660, %v656
    %v989 = vpack.c.b16 %v661, %v657
    %v990 = vpack.c.b16 %v662, %v658
    %v991 = vpack.c.b16 %v663, %v659
    %v992 = vpack.c.b16 %v668, %v664
    %v993 = vpack.c.b16 %v669, %v665
    %v994 = vpack.c.b16 %v670, %v666
    %v995 = vpack.c.b16 %v671, %v667
    %v996 = vpack.c.b16 %v676, %v672
    %v997 = vpack.c.b16 %v677, %v673
    %v998 = vpack.c.b16 %v678, %v674
    %v999 = vpack.c.b16 %v679, %v675
    %v1000 = vpack.c.b16 %v684, %v680
    %v1001 = vpack.c.b16 %v685, %v681
    %v1002 = vpack.c.b16 %v686, %v682
    %v1003 = vpack.c.b16 %v687, %v683
    %v1004 = vpack.c.b16 %v692, %v688
    %v1005 = vpack.c.b16 %v693, %v689
    %v1006 = vpack.c.b16 %v694, %v690
    %v1007 = vpack.c.b16 %v695, %v691
    %v1008 = vpack.c.b16 %v700, %v696
    %v1009 = vpack.c.b16 %v701, %v697
    %v1010 = vpack.c.b16 %v702, %v698
    %v1011 = vpack.c.b16 %v703, %v699
    %v1012 = vpack.c.b16 %v708, %v704
    %v1013 = vpack.c.b16 %v709, %v705
    %v1014 = vpack.c.b16 %v710, %v706
    %v1015 = vpack.c.b16 %v711, %v707
    %v1016 = vpack.c.b16 %v716, %v712
    %v1017 = vpack.c.b16 %v717, %v713
    %v1018 = vpack.c.b16 %v718, %v714
    %v1019 = vpack.c.b16 %v719, %v715
    %v1020 = vpack.c.b16 %v724, %v720
    %v1021 = vpack.c.b16 %v725, %v721
    %v1022 = vpack.c.b16 %v726, %v722
    %v1023 = vpack.c.b16 %v727, %v723
    %v1024 = vpack.c.b16 %v732, %v728
    %v1025 = vpack.c.b16 %v733, %v729
    %v1026 = vpack.c.b16 %v734, %v730
    %v1027 = vpack.c.b16 %v735, %v731
    %v1028 = vpack.c.b16 %v740, %v736
    %v1029 = vpack.c.b16 %v741, %v737
    %v1030 = vpack.c.b16 %v742, %v738
    %v1031 = vpack.c.b16 %v743, %v739
    %v1032 = vpack.c.b16 %v748, %v744
    %v1033 = vpack.c.b16 %v749, %v745
    %v1034 = vpack.c.b16 %v750, %v746
    %v1035 = vpack.c.b16 %v751, %v747
    %v1036 = vpack.c.b16 %v756, %v752
    %v1037 = vpack.c.b16 %v757, %v753
    %v1038 = vpack.c.b16 %v758, %v754
    %v1039 = vpack.c.b16 %v759, %v755
    %v1040 = vpack.c.b16 %v764, %v760
    %v1041 = vpack.c.b16 %v765, %v761
    %v1042 = vpack.c.b16 %v766, %v762
    %v1043 = vpack.c.b16 %v767, %v763
    %v1044 = vpack.c.b16 %v772, %v768
    %v1045 = vpack.c.b16 %v773, %v769
    %v1046 = vpack.c.b16 %v774, %v770
    %v1047 = vpack.c.b16 %v775, %v771
    %v1048 = vpack.c.b16 %v780, %v776
    %v1049 = vpack.c.b16 %v781, %v777
    %v1050 = vpack.c.b16 %v782, %v778
    %v1051 = vpack.c.b16 %v783, %v779
    %v1052 = vpack.c.b16 %v788, %v784
    %v1053 = vpack.c.b16 %v789, %v785
    %v1054 = vpack.c.b16 %v790, %v786
    %v1055 = vpack.c.b16 %v791, %v787
    %v1056 = vpack.c.b16 %v796, %v792
    %v1057 = vpack.c.b16 %v797, %v793
    %v1058 = vpack.c.b16 %v798, %v794
    %v1059 = vpack.c.b16 %v799, %v795
    %v1060 = vpack.c.b16 %v804, %v800
    %v1061 = vpack.c.b16 %v805, %v801
    %v1062 = vpack.c.b16 %v806, %v802
    %v1063 = vpack.c.b16 %v807, %v803
    %v1064 = vpack.c.b16 %v812, %v808
    %v1065 = vpack.c.b16 %v813, %v809
    %v1066 = vpack.c.b16 %v814, %v810
    %v1067 = vpack.c.b16 %v815, %v811
    %v1068 = vpack.c.b16 %v820, %v816
    %v1069 = vpack.c.b16 %v821, %v817
    %v1070 = vpack.c.b16 %v822, %v818
    %v1071 = vpack.c.b16 %v823, %v819
    %v1072 = vpack.c.b16 %v828, %v824
    %v1073 = vpack.c.b16 %v829, %v825
    %v1074 = vpack.c.b16 %v830, %v826
    %v1075 = vpack.c.b16 %v831, %v827
    %v1076 = vpack.c.b16 %v836, %v832
    %v1077 = vpack.c.b16 %v837, %v833
    %v1078 = vpack.c.b16 %v838, %v834
    %v1079 = vpack.c.b16 %v839, %v835
    %v1080 = vpack.c.b16 %v844, %v840
    %v1081 = vpack.c.b16 %v845, %v841
    %v1082 = vpack.c.b16 %v846, %v842
    %v1083 = vpack.c.b16 %v847, %v843
    %v1084 = vpack.c.b16 %v852, %v848
    %v1085 = vpack.c.b16 %v853, %v849
    %v1086 = vpack.c.b16 %v854, %v850
    %v1087 = vpack.c.b16 %v855, %v851
    %v1088 = vpack.c.b16 %v860, %v856
    %v1089 = vpack.c.b16 %v861, %v857
    %v1090 = vpack.c.b16 %v862, %v858
    %v1091 = vpack.c.b16 %v863, %v859
    %v1092 = vpack.c.b16 %v868, %v864
    %v1093 = vpack.c.b16 %v869, %v865
    %v1094 = vpack.c.b16 %v870, %v866
    %v1095 = vpack.c.b16 %v871, %v867
    %v1096 = vpack.c.b16 %v876, %v872
    %v1097 = vpack.c.b16 %v877, %v873
    %v1098 = vpack.c.b16 %v878, %v874
    %v1099 = vpack.c.b16 %v879, %v875
    %v1100 = vpack.c.b16 %v884, %v880
    %v1101 = vpack.c.b16 %v885, %v881
    %v1102 = vpack.c.b16 %v886, %v882
    %v1103 = vpack.c.b16 %v887, %v883
    %v1104 = vpack.c.b16 %v892, %v888
    %v1105 = vpack.c.b16 %v893, %v889
    %v1106 = vpack.c.b16 %v894, %v890
    %v1107 = vpack.c.b16 %v895, %v891
    %v1108 = vpack.c.b16 %v900, %v896
    %v1109 = vpack.c.b16 %v901, %v897
    %v1110 = vpack.c.b16 %v902, %v898
    %v1111 = vpack.c.b16 %v903, %v899
    %v1112 = vpack.c.b16 %v908, %v904
    %v1113 = vpack.c.b16 %v909, %v905
    %v1114 = vpack.c.b16 %v910, %v906
    %v1115 = vpack.c.b16 %v911, %v907
    %v1116 = vpack.c.b16 %v916, %v912
    %v1117 = vpack.c.b16 %v917, %v913
    %v1118 = vpack.c.b16 %v918, %v914
    %v1119 = vpack.c.b16 %v919, %v915
    %v1120 = vpack.c.b16 %v924, %v920
    %v1121 = vpack.c.b16 %v925, %v921
    %v1122 = vpack.c.b16 %v926, %v922
    %v1123 = vpack.c.b16 %v927, %v923
    %v1124 = vpack.c.b16 %v932, %v928
    %v1125 = vpack.c.b16 %v933, %v929
    %v1126 = vpack.c.b16 %v934, %v930
    %v1127 = vpack.c.b16 %v935, %v931
    %1320 = vmatprep.subr.bf16.mxu0 %v937
    %1321 = vmatpush1.bf16.msra.mxu0 %v936
    %1322 = vmatprep.subr.bf16.mxu0 %v941
    %1323 = vmatpush1.bf16.msra.mxu0 %v940
    %1324 = vmatprep.subr.bf16.mxu0 %v945
    %1325 = vmatpush1.bf16.msra.mxu0 %v944
    %1326 = vmatprep.subr.bf16.mxu0 %v949
    %1327 = vmatpush1.bf16.msra.mxu0 %v948
    %1328 = vmatprep.subr.bf16.mxu0 %v953
    %1329 = vmatpush1.bf16.msra.mxu0 %v952
    %1330 = vmatprep.subr.bf16.mxu0 %v957
    %1331 = vmatpush1.bf16.msra.mxu0 %v956
    %1332 = vmatprep.subr.bf16.mxu0 %v961
    %1333 = vmatpush1.bf16.msra.mxu0 %v960
    %1334 = vmatprep.subr.bf16.mxu0 %v965
    %1335 = vmatpush1.bf16.msra.mxu0 %v964
    %1336 = vmatprep.subr.bf16.mxu0 %v969
    %1337 = vmatpush1.bf16.msra.mxu0 %v968
    %1338 = vmatprep.subr.bf16.mxu0 %v973
    %1339 = vmatpush1.bf16.msra.mxu0 %v972
    %1340 = vmatprep.subr.bf16.mxu0 %v977
    %1341 = vmatpush1.bf16.msra.mxu0 %v976
    %1342 = vmatprep.subr.bf16.mxu0 %v981
    %1343 = vmatpush1.bf16.msra.mxu0 %v980
    %1344 = vmatprep.subr.bf16.mxu0 %v985
    %1345 = vmatpush1.bf16.msra.mxu0 %v984
    %1346 = vmatprep.subr.bf16.mxu0 %v989
    %1347 = vmatpush1.bf16.msra.mxu0 %v988
    %1348 = vmatprep.subr.bf16.mxu0 %v993
    %1349 = vmatpush1.bf16.msra.mxu0 %v992
    %1350 = vmatprep.subr.bf16.mxu0 %v997
    %1351 = vmatpush1.bf16.msra.mxu0 %v996
    %1352 = vmatprep.mubr.bf16.mxu0 %v125
    %1353 = vmatmul.mubr.bf16.gmra.mrb[0].mxu0 %v124
    %v1354 = vpop.f32.mrb[0].mxu0
    %v1355 = vadd.f32 %v343, %v1354
    %v1356 = vpop.f32.mrb[0].mxu0
    %v1357 = vadd.f32 %v347, %v1356
    %v1358 = vpop.f32.mrb[0].mxu0
    %v1359 = vpop.f32.mrb[0].mxu0
    %1360 = vdwg.mxu0
    %1361 = vmatprep.subr.bf16.mxu0 %v1001
    %1362 = vmatpush1.bf16.msra.mxu0 %v1000
    %1363 = vmatprep.subr.bf16.mxu0 %v1005
    %1364 = vmatpush1.bf16.msra.mxu0 %v1004
    %1365 = vmatprep.subr.bf16.mxu0 %v1009
    %1366 = vmatpush1.bf16.msra.mxu0 %v1008
    %1367 = vmatprep.subr.bf16.mxu0 %v1013
    %1368 = vmatpush1.bf16.msra.mxu0 %v1012
    %1369 = vmatprep.subr.bf16.mxu0 %v1017
    %1370 = vmatpush1.bf16.msra.mxu0 %v1016
    %1371 = vmatprep.subr.bf16.mxu0 %v1021
    %1372 = vmatpush1.bf16.msra.mxu0 %v1020
    %1373 = vmatprep.subr.bf16.mxu0 %v1025
    %1374 = vmatpush1.bf16.msra.mxu0 %v1024
    %1375 = vmatprep.subr.bf16.mxu0 %v1029
    %1376 = vmatpush1.bf16.msra.mxu0 %v1028
    %1377 = vmatprep.subr.bf16.mxu0 %v1033
    %1378 = vmatpush1.bf16.msra.mxu0 %v1032
    %1379 = vmatprep.subr.bf16.mxu0 %v1037
    %1380 = vmatpush1.bf16.msra.mxu0 %v1036
    %1381 = vmatprep.subr.bf16.mxu0 %v1041
    %1382 = vmatpush1.bf16.msra.mxu0 %v1040
    %1383 = vmatprep.subr.bf16.mxu0 %v1045
    %1384 = vmatpush1.bf16.msra.mxu0 %v1044
    %1385 = vmatprep.subr.bf16.mxu0 %v1049
    %1386 = vmatpush1.bf16.msra.mxu0 %v1048
    %1387 = vmatprep.subr.bf16.mxu0 %v1053
    %1388 = vmatpush1.bf16.msra.mxu0 %v1052
    %1389 = vmatprep.subr.bf16.mxu0 %v1057
    %1390 = vmatpush1.bf16.msra.mxu0 %v1056
    %1391 = vmatprep.subr.bf16.mxu0 %v1061
    %1392 = vmatpush1.bf16.msra.mxu0 %v1060
    %1393 = vmatprep.mubr.bf16.mxu0 %v127
    %1394 = vmatmul.mubr.bf16.gmra.mrb[0].mxu0 %v126
    %v1395 = vpop.f32.mrb[0].mxu0
    %v1396 = vadd.f32 %v1355, %v1395
    %v1397 = vpop.f32.mrb[0].mxu0
    %v1398 = vadd.f32 %v1357, %v1397
    %v1399 = vpop.f32.mrb[0].mxu0
    %v1400 = vpop.f32.mrb[0].mxu0
    %1401 = vdwg.mxu0
    %1402 = vmatprep.subr.bf16.mxu0 %v1065
    %1403 = vmatpush1.bf16.msra.mxu0 %v1064
    %1404 = vmatprep.subr.bf16.mxu0 %v1069
    %1405 = vmatpush1.bf16.msra.mxu0 %v1068
    %1406 = vmatprep.subr.bf16.mxu0 %v1073
    %1407 = vmatpush1.bf16.msra.mxu0 %v1072
    %1408 = vmatprep.subr.bf16.mxu0 %v1077
    %1409 = vmatpush1.bf16.msra.mxu0 %v1076
    %1410 = vmatprep.subr.bf16.mxu0 %v1081
    %1411 = vmatpush1.bf16.msra.mxu0 %v1080
    %1412 = vmatprep.subr.bf16.mxu0 %v1085
    %1413 = vmatpush1.bf16.msra.mxu0 %v1084
    %1414 = vmatprep.subr.bf16.mxu0 %v1089
    %1415 = vmatpush1.bf16.msra.mxu0 %v1088
    %1416 = vmatprep.subr.bf16.mxu0 %v1093
    %1417 = vmatpush1.bf16.msra.mxu0 %v1092
    %1418 = vmatprep.subr.bf16.mxu0 %v1097
    %1419 = vmatpush1.bf16.msra.mxu0 %v1096
    %1420 = vmatprep.subr.bf16.mxu0 %v1101
    %1421 = vmatpush1.bf16.msra.mxu0 %v1100
    %1422 = vmatprep.subr.bf16.mxu0 %v1105
    %1423 = vmatpush1.bf16.msra.mxu0 %v1104
    %1424 = vmatprep.subr.bf16.mxu0 %v1109
    %1425 = vmatpush1.bf16.msra.mxu0 %v1108
    %1426 = vmatprep.subr.bf16.mxu0 %v1113
    %1427 = vmatpush1.bf16.msra.mxu0 %v1112
    %1428 = vmatprep.subr.bf16.mxu0 %v1117
    %1429 = vmatpush1.bf16.msra.mxu0 %v1116
    %1430 = vmatprep.subr.bf16.mxu0 %v1121
    %1431 = vmatpush1.bf16.msra.mxu0 %v1120
    %1432 = vmatprep.subr.bf16.mxu0 %v1125
    %1433 = vmatpush1.bf16.msra.mxu0 %v1124
    %1434 = vmatprep.mubr.bf16.mxu0 %v129
    %1435 = vmatmul.mubr.bf16.gmra.mrb[0].mxu0 %v128
    %v1436 = vpop.f32.mrb[0].mxu0
    %v1437 = vadd.f32 %v1396, %v1436
    %v1438 = vpop.f32.mrb[0].mxu0
    %v1439 = vadd.f32 %v1398, %v1438
    %v1440 = vpop.f32.mrb[0].mxu0
    %v1441 = vpop.f32.mrb[0].mxu0
    %1442 = vdwg.mxu0
    %1443 = vmatprep.subr.bf16.mxu0 %v939
    %1444 = vmatpush1.bf16.msra.mxu0 %v938
    %1445 = vmatprep.subr.bf16.mxu0 %v943
    %1446 = vmatpush1.bf16.msra.mxu0 %v942
    %1447 = vmatprep.subr.bf16.mxu0 %v947
    %1448 = vmatpush1.bf16.msra.mxu0 %v946
    %1449 = vmatprep.subr.bf16.mxu0 %v951
    %1450 = vmatpush1.bf16.msra.mxu0 %v950
    %1451 = vmatprep.subr.bf16.mxu0 %v955
    %1452 = vmatpush1.bf16.msra.mxu0 %v954
    %1453 = vmatprep.subr.bf16.mxu0 %v959
    %1454 = vmatpush1.bf16.msra.mxu0 %v958
    %1455 = vmatprep.subr.bf16.mxu0 %v963
    %1456 = vmatpush1.bf16.msra.mxu0 %v962
    %1457 = vmatprep.subr.bf16.mxu0 %v967
    %1458 = vmatpush1.bf16.msra.mxu0 %v966
    %1459 = vmatprep.subr.bf16.mxu0 %v971
    %1460 = vmatpush1.bf16.msra.mxu0 %v970
    %1461 = vmatprep.subr.bf16.mxu0 %v975
    %1462 = vmatpush1.bf16.msra.mxu0 %v974
    %1463 = vmatprep.subr.bf16.mxu0 %v979
    %1464 = vmatpush1.bf16.msra.mxu0 %v978
    %1465 = vmatprep.subr.bf16.mxu0 %v983
    %1466 = vmatpush1.bf16.msra.mxu0 %v982
    %1467 = vmatprep.subr.bf16.mxu0 %v987
    %1468 = vmatpush1.bf16.msra.mxu0 %v986
    %1469 = vmatprep.subr.bf16.mxu0 %v991
    %1470 = vmatpush1.bf16.msra.mxu0 %v990
    %1471 = vmatprep.subr.bf16.mxu0 %v995
    %1472 = vmatpush1.bf16.msra.mxu0 %v994
    %1473 = vmatprep.subr.bf16.mxu0 %v999
    %1474 = vmatpush1.bf16.msra.mxu0 %v998
    %1475 = vmatprep.mubr.bf16.mxu0 %v125
    %1476 = vmatmul.mubr.bf16.gmra.mrb[0].mxu0 %v124
    %v1477 = vpop.f32.mrb[0].mxu0
    %v1478 = vadd.f32 %v351, %v1477
    %v1479 = vpop.f32.mrb[0].mxu0
    %v1480 = vadd.f32 %v355, %v1479
    %v1481 = vpop.f32.mrb[0].mxu0
    %v1482 = vpop.f32.mrb[0].mxu0
    %1483 = vdwg.mxu0
    %1484 = vmatprep.subr.bf16.mxu0 %v1003
    %1485 = vmatpush1.bf16.msra.mxu0 %v1002
    %1486 = vmatprep.subr.bf16.mxu0 %v1007
    %1487 = vmatpush1.bf16.msra.mxu0 %v1006
    %1488 = vmatprep.subr.bf16.mxu0 %v1011
    %1489 = vmatpush1.bf16.msra.mxu0 %v1010
    %1490 = vmatprep.subr.bf16.mxu0 %v1015
    %1491 = vmatpush1.bf16.msra.mxu0 %v1014
    %1492 = vmatprep.subr.bf16.mxu0 %v1019
    %1493 = vmatpush1.bf16.msra.mxu0 %v1018
    %1494 = vmatprep.subr.bf16.mxu0 %v1023
    %1495 = vmatpush1.bf16.msra.mxu0 %v1022
    %1496 = vmatprep.subr.bf16.mxu0 %v1027
    %1497 = vmatpush1.bf16.msra.mxu0 %v1026
    %1498 = vmatprep.subr.bf16.mxu0 %v1031
    %1499 = vmatpush1.bf16.msra.mxu0 %v1030
    %1500 = vmatprep.subr.bf16.mxu0 %v1035
    %1501 = vmatpush1.bf16.msra.mxu0 %v1034
    %1502 = vmatprep.subr.bf16.mxu0 %v1039
    %1503 = vmatpush1.bf16.msra.mxu0 %v1038
    %1504 = vmatprep.subr.bf16.mxu0 %v1043
    %1505 = vmatpush1.bf16.msra.mxu0 %v1042
    %1506 = vmatprep.subr.bf16.mxu0 %v1047
    %1507 = vmatpush1.bf16.msra.mxu0 %v1046
    %1508 = vmatprep.subr.bf16.mxu0 %v1051
    %1509 = vmatpush1.bf16.msra.mxu0 %v1050
    %1510 = vmatprep.subr.bf16.mxu0 %v1055
    %1511 = vmatpush1.bf16.msra.mxu0 %v1054
    %1512 = vmatprep.subr.bf16.mxu0 %v1059
    %1513 = vmatpush1.bf16.msra.mxu0 %v1058
    %1514 = vmatprep.subr.bf16.mxu0 %v1063
    %1515 = vmatpush1.bf16.msra.mxu0 %v1062
    %1516 = vmatprep.mubr.bf16.mxu0 %v127
    %1517 = vmatmul.mubr.bf16.gmra.mrb[0].mxu0 %v126
    %v1518 = vpop.f32.mrb[0].mxu0
    %v1519 = vadd.f32 %v1478, %v1518
    %v1520 = vpop.f32.mrb[0].mxu0
    %v1521 = vadd.f32 %v1480, %v1520
    %v1522 = vpop.f32.mrb[0].mxu0
    %v1523 = vpop.f32.mrb[0].mxu0
    %1524 = vdwg.mxu0
    %1525 = vmatprep.subr.bf16.mxu0 %v1067
    %1526 = vmatpush1.bf16.msra.mxu0 %v1066
    %1527 = vmatprep.subr.bf16.mxu0 %v1071
    %1528 = vmatpush1.bf16.msra.mxu0 %v1070
    %1529 = vmatprep.subr.bf16.mxu0 %v1075
    %1530 = vmatpush1.bf16.msra.mxu0 %v1074
    %1531 = vmatprep.subr.bf16.mxu0 %v1079
    %1532 = vmatpush1.bf16.msra.mxu0 %v1078
    %1533 = vmatprep.subr.bf16.mxu0 %v1083
    %1534 = vmatpush1.bf16.msra.mxu0 %v1082
    %1535 = vmatprep.subr.bf16.mxu0 %v1087
    %1536 = vmatpush1.bf16.msra.mxu0 %v1086
    %1537 = vmatprep.subr.bf16.mxu0 %v1091
    %1538 = vmatpush1.bf16.msra.mxu0 %v1090
    %1539 = vmatprep.subr.bf16.mxu0 %v1095
    %1540 = vmatpush1.bf16.msra.mxu0 %v1094
    %1541 = vmatprep.subr.bf16.mxu0 %v1099
    %1542 = vmatpush1.bf16.msra.mxu0 %v1098
    %1543 = vmatprep.subr.bf16.mxu0 %v1103
    %1544 = vmatpush1.bf16.msra.mxu0 %v1102
    %1545 = vmatprep.subr.bf16.mxu0 %v1107
    %1546 = vmatpush1.bf16.msra.mxu0 %v1106
    %1547 = vmatprep.subr.bf16.mxu0 %v1111
    %1548 = vmatpush1.bf16.msra.mxu0 %v1110
    %1549 = vmatprep.subr.bf16.mxu0 %v1115
    %1550 = vmatpush1.bf16.msra.mxu0 %v1114
    %1551 = vmatprep.subr.bf16.mxu0 %v1119
    %1552 = vmatpush1.bf16.msra.mxu0 %v1118
    %1553 = vmatprep.subr.bf16.mxu0 %v1123
    %1554 = vmatpush1.bf16.msra.mxu0 %v1122
    %1555 = vmatprep.subr.bf16.mxu0 %v1127
    %1556 = vmatpush1.bf16.msra.mxu0 %v1126
    %1557 = vmatprep.mubr.bf16.mxu0 %v129
    %1558 = vmatmul.mubr.bf16.gmra.mrb[0].mxu0 %v128
    %v1559 = vpop.f32.mrb[0].mxu0
    %v1560 = vadd.f32 %v1519, %v1559
    %v1561 = vpop.f32.mrb[0].mxu0
    %v1562 = vadd.f32 %v1521, %v1561
    %v1563 = vpop.f32.mrb[0].mxu0
    %v1564 = vpop.f32.mrb[0].mxu0
    %1565 = vdwg.mxu0
    %v1566 = vmul.f32 %v1437, %v1437
    %v1567 = vmul.f32 %v1439, %v1439
    %v1568 = vmul.f32 %v1560, %v1560
    %v1569 = vmul.f32 %v1562, %v1562
    %v1570 = vadd.f32 %v1566, %v1567
    %v1571 = vadd.f32 %v1570, %v1568
    %v1572 = vadd.f32 %v1571, %v1569
    %1573 = vadd.xlane.f32.xlu0 %v1572
    %v1574 = vpop.xlane.xlu0 %1573
    %v1575 = vmax.f32 %v1574, 1e-24
    %v1576 = vrsqrt.pop %v1575
    %v1577 = vmul.f32 %v1437, %v1576
    %v1578 = vmul.f32 %v1439, %v1576
    %v1579 = vmul.f32 %v1560, %v1576
    %v1580 = vmul.f32 %v1562, %v1576
    %1581 = vst [vmem:[#allocation14] sm:$0xff] %v1577
    %1582 = vst [vmem:[#allocation14 + $0x8] sm:$0xff] %v1578
    %1583 = vst [vmem:[#allocation14 + $0x10] sm:$0xff] %v1579
    %1584 = vst [vmem:[#allocation14 + $0x18] sm:$0xff] %v1580
    %v1585 = vld [vmem:[#allocation9] sm:$0xff]
    %v1586 = vld [vmem:[#allocation9 + $0x8] sm:$0xff]
    %v1587 = vld [vmem:[#allocation9 + $0x10] sm:$0xff]
    %v1588 = vld [vmem:[#allocation9 + $0x18] sm:$0xff]
    %v1589 = vld [vmem:[#allocation9 + $0x20] sm:$0xff]
    %v1590 = vld [vmem:[#allocation9 + $0x28] sm:$0xff]
    %v1591 = vld [vmem:[#allocation9 + $0x30] sm:$0xff]
    %v1592 = vld [vmem:[#allocation9 + $0x38] sm:$0xff]
    %v1593 = vld [vmem:[#allocation9 + $0x40] sm:$0xff]
    %v1594 = vld [vmem:[#allocation9 + $0x48] sm:$0xff]
    %v1595 = vld [vmem:[#allocation9 + $0x50] sm:$0xff]
    %v1596 = vld [vmem:[#allocation9 + $0x58] sm:$0xff]
    %v1597 = vld [vmem:[#allocation9 + $0x60] sm:$0xff]
    %v1598 = vld [vmem:[#allocation9 + $0x68] sm:$0xff]
    %v1599 = vld [vmem:[#allocation9 + $0x70] sm:$0xff]
    %v1600 = vld [vmem:[#allocation9 + $0x78] sm:$0xff]
    %v1601 = vld [vmem:[#allocation9 + $0x80] sm:$0xff]
    %v1602 = vld [vmem:[#allocation9 + $0x88] sm:$0xff]
    %v1603 = vld [vmem:[#allocation9 + $0x90] sm:$0xff]
    %v1604 = vld [vmem:[#allocation9 + $0x98] sm:$0xff]
    %v1605 = vld [vmem:[#allocation9 + $0xa0] sm:$0xff]
    %v1606 = vld [vmem:[#allocation9 + $0xa8] sm:$0xff]
    %v1607 = vld [vmem:[#allocation9 + $0xb0] sm:$0xff]
    %v1608 = vld [vmem:[#allocation9 + $0xb8] sm:$0xff]
    %v1609 = vld [vmem:[#allocation9 + $0xc0] sm:$0xff]
    %v1610 = vld [vmem:[#allocation9 + $0xc8] sm:$0xff]
    %v1611 = vld [vmem:[#allocation9 + $0xd0] sm:$0xff]
    %v1612 = vld [vmem:[#allocation9 + $0xd8] sm:$0xff]
    %v1613 = vld [vmem:[#allocation9 + $0xe0] sm:$0xff]
    %v1614 = vld [vmem:[#allocation9 + $0xe8] sm:$0xff]
    %v1615 = vld [vmem:[#allocation9 + $0xf0] sm:$0xff]
    %v1616 = vld [vmem:[#allocation9 + $0xf8] sm:$0xff]
    %v1617 = vld [vmem:[#allocation9 + $0x100] sm:$0xff]
    %v1618 = vld [vmem:[#allocation9 + $0x108] sm:$0xff]
    %v1619 = vld [vmem:[#allocation9 + $0x110] sm:$0xff]
    %v1620 = vld [vmem:[#allocation9 + $0x118] sm:$0xff]
    %v1621 = vld [vmem:[#allocation9 + $0x120] sm:$0xff]
    %v1622 = vld [vmem:[#allocation9 + $0x128] sm:$0xff]
    %v1623 = vld [vmem:[#allocation9 + $0x130] sm:$0xff]
    %v1624 = vld [vmem:[#allocation9 + $0x138] sm:$0xff]
    %v1625 = vld [vmem:[#allocation9 + $0x140] sm:$0xff]
    %v1626 = vld [vmem:[#allocation9 + $0x148] sm:$0xff]
    %v1627 = vld [vmem:[#allocation9 + $0x150] sm:$0xff]
    %v1628 = vld [vmem:[#allocation9 + $0x158] sm:$0xff]
    %v1629 = vld [vmem:[#allocation9 + $0x160] sm:$0xff]
    %v1630 = vld [vmem:[#allocation9 + $0x168] sm:$0xff]
    %v1631 = vld [vmem:[#allocation9 + $0x170] sm:$0xff]
    %v1632 = vld [vmem:[#allocation9 + $0x178] sm:$0xff]
    %v1633 = vld [vmem:[#allocation9 + $0x180] sm:$0xff]
    %v1634 = vld [vmem:[#allocation9 + $0x188] sm:$0xff]
    %v1635 = vld [vmem:[#allocation9 + $0x190] sm:$0xff]
    %v1636 = vld [vmem:[#allocation9 + $0x198] sm:$0xff]
    %v1637 = vld [vmem:[#allocation9 + $0x1a0] sm:$0xff]
    %v1638 = vld [vmem:[#allocation9 + $0x1a8] sm:$0xff]
    %v1639 = vld [vmem:[#allocation9 + $0x1b0] sm:$0xff]
    %v1640 = vld [vmem:[#allocation9 + $0x1b8] sm:$0xff]
    %v1641 = vld [vmem:[#allocation9 + $0x1c0] sm:$0xff]
    %v1642 = vld [vmem:[#allocation9 + $0x1c8] sm:$0xff]
    %v1643 = vld [vmem:[#allocation9 + $0x1d0] sm:$0xff]
    %v1644 = vld [vmem:[#allocation9 + $0x1d8] sm:$0xff]
    %v1645 = vld [vmem:[#allocation9 + $0x1e0] sm:$0xff]
    %v1646 = vld [vmem:[#allocation9 + $0x1e8] sm:$0xff]
    %v1647 = vld [vmem:[#allocation9 + $0x1f0] sm:$0xff]
    %v1648 = vld [vmem:[#allocation9 + $0x1f8] sm:$0xff]
    %v1649 = vld [vmem:[#allocation9 + $0x200] sm:$0xff]
    %v1650 = vld [vmem:[#allocation9 + $0x208] sm:$0xff]
    %v1651 = vld [vmem:[#allocation9 + $0x210] sm:$0xff]
    %v1652 = vld [vmem:[#allocation9 + $0x218] sm:$0xff]
    %v1653 = vld [vmem:[#allocation9 + $0x220] sm:$0xff]
    %v1654 = vld [vmem:[#allocation9 + $0x228] sm:$0xff]
    %v1655 = vld [vmem:[#allocation9 + $0x230] sm:$0xff]
    %v1656 = vld [vmem:[#allocation9 + $0x238] sm:$0xff]
    %v1657 = vld [vmem:[#allocation9 + $0x240] sm:$0xff]
    %v1658 = vld [vmem:[#allocation9 + $0x248] sm:$0xff]
    %v1659 = vld [vmem:[#allocation9 + $0x250] sm:$0xff]
    %v1660 = vld [vmem:[#allocation9 + $0x258] sm:$0xff]
    %v1661 = vld [vmem:[#allocation9 + $0x260] sm:$0xff]
    %v1662 = vld [vmem:[#allocation9 + $0x268] sm:$0xff]
    %v1663 = vld [vmem:[#allocation9 + $0x270] sm:$0xff]
    %v1664 = vld [vmem:[#allocation9 + $0x278] sm:$0xff]
    %v1665 = vld [vmem:[#allocation9 + $0x280] sm:$0xff]
    %v1666 = vld [vmem:[#allocation9 + $0x288] sm:$0xff]
    %v1667 = vld [vmem:[#allocation9 + $0x290] sm:$0xff]
    %v1668 = vld [vmem:[#allocation9 + $0x298] sm:$0xff]
    %v1669 = vld [vmem:[#allocation9 + $0x2a0] sm:$0xff]
    %v1670 = vld [vmem:[#allocation9 + $0x2a8] sm:$0xff]
    %v1671 = vld [vmem:[#allocation9 + $0x2b0] sm:$0xff]
    %v1672 = vld [vmem:[#allocation9 + $0x2b8] sm:$0xff]
    %v1673 = vld [vmem:[#allocation9 + $0x2c0] sm:$0xff]
    %v1674 = vld [vmem:[#allocation9 + $0x2c8] sm:$0xff]
    %v1675 = vld [vmem:[#allocation9 + $0x2d0] sm:$0xff]
    %v1676 = vld [vmem:[#allocation9 + $0x2d8] sm:$0xff]
    %v1677 = vld [vmem:[#allocation9 + $0x2e0] sm:$0xff]
    %v1678 = vld [vmem:[#allocation9 + $0x2e8] sm:$0xff]
    %v1679 = vld [vmem:[#allocation9 + $0x2f0] sm:$0xff]
    %v1680 = vld [vmem:[#allocation9 + $0x2f8] sm:$0xff]
    %v1681 = vld [vmem:[#allocation9 + $0x300] sm:$0xff]
    %v1682 = vld [vmem:[#allocation9 + $0x308] sm:$0xff]
    %v1683 = vld [vmem:[#allocation9 + $0x310] sm:$0xff]
    %v1684 = vld [vmem:[#allocation9 + $0x318] sm:$0xff]
    %v1685 = vld [vmem:[#allocation9 + $0x320] sm:$0xff]
    %v1686 = vld [vmem:[#allocation9 + $0x328] sm:$0xff]
    %v1687 = vld [vmem:[#allocation9 + $0x330] sm:$0xff]
    %v1688 = vld [vmem:[#allocation9 + $0x338] sm:$0xff]
    %v1689 = vld [vmem:[#allocation9 + $0x340] sm:$0xff]
    %v1690 = vld [vmem:[#allocation9 + $0x348] sm:$0xff]
    %v1691 = vld [vmem:[#allocation9 + $0x350] sm:$0xff]
    %v1692 = vld [vmem:[#allocation9 + $0x358] sm:$0xff]
    %v1693 = vld [vmem:[#allocation9 + $0x360] sm:$0xff]
    %v1694 = vld [vmem:[#allocation9 + $0x368] sm:$0xff]
    %v1695 = vld [vmem:[#allocation9 + $0x370] sm:$0xff]
    %v1696 = vld [vmem:[#allocation9 + $0x378] sm:$0xff]
    %v1697 = vld [vmem:[#allocation9 + $0x380] sm:$0xff]
    %v1698 = vld [vmem:[#allocation9 + $0x388] sm:$0xff]
    %v1699 = vld [vmem:[#allocation9 + $0x390] sm:$0xff]
    %v1700 = vld [vmem:[#allocation9 + $0x398] sm:$0xff]
    %v1701 = vld [vmem:[#allocation9 + $0x3a0] sm:$0xff]
    %v1702 = vld [vmem:[#allocation9 + $0x3a8] sm:$0xff]
    %v1703 = vld [vmem:[#allocation9 + $0x3b0] sm:$0xff]
    %v1704 = vld [vmem:[#allocation9 + $0x3b8] sm:$0xff]
    %v1705 = vld [vmem:[#allocation9 + $0x3c0] sm:$0xff]
    %v1706 = vld [vmem:[#allocation9 + $0x3c8] sm:$0xff]
    %v1707 = vld [vmem:[#allocation9 + $0x3d0] sm:$0xff]
    %v1708 = vld [vmem:[#allocation9 + $0x3d8] sm:$0xff]
    %v1709 = vld [vmem:[#allocation9 + $0x3e0] sm:$0xff]
    %v1710 = vld [vmem:[#allocation9 + $0x3e8] sm:$0xff]
    %v1711 = vld [vmem:[#allocation9 + $0x3f0] sm:$0xff]
    %v1712 = vld [vmem:[#allocation9 + $0x3f8] sm:$0xff]
    %v1713 = vld [vmem:[#allocation9 + $0x400] sm:$0xff]
    %v1714 = vld [vmem:[#allocation9 + $0x408] sm:$0xff]
    %v1715 = vld [vmem:[#allocation9 + $0x410] sm:$0xff]
    %v1716 = vld [vmem:[#allocation9 + $0x418] sm:$0xff]
    %v1717 = vld [vmem:[#allocation9 + $0x420] sm:$0xff]
    %v1718 = vld [vmem:[#allocation9 + $0x428] sm:$0xff]
    %v1719 = vld [vmem:[#allocation9 + $0x430] sm:$0xff]
    %v1720 = vld [vmem:[#allocation9 + $0x438] sm:$0xff]
    %v1721 = vld [vmem:[#allocation9 + $0x440] sm:$0xff]
    %v1722 = vld [vmem:[#allocation9 + $0x448] sm:$0xff]
    %v1723 = vld [vmem:[#allocation9 + $0x450] sm:$0xff]
    %v1724 = vld [vmem:[#allocation9 + $0x458] sm:$0xff]
    %v1725 = vld [vmem:[#allocation9 + $0x460] sm:$0xff]
    %v1726 = vld [vmem:[#allocation9 + $0x468] sm:$0xff]
    %v1727 = vld [vmem:[#allocation9 + $0x470] sm:$0xff]
    %v1728 = vld [vmem:[#allocation9 + $0x478] sm:$0xff]
    %v1729 = vld [vmem:[#allocation9 + $0x480] sm:$0xff]
    %v1730 = vld [vmem:[#allocation9 + $0x488] sm:$0xff]
    %v1731 = vld [vmem:[#allocation9 + $0x490] sm:$0xff]
    %v1732 = vld [vmem:[#allocation9 + $0x498] sm:$0xff]
    %v1733 = vld [vmem:[#allocation9 + $0x4a0] sm:$0xff]
    %v1734 = vld [vmem:[#allocation9 + $0x4a8] sm:$0xff]
    %v1735 = vld [vmem:[#allocation9 + $0x4b0] sm:$0xff]
    %v1736 = vld [vmem:[#allocation9 + $0x4b8] sm:$0xff]
    %v1737 = vld [vmem:[#allocation9 + $0x4c0] sm:$0xff]
    %v1738 = vld [vmem:[#allocation9 + $0x4c8] sm:$0xff]
    %v1739 = vld [vmem:[#allocation9 + $0x4d0] sm:$0xff]
    %v1740 = vld [vmem:[#allocation9 + $0x4d8] sm:$0xff]
    %v1741 = vld [vmem:[#allocation9 + $0x4e0] sm:$0xff]
    %v1742 = vld [vmem:[#allocation9 + $0x4e8] sm:$0xff]
    %v1743 = vld [vmem:[#allocation9 + $0x4f0] sm:$0xff]
    %v1744 = vld [vmem:[#allocation9 + $0x4f8] sm:$0xff]
    %v1745 = vld [vmem:[#allocation9 + $0x500] sm:$0xff]
    %v1746 = vld [vmem:[#allocation9 + $0x508] sm:$0xff]
    %v1747 = vld [vmem:[#allocation9 + $0x510] sm:$0xff]
    %v1748 = vld [vmem:[#allocation9 + $0x518] sm:$0xff]
    %v1749 = vld [vmem:[#allocation9 + $0x520] sm:$0xff]
    %v1750 = vld [vmem:[#allocation9 + $0x528] sm:$0xff]
    %v1751 = vld [vmem:[#allocation9 + $0x530] sm:$0xff]
    %v1752 = vld [vmem:[#allocation9 + $0x538] sm:$0xff]
    %v1753 = vld [vmem:[#allocation9 + $0x540] sm:$0xff]
    %v1754 = vld [vmem:[#allocation9 + $0x548] sm:$0xff]
    %v1755 = vld [vmem:[#allocation9 + $0x550] sm:$0xff]
    %v1756 = vld [vmem:[#allocation9 + $0x558] sm:$0xff]
    %v1757 = vld [vmem:[#allocation9 + $0x560] sm:$0xff]
    %v1758 = vld [vmem:[#allocation9 + $0x568] sm:$0xff]
    %v1759 = vld [vmem:[#allocation9 + $0x570] sm:$0xff]
    %v1760 = vld [vmem:[#allocation9 + $0x578] sm:$0xff]
    %v1761 = vld [vmem:[#allocation9 + $0x580] sm:$0xff]
    %v1762 = vld [vmem:[#allocation9 + $0x588] sm:$0xff]
    %v1763 = vld [vmem:[#allocation9 + $0x590] sm:$0xff]
    %v1764 = vld [vmem:[#allocation9 + $0x598] sm:$0xff]
    %v1765 = vld [vmem:[#allocation9 + $0x5a0] sm:$0xff]
    %v1766 = vld [vmem:[#allocation9 + $0x5a8] sm:$0xff]
    %v1767 = vld [vmem:[#allocation9 + $0x5b0] sm:$0xff]
    %v1768 = vld [vmem:[#allocation9 + $0x5b8] sm:$0xff]
    %v1769 = vld [vmem:[#allocation9 + $0x5c0] sm:$0xff]
    %v1770 = vld [vmem:[#allocation9 + $0x5c8] sm:$0xff]
    %v1771 = vld [vmem:[#allocation9 + $0x5d0] sm:$0xff]
    %v1772 = vld [vmem:[#allocation9 + $0x5d8] sm:$0xff]
    %v1773 = vld [vmem:[#allocation9 + $0x5e0] sm:$0xff]
    %v1774 = vld [vmem:[#allocation9 + $0x5e8] sm:$0xff]
    %v1775 = vld [vmem:[#allocation9 + $0x5f0] sm:$0xff]
    %v1776 = vld [vmem:[#allocation9 + $0x5f8] sm:$0xff]
    %v1777 = vld [vmem:[#allocation9 + $0x600] sm:$0xff]
    %v1778 = vld [vmem:[#allocation9 + $0x608] sm:$0xff]
    %v1779 = vld [vmem:[#allocation9 + $0x610] sm:$0xff]
    %v1780 = vld [vmem:[#allocation9 + $0x618] sm:$0xff]
    %v1781 = vld [vmem:[#allocation9 + $0x620] sm:$0xff]
    %v1782 = vld [vmem:[#allocation9 + $0x628] sm:$0xff]
    %v1783 = vld [vmem:[#allocation9 + $0x630] sm:$0xff]
    %v1784 = vld [vmem:[#allocation9 + $0x638] sm:$0xff]
    %v1785 = vld [vmem:[#allocation9 + $0x640] sm:$0xff]
    %v1786 = vld [vmem:[#allocation9 + $0x648] sm:$0xff]
    %v1787 = vld [vmem:[#allocation9 + $0x650] sm:$0xff]
    %v1788 = vld [vmem:[#allocation9 + $0x658] sm:$0xff]
    %v1789 = vld [vmem:[#allocation9 + $0x660] sm:$0xff]
    %v1790 = vld [vmem:[#allocation9 + $0x668] sm:$0xff]
    %v1791 = vld [vmem:[#allocation9 + $0x670] sm:$0xff]
    %v1792 = vld [vmem:[#allocation9 + $0x678] sm:$0xff]
    %v1793 = vld [vmem:[#allocation9 + $0x680] sm:$0xff]
    %v1794 = vld [vmem:[#allocation9 + $0x688] sm:$0xff]
    %v1795 = vld [vmem:[#allocation9 + $0x690] sm:$0xff]
    %v1796 = vld [vmem:[#allocation9 + $0x698] sm:$0xff]
    %v1797 = vld [vmem:[#allocation9 + $0x6a0] sm:$0xff]
    %v1798 = vld [vmem:[#allocation9 + $0x6a8] sm:$0xff]
    %v1799 = vld [vmem:[#allocation9 + $0x6b0] sm:$0xff]
    %v1800 = vld [vmem:[#allocation9 + $0x6b8] sm:$0xff]
    %v1801 = vld [vmem:[#allocation9 + $0x6c0] sm:$0xff]
    %v1802 = vld [vmem:[#allocation9 + $0x6c8] sm:$0xff]
    %v1803 = vld [vmem:[#allocation9 + $0x6d0] sm:$0xff]
    %v1804 = vld [vmem:[#allocation9 + $0x6d8] sm:$0xff]
    %v1805 = vld [vmem:[#allocation9 + $0x6e0] sm:$0xff]
    %v1806 = vld [vmem:[#allocation9 + $0x6e8] sm:$0xff]
    %v1807 = vld [vmem:[#allocation9 + $0x6f0] sm:$0xff]
    %v1808 = vld [vmem:[#allocation9 + $0x6f8] sm:$0xff]
    %v1809 = vld [vmem:[#allocation9 + $0x700] sm:$0xff]
    %v1810 = vld [vmem:[#allocation9 + $0x708] sm:$0xff]
    %v1811 = vld [vmem:[#allocation9 + $0x710] sm:$0xff]
    %v1812 = vld [vmem:[#allocation9 + $0x718] sm:$0xff]
    %v1813 = vld [vmem:[#allocation9 + $0x720] sm:$0xff]
    %v1814 = vld [vmem:[#allocation9 + $0x728] sm:$0xff]
    %v1815 = vld [vmem:[#allocation9 + $0x730] sm:$0xff]
    %v1816 = vld [vmem:[#allocation9 + $0x738] sm:$0xff]
    %v1817 = vld [vmem:[#allocation9 + $0x740] sm:$0xff]
    %v1818 = vld [vmem:[#allocation9 + $0x748] sm:$0xff]
    %v1819 = vld [vmem:[#allocation9 + $0x750] sm:$0xff]
    %v1820 = vld [vmem:[#allocation9 + $0x758] sm:$0xff]
    %v1821 = vld [vmem:[#allocation9 + $0x760] sm:$0xff]
    %v1822 = vld [vmem:[#allocation9 + $0x768] sm:$0xff]
    %v1823 = vld [vmem:[#allocation9 + $0x770] sm:$0xff]
    %v1824 = vld [vmem:[#allocation9 + $0x778] sm:$0xff]
    %v1825 = vld [vmem:[#allocation9 + $0x780] sm:$0xff]
    %v1826 = vld [vmem:[#allocation9 + $0x788] sm:$0xff]
    %v1827 = vld [vmem:[#allocation9 + $0x790] sm:$0xff]
    %v1828 = vld [vmem:[#allocation9 + $0x798] sm:$0xff]
    %v1829 = vld [vmem:[#allocation9 + $0x7a0] sm:$0xff]
    %v1830 = vld [vmem:[#allocation9 + $0x7a8] sm:$0xff]
    %v1831 = vld [vmem:[#allocation9 + $0x7b0] sm:$0xff]
    %v1832 = vld [vmem:[#allocation9 + $0x7b8] sm:$0xff]
    %v1833 = vld [vmem:[#allocation9 + $0x7c0] sm:$0xff]
    %v1834 = vld [vmem:[#allocation9 + $0x7c8] sm:$0xff]
    %v1835 = vld [vmem:[%s5] sm:$0xf]
    %v1837 = vlaneseq
    %v1838 = vshrl.u32 %v1837, 7
    %v1839 = vsub.s32 0, %v1838
    %v1840 = vrot.slane %v1835, %v1839
    %v1841 = vlaneseq
    %v1842 = vshrl.u32 %v1841, 7
    %v1843 = vsub.s32 1, %v1842
    %v1844 = vrot.slane %v1835, %v1843
    %v1845 = vlaneseq
    %v1846 = vshrl.u32 %v1845, 7
    %v1847 = vsub.s32 2, %v1846
    %v1848 = vrot.slane %v1835, %v1847
    %v1849 = vlaneseq
    %v1850 = vshrl.u32 %v1849, 7
    %v1851 = vsub.s32 3, %v1850
    %v1852 = vrot.slane %v1835, %v1851
    %v2107 = vunpack.c.l.b16 %v1585
    %v2108 = vunpack.c.h.b16 %v1585
    %v2109 = vunpack.c.l.b16 %v1586
    %v2110 = vunpack.c.h.b16 %v1586
    %v2111 = vunpack.c.l.b16 %v1587
    %v2112 = vunpack.c.h.b16 %v1587
    %v2113 = vunpack.c.l.b16 %v1588
    %v2114 = vunpack.c.h.b16 %v1588
    %v2115 = vunpack.c.l.b16 %v1589
    %v2116 = vunpack.c.h.b16 %v1589
    %v2117 = vunpack.c.l.b16 %v1590
    %v2118 = vunpack.c.h.b16 %v1590
    %v2119 = vunpack.c.l.b16 %v1591
    %v2120 = vunpack.c.h.b16 %v1591
    %v2121 = vunpack.c.l.b16 %v1592
    %v2122 = vunpack.c.h.b16 %v1592
    %v2123 = vunpack.c.l.b16 %v1593
    %v2124 = vunpack.c.h.b16 %v1593
    %v2125 = vunpack.c.l.b16 %v1594
    %v2126 = vunpack.c.h.b16 %v1594
    %v2127 = vunpack.c.l.b16 %v1595
    %v2128 = vunpack.c.h.b16 %v1595
    %v2129 = vunpack.c.l.b16 %v1596
    %v2130 = vunpack.c.h.b16 %v1596
    %v2131 = vunpack.c.l.b16 %v1597
    %v2132 = vunpack.c.h.b16 %v1597
    %v2133 = vunpack.c.l.b16 %v1598
    %v2134 = vunpack.c.h.b16 %v1598
    %v2135 = vunpack.c.l.b16 %v1599
    %v2136 = vunpack.c.h.b16 %v1599
    %v2137 = vunpack.c.l.b16 %v1600
    %v2138 = vunpack.c.h.b16 %v1600
    %v2139 = vunpack.c.l.b16 %v1601
    %v2140 = vunpack.c.h.b16 %v1601
    %v2141 = vunpack.c.l.b16 %v1602
    %v2142 = vunpack.c.h.b16 %v1602
    %v2143 = vunpack.c.l.b16 %v1603
    %v2144 = vunpack.c.h.b16 %v1603
    %v2145 = vunpack.c.l.b16 %v1604
    %v2146 = vunpack.c.h.b16 %v1604
    %v2147 = vunpack.c.l.b16 %v1605
    %v2148 = vunpack.c.h.b16 %v1605
    %v2149 = vunpack.c.l.b16 %v1606
    %v2150 = vunpack.c.h.b16 %v1606
    %v2151 = vunpack.c.l.b16 %v1607
    %v2152 = vunpack.c.h.b16 %v1607
    %v2153 = vunpack.c.l.b16 %v1608
    %v2154 = vunpack.c.h.b16 %v1608
    %v2155 = vunpack.c.l.b16 %v1609
    %v2156 = vunpack.c.h.b16 %v1609
    %v2157 = vunpack.c.l.b16 %v1610
    %v2158 = vunpack.c.h.b16 %v1610
    %v2159 = vunpack.c.l.b16 %v1611
    %v2160 = vunpack.c.h.b16 %v1611
    %v2161 = vunpack.c.l.b16 %v1612
    %v2162 = vunpack.c.h.b16 %v1612
    %v2163 = vunpack.c.l.b16 %v1613
    %v2164 = vunpack.c.h.b16 %v1613
    %v2165 = vunpack.c.l.b16 %v1614
    %v2166 = vunpack.c.h.b16 %v1614
    %v2167 = vunpack.c.l.b16 %v1615
    %v2168 = vunpack.c.h.b16 %v1615
    %v2169 = vunpack.c.l.b16 %v1616
    %v2170 = vunpack.c.h.b16 %v1616
    %v2171 = vunpack.c.l.b16 %v1617
    %v2172 = vunpack.c.h.b16 %v1617
    %v2173 = vunpack.c.l.b16 %v1618
    %v2174 = vunpack.c.h.b16 %v1618
    %v2175 = vunpack.c.l.b16 %v1619
    %v2176 = vunpack.c.h.b16 %v1619
    %v2177 = vunpack.c.l.b16 %v1620
    %v2178 = vunpack.c.h.b16 %v1620
    %v2179 = vunpack.c.l.b16 %v1621
    %v2180 = vunpack.c.h.b16 %v1621
    %v2181 = vunpack.c.l.b16 %v1622
    %v2182 = vunpack.c.h.b16 %v1622
    %v2183 = vunpack.c.l.b16 %v1623
    %v2184 = vunpack.c.h.b16 %v1623
    %v2185 = vunpack.c.l.b16 %v1624
    %v2186 = vunpack.c.h.b16 %v1624
    %v2187 = vunpack.c.l.b16 %v1625
    %v2188 = vunpack.c.h.b16 %v1625
    %v2189 = vunpack.c.l.b16 %v1626
    %v2190 = vunpack.c.h.b16 %v1626
    %v2191 = vunpack.c.l.b16 %v1627
    %v2192 = vunpack.c.h.b16 %v1627
    %v2193 = vunpack.c.l.b16 %v1628
    %v2194 = vunpack.c.h.b16 %v1628
    %v2195 = vunpack.c.l.b16 %v1629
    %v2196 = vunpack.c.h.b16 %v1629
    %v2197 = vunpack.c.l.b16 %v1630
    %v2198 = vunpack.c.h.b16 %v1630
    %v2199 = vunpack.c.l.b16 %v1631
    %v2200 = vunpack.c.h.b16 %v1631
    %v2201 = vunpack.c.l.b16 %v1632
    %v2202 = vunpack.c.h.b16 %v1632
    %v2203 = vunpack.c.l.b16 %v1633
    %v2204 = vunpack.c.h.b16 %v1633
    %v2205 = vunpack.c.l.b16 %v1634
    %v2206 = vunpack.c.h.b16 %v1634
    %v2207 = vunpack.c.l.b16 %v1635
    %v2208 = vunpack.c.h.b16 %v1635
    %v2209 = vunpack.c.l.b16 %v1636
    %v2210 = vunpack.c.h.b16 %v1636
    %v2211 = vunpack.c.l.b16 %v1637
    %v2212 = vunpack.c.h.b16 %v1637
    %v2213 = vunpack.c.l.b16 %v1638
    %v2214 = vunpack.c.h.b16 %v1638
    %v2215 = vunpack.c.l.b16 %v1639
    %v2216 = vunpack.c.h.b16 %v1639
    %v2217 = vunpack.c.l.b16 %v1640
    %v2218 = vunpack.c.h.b16 %v1640
    %v2219 = vunpack.c.l.b16 %v1641
    %v2220 = vunpack.c.h.b16 %v1641
    %v2221 = vunpack.c.l.b16 %v1642
    %v2222 = vunpack.c.h.b16 %v1642
    %v2223 = vunpack.c.l.b16 %v1643
    %v2224 = vunpack.c.h.b16 %v1643
    %v2225 = vunpack.c.l.b16 %v1644
    %v2226 = vunpack.c.h.b16 %v1644
    %v2227 = vunpack.c.l.b16 %v1645
    %v2228 = vunpack.c.h.b16 %v1645
    %v2229 = vunpack.c.l.b16 %v1646
    %v2230 = vunpack.c.h.b16 %v1646
    %v2231 = vunpack.c.l.b16 %v1647
    %v2232 = vunpack.c.h.b16 %v1647
    %v2233 = vunpack.c.l.b16 %v1648
    %v2234 = vunpack.c.h.b16 %v1648
    %v2235 = vunpack.c.l.b16 %v1649
    %v2236 = vunpack.c.h.b16 %v1649
    %v2237 = vunpack.c.l.b16 %v1650
    %v2238 = vunpack.c.h.b16 %v1650
    %v2239 = vunpack.c.l.b16 %v1651
    %v2240 = vunpack.c.h.b16 %v1651
    %v2241 = vunpack.c.l.b16 %v1652
    %v2242 = vunpack.c.h.b16 %v1652
    %v2243 = vunpack.c.l.b16 %v1653
    %v2244 = vunpack.c.h.b16 %v1653
    %v2245 = vunpack.c.l.b16 %v1654
    %v2246 = vunpack.c.h.b16 %v1654
    %v2247 = vunpack.c.l.b16 %v1655
    %v2248 = vunpack.c.h.b16 %v1655
    %v2249 = vunpack.c.l.b16 %v1656
    %v2250 = vunpack.c.h.b16 %v1656
    %v2251 = vunpack.c.l.b16 %v1657
    %v2252 = vunpack.c.h.b16 %v1657
    %v2253 = vunpack.c.l.b16 %v1658
    %v2254 = vunpack.c.h.b16 %v1658
    %v2255 = vunpack.c.l.b16 %v1659
    %v2256 = vunpack.c.h.b16 %v1659
    %v2257 = vunpack.c.l.b16 %v1660
    %v2258 = vunpack.c.h.b16 %v1660
    %v2259 = vunpack.c.l.b16 %v1661
    %v2260 = vunpack.c.h.b16 %v1661
    %v2261 = vunpack.c.l.b16 %v1662
    %v2262 = vunpack.c.h.b16 %v1662
    %v2263 = vunpack.c.l.b16 %v1663
    %v2264 = vunpack.c.h.b16 %v1663
    %v2265 = vunpack.c.l.b16 %v1664
    %v2266 = vunpack.c.h.b16 %v1664
    %v2267 = vunpack.c.l.b16 %v1665
    %v2268 = vunpack.c.h.b16 %v1665
    %v2269 = vunpack.c.l.b16 %v1666
    %v2270 = vunpack.c.h.b16 %v1666
    %v2271 = vunpack.c.l.b16 %v1667
    %v2272 = vunpack.c.h.b16 %v1667
    %v2273 = vunpack.c.l.b16 %v1668
    %v2274 = vunpack.c.h.b16 %v1668
    %v2275 = vunpack.c.l.b16 %v1669
    %v2276 = vunpack.c.h.b16 %v1669
    %v2277 = vunpack.c.l.b16 %v1670
    %v2278 = vunpack.c.h.b16 %v1670
    %v2279 = vunpack.c.l.b16 %v1671
    %v2280 = vunpack.c.h.b16 %v1671
    %v2281 = vunpack.c.l.b16 %v1672
    %v2282 = vunpack.c.h.b16 %v1672
    %v2283 = vunpack.c.l.b16 %v1673
    %v2284 = vunpack.c.h.b16 %v1673
    %v2285 = vunpack.c.l.b16 %v1674
    %v2286 = vunpack.c.h.b16 %v1674
    %v2287 = vunpack.c.l.b16 %v1675
    %v2288 = vunpack.c.h.b16 %v1675
    %v2289 = vunpack.c.l.b16 %v1676
    %v2290 = vunpack.c.h.b16 %v1676
    %v2291 = vunpack.c.l.b16 %v1677
    %v2292 = vunpack.c.h.b16 %v1677
    %v2293 = vunpack.c.l.b16 %v1678
    %v2294 = vunpack.c.h.b16 %v1678
    %v2295 = vunpack.c.l.b16 %v1679
    %v2296 = vunpack.c.h.b16 %v1679
    %v2297 = vunpack.c.l.b16 %v1680
    %v2298 = vunpack.c.h.b16 %v1680
    %v2299 = vunpack.c.l.b16 %v1681
    %v2300 = vunpack.c.h.b16 %v1681
    %v2301 = vunpack.c.l.b16 %v1682
    %v2302 = vunpack.c.h.b16 %v1682
    %v2303 = vunpack.c.l.b16 %v1683
    %v2304 = vunpack.c.h.b16 %v1683
    %v2305 = vunpack.c.l.b16 %v1684
    %v2306 = vunpack.c.h.b16 %v1684
    %v2307 = vunpack.c.l.b16 %v1685
    %v2308 = vunpack.c.h.b16 %v1685
    %v2309 = vunpack.c.l.b16 %v1686
    %v2310 = vunpack.c.h.b16 %v1686
    %v2311 = vunpack.c.l.b16 %v1687
    %v2312 = vunpack.c.h.b16 %v1687
    %v2313 = vunpack.c.l.b16 %v1688
    %v2314 = vunpack.c.h.b16 %v1688
    %v2315 = vunpack.c.l.b16 %v1689
    %v2316 = vunpack.c.h.b16 %v1689
    %v2317 = vunpack.c.l.b16 %v1690
    %v2318 = vunpack.c.h.b16 %v1690
    %v2319 = vunpack.c.l.b16 %v1691
    %v2320 = vunpack.c.h.b16 %v1691
    %v2321 = vunpack.c.l.b16 %v1692
    %v2322 = vunpack.c.h.b16 %v1692
    %v2323 = vunpack.c.l.b16 %v1693
    %v2324 = vunpack.c.h.b16 %v1693
    %v2325 = vunpack.c.l.b16 %v1694
    %v2326 = vunpack.c.h.b16 %v1694
    %v2327 = vunpack.c.l.b16 %v1695
    %v2328 = vunpack.c.h.b16 %v1695
    %v2329 = vunpack.c.l.b16 %v1696
    %v2330 = vunpack.c.h.b16 %v1696
    %v2331 = vunpack.c.l.b16 %v1697
    %v2332 = vunpack.c.h.b16 %v1697
    %v2333 = vunpack.c.l.b16 %v1698
    %v2334 = vunpack.c.h.b16 %v1698
    %v2335 = vunpack.c.l.b16 %v1699
    %v2336 = vunpack.c.h.b16 %v1699
    %v2337 = vunpack.c.l.b16 %v1700
    %v2338 = vunpack.c.h.b16 %v1700
    %v2339 = vunpack.c.l.b16 %v1701
    %v2340 = vunpack.c.h.b16 %v1701
    %v2341 = vunpack.c.l.b16 %v1702
    %v2342 = vunpack.c.h.b16 %v1702
    %v2343 = vunpack.c.l.b16 %v1703
    %v2344 = vunpack.c.h.b16 %v1703
    %v2345 = vunpack.c.l.b16 %v1704
    %v2346 = vunpack.c.h.b16 %v1704
    %v2347 = vunpack.c.l.b16 %v1705
    %v2348 = vunpack.c.h.b16 %v1705
    %v2349 = vunpack.c.l.b16 %v1706
    %v2350 = vunpack.c.h.b16 %v1706
    %v2351 = vunpack.c.l.b16 %v1707
    %v2352 = vunpack.c.h.b16 %v1707
    %v2353 = vunpack.c.l.b16 %v1708
    %v2354 = vunpack.c.h.b16 %v1708
    %v2355 = vunpack.c.l.b16 %v1709
    %v2356 = vunpack.c.h.b16 %v1709
    %v2357 = vunpack.c.l.b16 %v1710
    %v2358 = vunpack.c.h.b16 %v1710
    %v2359 = vunpack.c.l.b16 %v1711
    %v2360 = vunpack.c.h.b16 %v1711
    %v2361 = vunpack.c.l.b16 %v1712
    %v2362 = vunpack.c.h.b16 %v1712
    %v2363 = vunpack.c.l.b16 %v1713
    %v2364 = vunpack.c.h.b16 %v1713
    %v2365 = vunpack.c.l.b16 %v1714
    %v2366 = vunpack.c.h.b16 %v1714
    %v2367 = vunpack.c.l.b16 %v1715
    %v2368 = vunpack.c.h.b16 %v1715
    %v2369 = vunpack.c.l.b16 %v1716
    %v2370 = vunpack.c.h.b16 %v1716
    %v2371 = vunpack.c.l.b16 %v1717
    %v2372 = vunpack.c.h.b16 %v1717
    %v2373 = vunpack.c.l.b16 %v1718
    %v2374 = vunpack.c.h.b16 %v1718
    %v2375 = vunpack.c.l.b16 %v1719
    %v2376 = vunpack.c.h.b16 %v1719
    %v2377 = vunpack.c.l.b16 %v1720
    %v2378 = vunpack.c.h.b16 %v1720
    %v2379 = vunpack.c.l.b16 %v1721
    %v2380 = vunpack.c.h.b16 %v1721
    %v2381 = vunpack.c.l.b16 %v1722
    %v2382 = vunpack.c.h.b16 %v1722
    %v2383 = vunpack.c.l.b16 %v1723
    %v2384 = vunpack.c.h.b16 %v1723
    %v2385 = vunpack.c.l.b16 %v1724
    %v2386 = vunpack.c.h.b16 %v1724
    %v2387 = vunpack.c.l.b16 %v1725
    %v2388 = vunpack.c.h.b16 %v1725
    %v2389 = vunpack.c.l.b16 %v1726
    %v2390 = vunpack.c.h.b16 %v1726
    %v2391 = vunpack.c.l.b16 %v1727
    %v2392 = vunpack.c.h.b16 %v1727
    %v2393 = vunpack.c.l.b16 %v1728
    %v2394 = vunpack.c.h.b16 %v1728
    %v2395 = vunpack.c.l.b16 %v1729
    %v2396 = vunpack.c.h.b16 %v1729
    %v2397 = vunpack.c.l.b16 %v1730
    %v2398 = vunpack.c.h.b16 %v1730
    %v2399 = vunpack.c.l.b16 %v1731
    %v2400 = vunpack.c.h.b16 %v1731
    %v2401 = vunpack.c.l.b16 %v1732
    %v2402 = vunpack.c.h.b16 %v1732
    %v2403 = vunpack.c.l.b16 %v1733
    %v2404 = vunpack.c.h.b16 %v1733
    %v2405 = vunpack.c.l.b16 %v1734
    %v2406 = vunpack.c.h.b16 %v1734
    %v2407 = vunpack.c.l.b16 %v1735
    %v2408 = vunpack.c.h.b16 %v1735
    %v2409 = vunpack.c.l.b16 %v1736
    %v2410 = vunpack.c.h.b16 %v1736
    %v2411 = vunpack.c.l.b16 %v1737
    %v2412 = vunpack.c.h.b16 %v1737
    %v2413 = vunpack.c.l.b16 %v1738
    %v2414 = vunpack.c.h.b16 %v1738
    %v2415 = vunpack.c.l.b16 %v1739
    %v2416 = vunpack.c.h.b16 %v1739
    %v2417 = vunpack.c.l.b16 %v1740
    %v2418 = vunpack.c.h.b16 %v1740
    %v2419 = vunpack.c.l.b16 %v1741
    %v2420 = vunpack.c.h.b16 %v1741
    %v2421 = vunpack.c.l.b16 %v1742
    %v2422 = vunpack.c.h.b16 %v1742
    %v2423 = vunpack.c.l.b16 %v1743
    %v2424 = vunpack.c.h.b16 %v1743
    %v2425 = vunpack.c.l.b16 %v1744
    %v2426 = vunpack.c.h.b16 %v1744
    %v2427 = vunpack.c.l.b16 %v1745
    %v2428 = vunpack.c.h.b16 %v1745
    %v2429 = vunpack.c.l.b16 %v1746
    %v2430 = vunpack.c.h.b16 %v1746
    %v2431 = vunpack.c.l.b16 %v1747
    %v2432 = vunpack.c.h.b16 %v1747
    %v2433 = vunpack.c.l.b16 %v1748
    %v2434 = vunpack.c.h.b16 %v1748
    %v2435 = vunpack.c.l.b16 %v1749
    %v2436 = vunpack.c.h.b16 %v1749
    %v2437 = vunpack.c.l.b16 %v1750
    %v2438 = vunpack.c.h.b16 %v1750
    %v2439 = vunpack.c.l.b16 %v1751
    %v2440 = vunpack.c.h.b16 %v1751
    %v2441 = vunpack.c.l.b16 %v1752
    %v2442 = vunpack.c.h.b16 %v1752
    %v2443 = vunpack.c.l.b16 %v1753
    %v2444 = vunpack.c.h.b16 %v1753
    %v2445 = vunpack.c.l.b16 %v1754
    %v2446 = vunpack.c.h.b16 %v1754
    %v2447 = vunpack.c.l.b16 %v1755
    %v2448 = vunpack.c.h.b16 %v1755
    %v2449 = vunpack.c.l.b16 %v1756
    %v2450 = vunpack.c.h.b16 %v1756
    %v2451 = vunpack.c.l.b16 %v1757
    %v2452 = vunpack.c.h.b16 %v1757
    %v2453 = vunpack.c.l.b16 %v1758
    %v2454 = vunpack.c.h.b16 %v1758
    %v2455 = vunpack.c.l.b16 %v1759
    %v2456 = vunpack.c.h.b16 %v1759
    %v2457 = vunpack.c.l.b16 %v1760
    %v2458 = vunpack.c.h.b16 %v1760
    %v2459 = vunpack.c.l.b16 %v1761
    %v2460 = vunpack.c.h.b16 %v1761
    %v2461 = vunpack.c.l.b16 %v1762
    %v2462 = vunpack.c.h.b16 %v1762
    %v2463 = vunpack.c.l.b16 %v1763
    %v2464 = vunpack.c.h.b16 %v1763
    %v2465 = vunpack.c.l.b16 %v1764
    %v2466 = vunpack.c.h.b16 %v1764
    %v2467 = vunpack.c.l.b16 %v1765
    %v2468 = vunpack.c.h.b16 %v1765
    %v2469 = vunpack.c.l.b16 %v1766
    %v2470 = vunpack.c.h.b16 %v1766
    %v2471 = vunpack.c.l.b16 %v1767
    %v2472 = vunpack.c.h.b16 %v1767
    %v2473 = vunpack.c.l.b16 %v1768
    %v2474 = vunpack.c.h.b16 %v1768
    %v2475 = vunpack.c.l.b16 %v1769
    %v2476 = vunpack.c.h.b16 %v1769
    %v2477 = vunpack.c.l.b16 %v1770
    %v2478 = vunpack.c.h.b16 %v1770
    %v2479 = vunpack.c.l.b16 %v1771
    %v2480 = vunpack.c.h.b16 %v1771
    %v2481 = vunpack.c.l.b16 %v1772
    %v2482 = vunpack.c.h.b16 %v1772
    %v2483 = vunpack.c.l.b16 %v1773
    %v2484 = vunpack.c.h.b16 %v1773
    %v2485 = vunpack.c.l.b16 %v1774
    %v2486 = vunpack.c.h.b16 %v1774
    %v2487 = vunpack.c.l.b16 %v1775
    %v2488 = vunpack.c.h.b16 %v1775
    %v2489 = vunpack.c.l.b16 %v1776
    %v2490 = vunpack.c.h.b16 %v1776
    %v2491 = vunpack.c.l.b16 %v1777
    %v2492 = vunpack.c.h.b16 %v1777
    %v2493 = vunpack.c.l.b16 %v1778
    %v2494 = vunpack.c.h.b16 %v1778
    %v2495 = vunpack.c.l.b16 %v1779
    %v2496 = vunpack.c.h.b16 %v1779
    %v2497 = vunpack.c.l.b16 %v1780
    %v2498 = vunpack.c.h.b16 %v1780
    %v2499 = vunpack.c.l.b16 %v1781
    %v2500 = vunpack.c.h.b16 %v1781
    %v2501 = vunpack.c.l.b16 %v1782
    %v2502 = vunpack.c.h.b16 %v1782
    %v2503 = vunpack.c.l.b16 %v1783
    %v2504 = vunpack.c.h.b16 %v1783
    %v2505 = vunpack.c.l.b16 %v1784
    %v2506 = vunpack.c.h.b16 %v1784
    %v2507 = vunpack.c.l.b16 %v1785
    %v2508 = vunpack.c.h.b16 %v1785
    %v2509 = vunpack.c.l.b16 %v1786
    %v2510 = vunpack.c.h.b16 %v1786
    %v2511 = vunpack.c.l.b16 %v1787
    %v2512 = vunpack.c.h.b16 %v1787
    %v2513 = vunpack.c.l.b16 %v1788
    %v2514 = vunpack.c.h.b16 %v1788
    %v2515 = vunpack.c.l.b16 %v1789
    %v2516 = vunpack.c.h.b16 %v1789
    %v2517 = vunpack.c.l.b16 %v1790
    %v2518 = vunpack.c.h.b16 %v1790
    %v2519 = vunpack.c.l.b16 %v1791
    %v2520 = vunpack.c.h.b16 %v1791
    %v2521 = vunpack.c.l.b16 %v1792
    %v2522 = vunpack.c.h.b16 %v1792
    %v2523 = vunpack.c.l.b16 %v1793
    %v2524 = vunpack.c.h.b16 %v1793
    %v2525 = vunpack.c.l.b16 %v1794
    %v2526 = vunpack.c.h.b16 %v1794
    %v2527 = vunpack.c.l.b16 %v1795
    %v2528 = vunpack.c.h.b16 %v1795
    %v2529 = vunpack.c.l.b16 %v1796
    %v2530 = vunpack.c.h.b16 %v1796
    %v2531 = vunpack.c.l.b16 %v1797
    %v2532 = vunpack.c.h.b16 %v1797
    %v2533 = vunpack.c.l.b16 %v1798
    %v2534 = vunpack.c.h.b16 %v1798
    %v2535 = vunpack.c.l.b16 %v1799
    %v2536 = vunpack.c.h.b16 %v1799
    %v2537 = vunpack.c.l.b16 %v1800
    %v2538 = vunpack.c.h.b16 %v1800
    %v2539 = vunpack.c.l.b16 %v1801
    %v2540 = vunpack.c.h.b16 %v1801
    %v2541 = vunpack.c.l.b16 %v1802
    %v2542 = vunpack.c.h.b16 %v1802
    %v2543 = vunpack.c.l.b16 %v1803
    %v2544 = vunpack.c.h.b16 %v1803
    %v2545 = vunpack.c.l.b16 %v1804
    %v2546 = vunpack.c.h.b16 %v1804
    %v2547 = vunpack.c.l.b16 %v1805
    %v2548 = vunpack.c.h.b16 %v1805
    %v2549 = vunpack.c.l.b16 %v1806
    %v2550 = vunpack.c.h.b16 %v1806
    %v2551 = vunpack.c.l.b16 %v1807
    %v2552 = vunpack.c.h.b16 %v1807
    %v2553 = vunpack.c.l.b16 %v1808
    %v2554 = vunpack.c.h.b16 %v1808
    %v2555 = vunpack.c.l.b16 %v1809
    %v2556 = vunpack.c.h.b16 %v1809
    %v2557 = vunpack.c.l.b16 %v1810
    %v2558 = vunpack.c.h.b16 %v1810
    %v2559 = vunpack.c.l.b16 %v1811
    %v2560 = vunpack.c.h.b16 %v1811
    %v2561 = vunpack.c.l.b16 %v1812
    %v2562 = vunpack.c.h.b16 %v1812
    %v2563 = vunpack.c.l.b16 %v1813
    %v2564 = vunpack.c.h.b16 %v1813
    %v2565 = vunpack.c.l.b16 %v1814
    %v2566 = vunpack.c.h.b16 %v1814
    %v2567 = vunpack.c.l.b16 %v1815
    %v2568 = vunpack.c.h.b16 %v1815
    %v2569 = vunpack.c.l.b16 %v1816
    %v2570 = vunpack.c.h.b16 %v1816
    %v2571 = vunpack.c.l.b16 %v1817
    %v2572 = vunpack.c.h.b16 %v1817
    %v2573 = vunpack.c.l.b16 %v1818
    %v2574 = vunpack.c.h.b16 %v1818
    %v2575 = vunpack.c.l.b16 %v1819
    %v2576 = vunpack.c.h.b16 %v1819
    %v2577 = vunpack.c.l.b16 %v1820
    %v2578 = vunpack.c.h.b16 %v1820
    %v2579 = vunpack.c.l.b16 %v1821
    %v2580 = vunpack.c.h.b16 %v1821
    %v2581 = vunpack.c.l.b16 %v1822
    %v2582 = vunpack.c.h.b16 %v1822
    %v2583 = vunpack.c.l.b16 %v1823
    %v2584 = vunpack.c.h.b16 %v1823
    %v2585 = vunpack.c.l.b16 %v1824
    %v2586 = vunpack.c.h.b16 %v1824
    %v2587 = vunpack.c.l.b16 %v1825
    %v2588 = vunpack.c.h.b16 %v1825
    %v2589 = vunpack.c.l.b16 %v1826
    %v2590 = vunpack.c.h.b16 %v1826
    %v2591 = vunpack.c.l.b16 %v1827
    %v2592 = vunpack.c.h.b16 %v1827
    %v2593 = vunpack.c.l.b16 %v1828
    %v2594 = vunpack.c.h.b16 %v1828
    %v2595 = vunpack.c.l.b16 %v1829
    %v2596 = vunpack.c.h.b16 %v1829
    %v2597 = vunpack.c.l.b16 %v1830
    %v2598 = vunpack.c.h.b16 %v1830
    %v2599 = vunpack.c.l.b16 %v1831
    %v2600 = vunpack.c.h.b16 %v1831
    %v2601 = vunpack.c.l.b16 %v1832
    %v2602 = vunpack.c.h.b16 %v1832
    %v2603 = vunpack.c.l.b16 %v1833
    %v2604 = vunpack.c.h.b16 %v1833
    %v2605 = vunpack.c.l.b16 %v1834
    %v2606 = vunpack.c.h.b16 %v1834
    %v2607 = vpack.c.b16 %v2111, %v2107
    %v2608 = vpack.c.b16 %v2112, %v2108
    %v2609 = vpack.c.b16 %v2113, %v2109
    %v2610 = vpack.c.b16 %v2114, %v2110
    %v2611 = vpack.c.b16 %v2119, %v2115
    %v2612 = vpack.c.b16 %v2120, %v2116
    %v2613 = vpack.c.b16 %v2121, %v2117
    %v2614 = vpack.c.b16 %v2122, %v2118
    %v2615 = vpack.c.b16 %v2127, %v2123
    %v2616 = vpack.c.b16 %v2128, %v2124
    %v2617 = vpack.c.b16 %v2129, %v2125
    %v2618 = vpack.c.b16 %v2130, %v2126
    %v2619 = vpack.c.b16 %v2135, %v2131
    %v2620 = vpack.c.b16 %v2136, %v2132
    %v2621 = vpack.c.b16 %v2137, %v2133
    %v2622 = vpack.c.b16 %v2138, %v2134
    %v2623 = vpack.c.b16 %v2143, %v2139
    %v2624 = vpack.c.b16 %v2144, %v2140
    %v2625 = vpack.c.b16 %v2145, %v2141
    %v2626 = vpack.c.b16 %v2146, %v2142
    %v2627 = vpack.c.b16 %v2151, %v2147
    %v2628 = vpack.c.b16 %v2152, %v2148
    %v2629 = vpack.c.b16 %v2153, %v2149
    %v2630 = vpack.c.b16 %v2154, %v2150
    %v2631 = vpack.c.b16 %v2159, %v2155
    %v2632 = vpack.c.b16 %v2160, %v2156
    %v2633 = vpack.c.b16 %v2161, %v2157
    %v2634 = vpack.c.b16 %v2162, %v2158
    %v2635 = vpack.c.b16 %v2167, %v2163
    %v2636 = vpack.c.b16 %v2168, %v2164
    %v2637 = vpack.c.b16 %v2169, %v2165
    %v2638 = vpack.c.b16 %v2170, %v2166
    %v2639 = vpack.c.b16 %v2175, %v2171
    %v2640 = vpack.c.b16 %v2176, %v2172
    %v2641 = vpack.c.b16 %v2177, %v2173
    %v2642 = vpack.c.b16 %v2178, %v2174
    %v2643 = vpack.c.b16 %v2183, %v2179
    %v2644 = vpack.c.b16 %v2184, %v2180
    %v2645 = vpack.c.b16 %v2185, %v2181
    %v2646 = vpack.c.b16 %v2186, %v2182
    %v2647 = vpack.c.b16 %v2191, %v2187
    %v2648 = vpack.c.b16 %v2192, %v2188
    %v2649 = vpack.c.b16 %v2193, %v2189
    %v2650 = vpack.c.b16 %v2194, %v2190
    %v2651 = vpack.c.b16 %v2199, %v2195
    %v2652 = vpack.c.b16 %v2200, %v2196
    %v2653 = vpack.c.b16 %v2201, %v2197
    %v2654 = vpack.c.b16 %v2202, %v2198
    %v2655 = vpack.c.b16 %v2207, %v2203
    %v2656 = vpack.c.b16 %v2208, %v2204
    %v2657 = vpack.c.b16 %v2209, %v2205
    %v2658 = vpack.c.b16 %v2210, %v2206
    %v2659 = vpack.c.b16 %v2215, %v2211
    %v2660 = vpack.c.b16 %v2216, %v2212
    %v2661 = vpack.c.b16 %v2217, %v2213
    %v2662 = vpack.c.b16 %v2218, %v2214
    %v2663 = vpack.c.b16 %v2223, %v2219
    %v2664 = vpack.c.b16 %v2224, %v2220
    %v2665 = vpack.c.b16 %v2225, %v2221
    %v2666 = vpack.c.b16 %v2226, %v2222
    %v2667 = vpack.c.b16 %v2231, %v2227
    %v2668 = vpack.c.b16 %v2232, %v2228
    %v2669 = vpack.c.b16 %v2233, %v2229
    %v2670 = vpack.c.b16 %v2234, %v2230
    %v2671 = vpack.c.b16 %v2239, %v2235
    %v2672 = vpack.c.b16 %v2240, %v2236
    %v2673 = vpack.c.b16 %v2241, %v2237
    %v2674 = vpack.c.b16 %v2242, %v2238
    %v2675 = vpack.c.b16 %v2247, %v2243
    %v2676 = vpack.c.b16 %v2248, %v2244
    %v2677 = vpack.c.b16 %v2249, %v2245
    %v2678 = vpack.c.b16 %v2250, %v2246
    %v2679 = vpack.c.b16 %v2255, %v2251
    %v2680 = vpack.c.b16 %v2256, %v2252
    %v2681 = vpack.c.b16 %v2257, %v2253
    %v2682 = vpack.c.b16 %v2258, %v2254
    %v2683 = vpack.c.b16 %v2263, %v2259
    %v2684 = vpack.c.b16 %v2264, %v2260
    %v2685 = vpack.c.b16 %v2265, %v2261
    %v2686 = vpack.c.b16 %v2266, %v2262
    %v2687 = vpack.c.b16 %v2271, %v2267
    %v2688 = vpack.c.b16 %v2272, %v2268
    %v2689 = vpack.c.b16 %v2273, %v2269
    %v2690 = vpack.c.b16 %v2274, %v2270
    %v2691 = vpack.c.b16 %v2279, %v2275
    %v2692 = vpack.c.b16 %v2280, %v2276
    %v2693 = vpack.c.b16 %v2281, %v2277
    %v2694 = vpack.c.b16 %v2282, %v2278
    %v2695 = vpack.c.b16 %v2287, %v2283
    %v2696 = vpack.c.b16 %v2288, %v2284
    %v2697 = vpack.c.b16 %v2289, %v2285
    %v2698 = vpack.c.b16 %v2290, %v2286
    %v2699 = vpack.c.b16 %v2295, %v2291
    %v2700 = vpack.c.b16 %v2296, %v2292
    %v2701 = vpack.c.b16 %v2297, %v2293
    %v2702 = vpack.c.b16 %v2298, %v2294
    %v2703 = vpack.c.b16 %v2303, %v2299
    %v2704 = vpack.c.b16 %v2304, %v2300
    %v2705 = vpack.c.b16 %v2305, %v2301
    %v2706 = vpack.c.b16 %v2306, %v2302
    %v2707 = vpack.c.b16 %v2311, %v2307
    %v2708 = vpack.c.b16 %v2312, %v2308
    %v2709 = vpack.c.b16 %v2313, %v2309
    %v2710 = vpack.c.b16 %v2314, %v2310
    %v2711 = vpack.c.b16 %v2319, %v2315
    %v2712 = vpack.c.b16 %v2320, %v2316
    %v2713 = vpack.c.b16 %v2321, %v2317
    %v2714 = vpack.c.b16 %v2322, %v2318
    %v2715 = vpack.c.b16 %v2327, %v2323
    %v2716 = vpack.c.b16 %v2328, %v2324
    %v2717 = vpack.c.b16 %v2329, %v2325
    %v2718 = vpack.c.b16 %v2330, %v2326
    %v2719 = vpack.c.b16 %v2335, %v2331
    %v2720 = vpack.c.b16 %v2336, %v2332
    %v2721 = vpack.c.b16 %v2337, %v2333
    %v2722 = vpack.c.b16 %v2338, %v2334
    %v2723 = vpack.c.b16 %v2343, %v2339
    %v2724 = vpack.c.b16 %v2344, %v2340
    %v2725 = vpack.c.b16 %v2345, %v2341
    %v2726 = vpack.c.b16 %v2346, %v2342
    %v2727 = vpack.c.b16 %v2351, %v2347
    %v2728 = vpack.c.b16 %v2352, %v2348
    %v2729 = vpack.c.b16 %v2353, %v2349
    %v2730 = vpack.c.b16 %v2354, %v2350
    %v2731 = vpack.c.b16 %v2359, %v2355
    %v2732 = vpack.c.b16 %v2360, %v2356
    %v2733 = vpack.c.b16 %v2361, %v2357
    %v2734 = vpack.c.b16 %v2362, %v2358
    %v2735 = vpack.c.b16 %v2367, %v2363
    %v2736 = vpack.c.b16 %v2368, %v2364
    %v2737 = vpack.c.b16 %v2369, %v2365
    %v2738 = vpack.c.b16 %v2370, %v2366
    %v2739 = vpack.c.b16 %v2375, %v2371
    %v2740 = vpack.c.b16 %v2376, %v2372
    %v2741 = vpack.c.b16 %v2377, %v2373
    %v2742 = vpack.c.b16 %v2378, %v2374
    %v2743 = vpack.c.b16 %v2383, %v2379
    %v2744 = vpack.c.b16 %v2384, %v2380
    %v2745 = vpack.c.b16 %v2385, %v2381
    %v2746 = vpack.c.b16 %v2386, %v2382
    %v2747 = vpack.c.b16 %v2391, %v2387
    %v2748 = vpack.c.b16 %v2392, %v2388
    %v2749 = vpack.c.b16 %v2393, %v2389
    %v2750 = vpack.c.b16 %v2394, %v2390
    %v2751 = vpack.c.b16 %v2399, %v2395
    %v2752 = vpack.c.b16 %v2400, %v2396
    %v2753 = vpack.c.b16 %v2401, %v2397
    %v2754 = vpack.c.b16 %v2402, %v2398
    %v2755 = vpack.c.b16 %v2407, %v2403
    %v2756 = vpack.c.b16 %v2408, %v2404
    %v2757 = vpack.c.b16 %v2409, %v2405
    %v2758 = vpack.c.b16 %v2410, %v2406
    %v2759 = vpack.c.b16 %v2415, %v2411
    %v2760 = vpack.c.b16 %v2416, %v2412
    %v2761 = vpack.c.b16 %v2417, %v2413
    %v2762 = vpack.c.b16 %v2418, %v2414
    %v2763 = vpack.c.b16 %v2423, %v2419
    %v2764 = vpack.c.b16 %v2424, %v2420
    %v2765 = vpack.c.b16 %v2425, %v2421
    %v2766 = vpack.c.b16 %v2426, %v2422
    %v2767 = vpack.c.b16 %v2431, %v2427
    %v2768 = vpack.c.b16 %v2432, %v2428
    %v2769 = vpack.c.b16 %v2433, %v2429
    %v2770 = vpack.c.b16 %v2434, %v2430
    %v2771 = vpack.c.b16 %v2439, %v2435
    %v2772 = vpack.c.b16 %v2440, %v2436
    %v2773 = vpack.c.b16 %v2441, %v2437
    %v2774 = vpack.c.b16 %v2442, %v2438
    %v2775 = vpack.c.b16 %v2447, %v2443
    %v2776 = vpack.c.b16 %v2448, %v2444
    %v2777 = vpack.c.b16 %v2449, %v2445
    %v2778 = vpack.c.b16 %v2450, %v2446
    %v2779 = vpack.c.b16 %v2455, %v2451
    %v2780 = vpack.c.b16 %v2456, %v2452
    %v2781 = vpack.c.b16 %v2457, %v2453
    %v2782 = vpack.c.b16 %v2458, %v2454
    %v2783 = vpack.c.b16 %v2463, %v2459
    %v2784 = vpack.c.b16 %v2464, %v2460
    %v2785 = vpack.c.b16 %v2465, %v2461
    %v2786 = vpack.c.b16 %v2466, %v2462
    %v2787 = vpack.c.b16 %v2471, %v2467
    %v2788 = vpack.c.b16 %v2472, %v2468
    %v2789 = vpack.c.b16 %v2473, %v2469
    %v2790 = vpack.c.b16 %v2474, %v2470
    %v2791 = vpack.c.b16 %v2479, %v2475
    %v2792 = vpack.c.b16 %v2480, %v2476
    %v2793 = vpack.c.b16 %v2481, %v2477
    %v2794 = vpack.c.b16 %v2482, %v2478
    %v2795 = vpack.c.b16 %v2487, %v2483
    %v2796 = vpack.c.b16 %v2488, %v2484
    %v2797 = vpack.c.b16 %v2489, %v2485
    %v2798 = vpack.c.b16 %v2490, %v2486
    %v2799 = vpack.c.b16 %v2495, %v2491
    %v2800 = vpack.c.b16 %v2496, %v2492
    %v2801 = vpack.c.b16 %v2497, %v2493
    %v2802 = vpack.c.b16 %v2498, %v2494
    %v2803 = vpack.c.b16 %v2503, %v2499
    %v2804 = vpack.c.b16 %v2504, %v2500
    %v2805 = vpack.c.b16 %v2505, %v2501
    %v2806 = vpack.c.b16 %v2506, %v2502
    %v2807 = vpack.c.b16 %v2511, %v2507
    %v2808 = vpack.c.b16 %v2512, %v2508
    %v2809 = vpack.c.b16 %v2513, %v2509
    %v2810 = vpack.c.b16 %v2514, %v2510
    %v2811 = vpack.c.b16 %v2519, %v2515
    %v2812 = vpack.c.b16 %v2520, %v2516
    %v2813 = vpack.c.b16 %v2521, %v2517
    %v2814 = vpack.c.b16 %v2522, %v2518
    %v2815 = vpack.c.b16 %v2527, %v2523
    %v2816 = vpack.c.b16 %v2528, %v2524
    %v2817 = vpack.c.b16 %v2529, %v2525
    %v2818 = vpack.c.b16 %v2530, %v2526
    %v2819 = vpack.c.b16 %v2535, %v2531
    %v2820 = vpack.c.b16 %v2536, %v2532
    %v2821 = vpack.c.b16 %v2537, %v2533
    %v2822 = vpack.c.b16 %v2538, %v2534
    %v2823 = vpack.c.b16 %v2543, %v2539
    %v2824 = vpack.c.b16 %v2544, %v2540
    %v2825 = vpack.c.b16 %v2545, %v2541
    %v2826 = vpack.c.b16 %v2546, %v2542
    %v2827 = vpack.c.b16 %v2551, %v2547
    %v2828 = vpack.c.b16 %v2552, %v2548
    %v2829 = vpack.c.b16 %v2553, %v2549
    %v2830 = vpack.c.b16 %v2554, %v2550
    %v2831 = vpack.c.b16 %v2559, %v2555
    %v2832 = vpack.c.b16 %v2560, %v2556
    %v2833 = vpack.c.b16 %v2561, %v2557
    %v2834 = vpack.c.b16 %v2562, %v2558
    %v2835 = vpack.c.b16 %v2567, %v2563
    %v2836 = vpack.c.b16 %v2568, %v2564
    %v2837 = vpack.c.b16 %v2569, %v2565
    %v2838 = vpack.c.b16 %v2570, %v2566
    %v2839 = vpack.c.b16 %v2575, %v2571
    %v2840 = vpack.c.b16 %v2576, %v2572
    %v2841 = vpack.c.b16 %v2577, %v2573
    %v2842 = vpack.c.b16 %v2578, %v2574
    %v2843 = vpack.c.b16 %v2583, %v2579
    %v2844 = vpack.c.b16 %v2584, %v2580
    %v2845 = vpack.c.b16 %v2585, %v2581
    %v2846 = vpack.c.b16 %v2586, %v2582
    %v2847 = vpack.c.b16 %v2591, %v2587
    %v2848 = vpack.c.b16 %v2592, %v2588
    %v2849 = vpack.c.b16 %v2593, %v2589
    %v2850 = vpack.c.b16 %v2594, %v2590
    %v2851 = vpack.c.b16 %v2599, %v2595
    %v2852 = vpack.c.b16 %v2600, %v2596
    %v2853 = vpack.c.b16 %v2601, %v2597
    %v2854 = vpack.c.b16 %v2602, %v2598
    %v2855 = vpack.c.b16 %v2603, %v2603
    %v2856 = vpack.c.b16 %v2604, %v2604
    %v2857 = vpack.c.b16 %v2605, %v2605
    %v2858 = vpack.c.b16 %v2606, %v2606
    %vm3107 = vcmask 850944
    %v3109 = vsel %vm3107, %v145, 0
    %vm3111 = vcmask 1043456
    %v3113 = vsel %vm3111, %v2855, 0
    %v3116 = vsel %vm3111, %v2856, 0
    %v3119 = vsel %vm3111, %v2857, 0
    %v3122 = vsel %vm3111, %v2858, 0
    %3124 = vmatprep.subr.bf16.mxu0 %v2608
    %3125 = vmatpush1.bf16.msra.mxu0 %v2607
    %3126 = vmatprep.subr.bf16.mxu0 %v2612
    %3127 = vmatpush1.bf16.msra.mxu0 %v2611
    %3128 = vmatprep.subr.bf16.mxu0 %v2616
    %3129 = vmatpush1.bf16.msra.mxu0 %v2615
    %3130 = vmatprep.subr.bf16.mxu0 %v2620
    %3131 = vmatpush1.bf16.msra.mxu0 %v2619
    %3132 = vmatprep.subr.bf16.mxu0 %v2624
    %3133 = vmatpush1.bf16.msra.mxu0 %v2623
    %3134 = vmatprep.subr.bf16.mxu0 %v2628
    %3135 = vmatpush1.bf16.msra.mxu0 %v2627
    %3136 = vmatprep.subr.bf16.mxu0 %v2632
    %3137 = vmatpush1.bf16.msra.mxu0 %v2631
    %3138 = vmatprep.subr.bf16.mxu0 %v2636
    %3139 = vmatpush1.bf16.msra.mxu0 %v2635
    %3140 = vmatprep.subr.bf16.mxu0 %v2640
    %3141 = vmatpush1.bf16.msra.mxu0 %v2639
    %3142 = vmatprep.subr.bf16.mxu0 %v2644
    %3143 = vmatpush1.bf16.msra.mxu0 %v2643
    %3144 = vmatprep.subr.bf16.mxu0 %v2648
    %3145 = vmatpush1.bf16.msra.mxu0 %v2647
    %3146 = vmatprep.subr.bf16.mxu0 %v2652
    %3147 = vmatpush1.bf16.msra.mxu0 %v2651
    %3148 = vmatprep.subr.bf16.mxu0 %v2656
    %3149 = vmatpush1.bf16.msra.mxu0 %v2655
    %3150 = vmatprep.subr.bf16.mxu0 %v2660
    %3151 = vmatpush1.bf16.msra.mxu0 %v2659
    %3152 = vmatprep.subr.bf16.mxu0 %v2664
    %3153 = vmatpush1.bf16.msra.mxu0 %v2663
    %3154 = vmatprep.subr.bf16.mxu0 %v2668
    %3155 = vmatpush1.bf16.msra.mxu0 %v2667
    %3156 = vmatprep.mubr.bf16.mxu0 %v139
    %3157 = vmatmul.mubr.bf16.gmra.mrb[0].mxu0 %v138
    %v3158 = vpop.f32.mrb[0].mxu0
    %v3159 = vadd.f32 %v1840, %v3158
    %v3160 = vpop.f32.mrb[0].mxu0
    %v3161 = vadd.f32 %v1844, %v3160
    %v3162 = vpop.f32.mrb[0].mxu0
    %v3163 = vpop.f32.mrb[0].mxu0
    %3164 = vdwg.mxu0
    %3165 = vmatprep.subr.bf16.mxu0 %v2672
    %3166 = vmatpush1.bf16.msra.mxu0 %v2671
    %3167 = vmatprep.subr.bf16.mxu0 %v2676
    %3168 = vmatpush1.bf16.msra.mxu0 %v2675
    %3169 = vmatprep.subr.bf16.mxu0 %v2680
    %3170 = vmatpush1.bf16.msra.mxu0 %v2679
    %3171 = vmatprep.subr.bf16.mxu0 %v2684
    %3172 = vmatpush1.bf16.msra.mxu0 %v2683
    %3173 = vmatprep.subr.bf16.mxu0 %v2688
    %3174 = vmatpush1.bf16.msra.mxu0 %v2687
    %3175 = vmatprep.subr.bf16.mxu0 %v2692
    %3176 = vmatpush1.bf16.msra.mxu0 %v2691
    %3177 = vmatprep.subr.bf16.mxu0 %v2696
    %3178 = vmatpush1.bf16.msra.mxu0 %v2695
    %3179 = vmatprep.subr.bf16.mxu0 %v2700
    %3180 = vmatpush1.bf16.msra.mxu0 %v2699
    %3181 = vmatprep.subr.bf16.mxu0 %v2704
    %3182 = vmatpush1.bf16.msra.mxu0 %v2703
    %3183 = vmatprep.subr.bf16.mxu0 %v2708
    %3184 = vmatpush1.bf16.msra.mxu0 %v2707
    %3185 = vmatprep.subr.bf16.mxu0 %v2712
    %3186 = vmatpush1.bf16.msra.mxu0 %v2711
    %3187 = vmatprep.subr.bf16.mxu0 %v2716
    %3188 = vmatpush1.bf16.msra.mxu0 %v2715
    %3189 = vmatprep.subr.bf16.mxu0 %v2720
    %3190 = vmatpush1.bf16.msra.mxu0 %v2719
    %3191 = vmatprep.subr.bf16.mxu0 %v2724
    %3192 = vmatpush1.bf16.msra.mxu0 %v2723
    %3193 = vmatprep.subr.bf16.mxu0 %v2728
    %3194 = vmatpush1.bf16.msra.mxu0 %v2727
    %3195 = vmatprep.subr.bf16.mxu0 %v2732
    %3196 = vmatpush1.bf16.msra.mxu0 %v2731
    %3197 = vmatprep.mubr.bf16.mxu0 %v141
    %3198 = vmatmul.mubr.bf16.gmra.mrb[0].mxu0 %v140
    %v3199 = vpop.f32.mrb[0].mxu0
    %v3200 = vadd.f32 %v3159, %v3199
    %v3201 = vpop.f32.mrb[0].mxu0
    %v3202 = vadd.f32 %v3161, %v3201
    %v3203 = vpop.f32.mrb[0].mxu0
    %v3204 = vpop.f32.mrb[0].mxu0
    %3205 = vdwg.mxu0
    %3206 = vmatprep.subr.bf16.mxu0 %v2736
    %3207 = vmatpush1.bf16.msra.mxu0 %v2735
    %3208 = vmatprep.subr.bf16.mxu0 %v2740
    %3209 = vmatpush1.bf16.msra.mxu0 %v2739
    %3210 = vmatprep.subr.bf16.mxu0 %v2744
    %3211 = vmatpush1.bf16.msra.mxu0 %v2743
    %3212 = vmatprep.subr.bf16.mxu0 %v2748
    %3213 = vmatpush1.bf16.msra.mxu0 %v2747
    %3214 = vmatprep.subr.bf16.mxu0 %v2752
    %3215 = vmatpush1.bf16.msra.mxu0 %v2751
    %3216 = vmatprep.subr.bf16.mxu0 %v2756
    %3217 = vmatpush1.bf16.msra.mxu0 %v2755
    %3218 = vmatprep.subr.bf16.mxu0 %v2760
    %3219 = vmatpush1.bf16.msra.mxu0 %v2759
    %3220 = vmatprep.subr.bf16.mxu0 %v2764
    %3221 = vmatpush1.bf16.msra.mxu0 %v2763
    %3222 = vmatprep.subr.bf16.mxu0 %v2768
    %3223 = vmatpush1.bf16.msra.mxu0 %v2767
    %3224 = vmatprep.subr.bf16.mxu0 %v2772
    %3225 = vmatpush1.bf16.msra.mxu0 %v2771
    %3226 = vmatprep.subr.bf16.mxu0 %v2776
    %3227 = vmatpush1.bf16.msra.mxu0 %v2775
    %3228 = vmatprep.subr.bf16.mxu0 %v2780
    %3229 = vmatpush1.bf16.msra.mxu0 %v2779
    %3230 = vmatprep.subr.bf16.mxu0 %v2784
    %3231 = vmatpush1.bf16.msra.mxu0 %v2783
    %3232 = vmatprep.subr.bf16.mxu0 %v2788
    %3233 = vmatpush1.bf16.msra.mxu0 %v2787
    %3234 = vmatprep.subr.bf16.mxu0 %v2792
    %3235 = vmatpush1.bf16.msra.mxu0 %v2791
    %3236 = vmatprep.subr.bf16.mxu0 %v2796
    %3237 = vmatpush1.bf16.msra.mxu0 %v2795
    %3238 = vmatprep.mubr.bf16.mxu0 %v143
    %3239 = vmatmul.mubr.bf16.gmra.mrb[0].mxu0 %v142
    %v3240 = vpop.f32.mrb[0].mxu0
    %v3241 = vadd.f32 %v3200, %v3240
    %v3242 = vpop.f32.mrb[0].mxu0
    %v3243 = vadd.f32 %v3202, %v3242
    %v3244 = vpop.f32.mrb[0].mxu0
    %v3245 = vpop.f32.mrb[0].mxu0
    %3246 = vdwg.mxu0
    %3247 = vmatprep.subr.bf16.mxu0 %v2800
    %3248 = vmatpush1.bf16.msra.mxu0 %v2799
    %3249 = vmatprep.subr.bf16.mxu0 %v2804
    %3250 = vmatpush1.bf16.msra.mxu0 %v2803
    %3251 = vmatprep.subr.bf16.mxu0 %v2808
    %3252 = vmatpush1.bf16.msra.mxu0 %v2807
    %3253 = vmatprep.subr.bf16.mxu0 %v2812
    %3254 = vmatpush1.bf16.msra.mxu0 %v2811
    %3255 = vmatprep.subr.bf16.mxu0 %v2816
    %3256 = vmatpush1.bf16.msra.mxu0 %v2815
    %3257 = vmatprep.subr.bf16.mxu0 %v2820
    %3258 = vmatpush1.bf16.msra.mxu0 %v2819
    %3259 = vmatprep.subr.bf16.mxu0 %v2824
    %3260 = vmatpush1.bf16.msra.mxu0 %v2823
    %3261 = vmatprep.subr.bf16.mxu0 %v2828
    %3262 = vmatpush1.bf16.msra.mxu0 %v2827
    %3263 = vmatprep.subr.bf16.mxu0 %v2832
    %3264 = vmatpush1.bf16.msra.mxu0 %v2831
    %3265 = vmatprep.subr.bf16.mxu0 %v2836
    %3266 = vmatpush1.bf16.msra.mxu0 %v2835
    %3267 = vmatprep.subr.bf16.mxu0 %v2840
    %3268 = vmatpush1.bf16.msra.mxu0 %v2839
    %3269 = vmatprep.subr.bf16.mxu0 %v2844
    %3270 = vmatpush1.bf16.msra.mxu0 %v2843
    %3271 = vmatprep.subr.bf16.mxu0 %v2848
    %3272 = vmatpush1.bf16.msra.mxu0 %v2847
    %3273 = vmatprep.subr.bf16.mxu0 %v2852
    %3274 = vmatpush1.bf16.msra.mxu0 %v2851
    %3275 = vmatprep.subr.bf16.mxu0 %v3116
    %3276 = vmatpush1.bf16.msra.mxu0 %v3113
    %3277 = vmatprep.subr.bf16.mxu0 0
    %3278 = vmatpush1.bf16.msra.mxu0 0
    %3279 = vmatprep.mubr.bf16.mxu0 %v3109
    %3280 = vmatmul.mubr.bf16.gmra.mrb[0].mxu0 %v144
    %v3281 = vpop.f32.mrb[0].mxu0
    %v3282 = vadd.f32 %v3241, %v3281
    %v3283 = vpop.f32.mrb[0].mxu0
    %v3284 = vadd.f32 %v3243, %v3283
    %v3285 = vpop.f32.mrb[0].mxu0
    %v3286 = vpop.f32.mrb[0].mxu0
    %3287 = vdwg.mxu0
    %3288 = vmatprep.subr.bf16.mxu0 %v2610
    %3289 = vmatpush1.bf16.msra.mxu0 %v2609
    %3290 = vmatprep.subr.bf16.mxu0 %v2614
    %3291 = vmatpush1.bf16.msra.mxu0 %v2613
    %3292 = vmatprep.subr.bf16.mxu0 %v2618
    %3293 = vmatpush1.bf16.msra.mxu0 %v2617
    %3294 = vmatprep.subr.bf16.mxu0 %v2622
    %3295 = vmatpush1.bf16.msra.mxu0 %v2621
    %3296 = vmatprep.subr.bf16.mxu0 %v2626
    %3297 = vmatpush1.bf16.msra.mxu0 %v2625
    %3298 = vmatprep.subr.bf16.mxu0 %v2630
    %3299 = vmatpush1.bf16.msra.mxu0 %v2629
    %3300 = vmatprep.subr.bf16.mxu0 %v2634
    %3301 = vmatpush1.bf16.msra.mxu0 %v2633
    %3302 = vmatprep.subr.bf16.mxu0 %v2638
    %3303 = vmatpush1.bf16.msra.mxu0 %v2637
    %3304 = vmatprep.subr.bf16.mxu0 %v2642
    %3305 = vmatpush1.bf16.msra.mxu0 %v2641
    %3306 = vmatprep.subr.bf16.mxu0 %v2646
    %3307 = vmatpush1.bf16.msra.mxu0 %v2645
    %3308 = vmatprep.subr.bf16.mxu0 %v2650
    %3309 = vmatpush1.bf16.msra.mxu0 %v2649
    %3310 = vmatprep.subr.bf16.mxu0 %v2654
    %3311 = vmatpush1.bf16.msra.mxu0 %v2653
    %3312 = vmatprep.subr.bf16.mxu0 %v2658
    %3313 = vmatpush1.bf16.msra.mxu0 %v2657
    %3314 = vmatprep.subr.bf16.mxu0 %v2662
    %3315 = vmatpush1.bf16.msra.mxu0 %v2661
    %3316 = vmatprep.subr.bf16.mxu0 %v2666
    %3317 = vmatpush1.bf16.msra.mxu0 %v2665
    %3318 = vmatprep.subr.bf16.mxu0 %v2670
    %3319 = vmatpush1.bf16.msra.mxu0 %v2669
    %3320 = vmatprep.mubr.bf16.mxu0 %v139
    %3321 = vmatmul.mubr.bf16.gmra.mrb[0].mxu0 %v138
    %v3322 = vpop.f32.mrb[0].mxu0
    %v3323 = vadd.f32 %v1848, %v3322
    %v3324 = vpop.f32.mrb[0].mxu0
    %v3325 = vadd.f32 %v1852, %v3324
    %v3326 = vpop.f32.mrb[0].mxu0
    %v3327 = vpop.f32.mrb[0].mxu0
    %3328 = vdwg.mxu0
    %3329 = vmatprep.subr.bf16.mxu0 %v2674
    %3330 = vmatpush1.bf16.msra.mxu0 %v2673
    %3331 = vmatprep.subr.bf16.mxu0 %v2678
    %3332 = vmatpush1.bf16.msra.mxu0 %v2677
    %3333 = vmatprep.subr.bf16.mxu0 %v2682
    %3334 = vmatpush1.bf16.msra.mxu0 %v2681
    %3335 = vmatprep.subr.bf16.mxu0 %v2686
    %3336 = vmatpush1.bf16.msra.mxu0 %v2685
    %3337 = vmatprep.subr.bf16.mxu0 %v2690
    %3338 = vmatpush1.bf16.msra.mxu0 %v2689
    %3339 = vmatprep.subr.bf16.mxu0 %v2694
    %3340 = vmatpush1.bf16.msra.mxu0 %v2693
    %3341 = vmatprep.subr.bf16.mxu0 %v2698
    %3342 = vmatpush1.bf16.msra.mxu0 %v2697
    %3343 = vmatprep.subr.bf16.mxu0 %v2702
    %3344 = vmatpush1.bf16.msra.mxu0 %v2701
    %3345 = vmatprep.subr.bf16.mxu0 %v2706
    %3346 = vmatpush1.bf16.msra.mxu0 %v2705
    %3347 = vmatprep.subr.bf16.mxu0 %v2710
    %3348 = vmatpush1.bf16.msra.mxu0 %v2709
    %3349 = vmatprep.subr.bf16.mxu0 %v2714
    %3350 = vmatpush1.bf16.msra.mxu0 %v2713
    %3351 = vmatprep.subr.bf16.mxu0 %v2718
    %3352 = vmatpush1.bf16.msra.mxu0 %v2717
    %3353 = vmatprep.subr.bf16.mxu0 %v2722
    %3354 = vmatpush1.bf16.msra.mxu0 %v2721
    %3355 = vmatprep.subr.bf16.mxu0 %v2726
    %3356 = vmatpush1.bf16.msra.mxu0 %v2725
    %3357 = vmatprep.subr.bf16.mxu0 %v2730
    %3358 = vmatpush1.bf16.msra.mxu0 %v2729
    %3359 = vmatprep.subr.bf16.mxu0 %v2734
    %3360 = vmatpush1.bf16.msra.mxu0 %v2733
    %3361 = vmatprep.mubr.bf16.mxu0 %v141
    %3362 = vmatmul.mubr.bf16.gmra.mrb[0].mxu0 %v140
    %v3363 = vpop.f32.mrb[0].mxu0
    %v3364 = vadd.f32 %v3323, %v3363
    %v3365 = vpop.f32.mrb[0].mxu0
    %v3366 = vadd.f32 %v3325, %v3365
    %v3367 = vpop.f32.mrb[0].mxu0
    %v3368 = vpop.f32.mrb[0].mxu0
    %3369 = vdwg.mxu0
    %3370 = vmatprep.subr.bf16.mxu0 %v2738
    %3371 = vmatpush1.bf16.msra.mxu0 %v2737
    %3372 = vmatprep.subr.bf16.mxu0 %v2742
    %3373 = vmatpush1.bf16.msra.mxu0 %v2741
    %3374 = vmatprep.subr.bf16.mxu0 %v2746
    %3375 = vmatpush1.bf16.msra.mxu0 %v2745
    %3376 = vmatprep.subr.bf16.mxu0 %v2750
    %3377 = vmatpush1.bf16.msra.mxu0 %v2749
    %3378 = vmatprep.subr.bf16.mxu0 %v2754
    %3379 = vmatpush1.bf16.msra.mxu0 %v2753
    %3380 = vmatprep.subr.bf16.mxu0 %v2758
    %3381 = vmatpush1.bf16.msra.mxu0 %v2757
    %3382 = vmatprep.subr.bf16.mxu0 %v2762
    %3383 = vmatpush1.bf16.msra.mxu0 %v2761
    %3384 = vmatprep.subr.bf16.mxu0 %v2766
    %3385 = vmatpush1.bf16.msra.mxu0 %v2765
    %3386 = vmatprep.subr.bf16.mxu0 %v2770
    %3387 = vmatpush1.bf16.msra.mxu0 %v2769
    %3388 = vmatprep.subr.bf16.mxu0 %v2774
    %3389 = vmatpush1.bf16.msra.mxu0 %v2773
    %3390 = vmatprep.subr.bf16.mxu0 %v2778
    %3391 = vmatpush1.bf16.msra.mxu0 %v2777
    %3392 = vmatprep.subr.bf16.mxu0 %v2782
    %3393 = vmatpush1.bf16.msra.mxu0 %v2781
    %3394 = vmatprep.subr.bf16.mxu0 %v2786
    %3395 = vmatpush1.bf16.msra.mxu0 %v2785
    %3396 = vmatprep.subr.bf16.mxu0 %v2790
    %3397 = vmatpush1.bf16.msra.mxu0 %v2789
    %3398 = vmatprep.subr.bf16.mxu0 %v2794
    %3399 = vmatpush1.bf16.msra.mxu0 %v2793
    %3400 = vmatprep.subr.bf16.mxu0 %v2798
    %3401 = vmatpush1.bf16.msra.mxu0 %v2797
    %3402 = vmatprep.mubr.bf16.mxu0 %v143
    %3403 = vmatmul.mubr.bf16.gmra.mrb[0].mxu0 %v142
    %v3404 = vpop.f32.mrb[0].mxu0
    %v3405 = vadd.f32 %v3364, %v3404
    %v3406 = vpop.f32.mrb[0].mxu0
    %v3407 = vadd.f32 %v3366, %v3406
    %v3408 = vpop.f32.mrb[0].mxu0
    %v3409 = vpop.f32.mrb[0].mxu0
    %3410 = vdwg.mxu0
    %3411 = vmatprep.subr.bf16.mxu0 %v2802
    %3412 = vmatpush1.bf16.msra.mxu0 %v2801
    %3413 = vmatprep.subr.bf16.mxu0 %v2806
    %3414 = vmatpush1.bf16.msra.mxu0 %v2805
    %3415 = vmatprep.subr.bf16.mxu0 %v2810
    %3416 = vmatpush1.bf16.msra.mxu0 %v2809
    %3417 = vmatprep.subr.bf16.mxu0 %v2814
    %3418 = vmatpush1.bf16.msra.mxu0 %v2813
    %3419 = vmatprep.subr.bf16.mxu0 %v2818
    %3420 = vmatpush1.bf16.msra.mxu0 %v2817
    %3421 = vmatprep.subr.bf16.mxu0 %v2822
    %3422 = vmatpush1.bf16.msra.mxu0 %v2821
    %3423 = vmatprep.subr.bf16.mxu0 %v2826
    %3424 = vmatpush1.bf16.msra.mxu0 %v2825
    %3425 = vmatprep.subr.bf16.mxu0 %v2830
    %3426 = vmatpush1.bf16.msra.mxu0 %v2829
    %3427 = vmatprep.subr.bf16.mxu0 %v2834
    %3428 = vmatpush1.bf16.msra.mxu0 %v2833
    %3429 = vmatprep.subr.bf16.mxu0 %v2838
    %3430 = vmatpush1.bf16.msra.mxu0 %v2837
    %3431 = vmatprep.subr.bf16.mxu0 %v2842
    %3432 = vmatpush1.bf16.msra.mxu0 %v2841
    %3433 = vmatprep.subr.bf16.mxu0 %v2846
    %3434 = vmatpush1.bf16.msra.mxu0 %v2845
    %3435 = vmatprep.subr.bf16.mxu0 %v2850
    %3436 = vmatpush1.bf16.msra.mxu0 %v2849
    %3437 = vmatprep.subr.bf16.mxu0 %v2854
    %3438 = vmatpush1.bf16.msra.mxu0 %v2853
    %3439 = vmatprep.subr.bf16.mxu0 %v3122
    %3440 = vmatpush1.bf16.msra.mxu0 %v3119
    %3441 = vmatprep.subr.bf16.mxu0 0
    %3442 = vmatpush1.bf16.msra.mxu0 0
    %3443 = vmatprep.mubr.bf16.mxu0 %v3109
    %3444 = vmatmul.mubr.bf16.gmra.mrb[0].mxu0 %v144
    %v3445 = vpop.f32.mrb[0].mxu0
    %v3446 = vadd.f32 %v3405, %v3445
    %v3447 = vpop.f32.mrb[0].mxu0
    %v3448 = vadd.f32 %v3407, %v3447
    %v3449 = vpop.f32.mrb[0].mxu0
    %v3450 = vpop.f32.mrb[0].mxu0
    %3451 = vdwg.mxu0
    %v3452 = vmul.f32 %v3282, %v3282
    %v3453 = vmul.f32 %v3284, %v3284
    %v3454 = vmul.f32 %v3446, %v3446
    %v3455 = vmul.f32 %v3448, %v3448
    %v3456 = vadd.f32 %v3452, %v3453
    %v3457 = vadd.f32 %v3456, %v3454
    %v3458 = vadd.f32 %v3457, %v3455
    %3459 = vadd.xlane.f32.xlu0 %v3458
    %v3460 = vpop.xlane.xlu0 %3459
    %v3461 = vmax.f32 %v3460, 1e-24
    %v3462 = vrsqrt.pop %v3461
    %v3463 = vmul.f32 %v3282, %v3462
    %v3464 = vmul.f32 %v3284, %v3462
    %v3465 = vmul.f32 %v3446, %v3462
    %v3466 = vmul.f32 %v3448, %v3462
    %3467 = vst [vmem:[#allocation15] sm:$0xff] %v3463
    %3468 = vst [vmem:[#allocation15 + $0x8] sm:$0xff] %v3464
    %3469 = vst [vmem:[#allocation15 + $0x10] sm:$0xff] %v3465
    %3470 = vst [vmem:[#allocation15 + $0x18] sm:$0xff] %v3466
    %v3471 = vpack.c.bf16 %v1577, %v1577
    %v3472 = vpack.c.bf16 %v1578, %v1578
    %v3473 = vpack.c.bf16 %v1579, %v1579
    %v3474 = vpack.c.bf16 %v1580, %v1580
    %v3475 = vpack.c.bf16 %v3463, %v3463
    %v3476 = vpack.c.bf16 %v3464, %v3464
    %v3477 = vpack.c.bf16 %v3465, %v3465
    %v3478 = vpack.c.bf16 %v3466, %v3466
    %v3479 = vld [vmem:[#allocation11] sm:$0xf]
    %v3480 = vld [vmem:[#allocation11 + $0x4] sm:$0xf]
    %v3481 = vld [vmem:[#allocation11 + $0x8] sm:$0xf]
    %v3482 = vld [vmem:[#allocation11 + $0xc] sm:$0xf]
    %v3483 = vld [vmem:[#allocation11 + $0x10] sm:$0xf]
    %v3484 = vld [vmem:[#allocation11 + $0x14] sm:$0xf]
    %v3485 = vld [vmem:[#allocation11 + $0x18] sm:$0xf]
    %v3486 = vld [vmem:[#allocation11 + $0x1c] sm:$0xf]
    %v3487 = vld [vmem:[#allocation11 + $0x20] sm:$0xf]
    %v3488 = vld [vmem:[#allocation11 + $0x24] sm:$0xf]
    %v3489 = vld [vmem:[#allocation11 + $0x28] sm:$0xf]
    %v3490 = vld [vmem:[#allocation11 + $0x2c] sm:$0xf]
    %v3491 = vld [vmem:[#allocation11 + $0x30] sm:$0xf]
    %v3492 = vld [vmem:[#allocation11 + $0x34] sm:$0xf]
    %v3493 = vld [vmem:[#allocation11 + $0x38] sm:$0xf]
    %v3494 = vld [vmem:[#allocation11 + $0x3c] sm:$0xf]
    %v3495 = vld [vmem:[#allocation11 + $0x40] sm:$0xf]
    %v3496 = vld [vmem:[#allocation11 + $0x44] sm:$0xf]
    %v3497 = vld [vmem:[#allocation11 + $0x48] sm:$0xf]
    %v3498 = vld [vmem:[#allocation11 + $0x4c] sm:$0xf]
    %v3499 = vld [vmem:[#allocation11 + $0x50] sm:$0xf]
    %v3500 = vld [vmem:[#allocation11 + $0x54] sm:$0xf]
    %v3501 = vld [vmem:[#allocation11 + $0x58] sm:$0xf]
    %v3502 = vld [vmem:[#allocation11 + $0x5c] sm:$0xf]
    %v3503 = vld [vmem:[#allocation11 + $0x60] sm:$0xf]
    %v3504 = vld [vmem:[#allocation11 + $0x64] sm:$0xf]
    %v3505 = vld [vmem:[#allocation11 + $0x68] sm:$0xf]
    %v3506 = vld [vmem:[#allocation11 + $0x6c] sm:$0xf]
    %v3507 = vld [vmem:[#allocation11 + $0x70] sm:$0xf]
    %v3508 = vld [vmem:[#allocation11 + $0x74] sm:$0xf]
    %v3509 = vld [vmem:[#allocation11 + $0x78] sm:$0xf]
    %v3510 = vld [vmem:[#allocation11 + $0x7c] sm:$0xf]
    %v3511 = vld [vmem:[#allocation11 + $0x80] sm:$0xf]
    %v3512 = vld [vmem:[#allocation11 + $0x84] sm:$0xf]
    %v3513 = vld [vmem:[#allocation11 + $0x88] sm:$0xf]
    %v3514 = vld [vmem:[#allocation11 + $0x8c] sm:$0xf]
    %v3515 = vld [vmem:[#allocation11 + $0x90] sm:$0xf]
    %v3516 = vld [vmem:[#allocation11 + $0x94] sm:$0xf]
    %v3517 = vld [vmem:[#allocation11 + $0x98] sm:$0xf]
    %v3518 = vld [vmem:[#allocation11 + $0x9c] sm:$0xf]
    %v3519 = vld [vmem:[#allocation11 + $0xa0] sm:$0xf]
    %v3520 = vld [vmem:[#allocation11 + $0xa4] sm:$0xf]
    %v3521 = vld [vmem:[#allocation11 + $0xa8] sm:$0xf]
    %v3522 = vld [vmem:[#allocation11 + $0xac] sm:$0xf]
    %v3523 = vld [vmem:[#allocation11 + $0xb0] sm:$0xf]
    %v3524 = vld [vmem:[#allocation11 + $0xb4] sm:$0xf]
    %v3525 = vld [vmem:[#allocation11 + $0xb8] sm:$0xf]
    %v3526 = vld [vmem:[#allocation11 + $0xbc] sm:$0xf]
    %v3527 = vld [vmem:[#allocation11 + $0xc0] sm:$0xf]
    %v3528 = vld [vmem:[#allocation11 + $0xc4] sm:$0xf]
    %v3529 = vld [vmem:[#allocation11 + $0xc8] sm:$0xf]
    %v3530 = vld [vmem:[#allocation11 + $0xcc] sm:$0xf]
    %v3531 = vld [vmem:[#allocation11 + $0xd0] sm:$0xf]
    %v3532 = vld [vmem:[#allocation11 + $0xd4] sm:$0xf]
    %v3533 = vld [vmem:[#allocation11 + $0xd8] sm:$0xf]
    %v3534 = vld [vmem:[#allocation11 + $0xdc] sm:$0xf]
    %v3535 = vld [vmem:[#allocation11 + $0xe0] sm:$0xf]
    %v3536 = vld [vmem:[#allocation11 + $0xe4] sm:$0xf]
    %v3537 = vld [vmem:[#allocation11 + $0xe8] sm:$0xf]
    %v3538 = vld [vmem:[#allocation11 + $0xec] sm:$0xf]
    %v3539 = vld [vmem:[#allocation11 + $0xf0] sm:$0xf]
    %v3540 = vld [vmem:[#allocation11 + $0xf4] sm:$0xf]
    %v3541 = vld [vmem:[#allocation11 + $0xf8] sm:$0xf]
    %v3542 = vld [vmem:[#allocation11 + $0xfc] sm:$0xf]
    %v3543 = vld [vmem:[#allocation12] sm:$0xf]
    %v3544 = vld [vmem:[#allocation12 + $0x4] sm:$0xf]
    %v3545 = vld [vmem:[#allocation12 + $0x8] sm:$0xf]
    %v3546 = vld [vmem:[#allocation12 + $0xc] sm:$0xf]
    %v3547 = vld [vmem:[#allocation12 + $0x10] sm:$0xf]
    %v3548 = vld [vmem:[#allocation12 + $0x14] sm:$0xf]
    %v3549 = vld [vmem:[#allocation12 + $0x18] sm:$0xf]
    %v3550 = vld [vmem:[#allocation12 + $0x1c] sm:$0xf]
    %v3551 = vld [vmem:[#allocation12 + $0x20] sm:$0xf]
    %v3552 = vld [vmem:[#allocation12 + $0x24] sm:$0xf]
    %v3553 = vld [vmem:[#allocation12 + $0x28] sm:$0xf]
    %v3554 = vld [vmem:[#allocation12 + $0x2c] sm:$0xf]
    %v3555 = vld [vmem:[#allocation12 + $0x30] sm:$0xf]
    %v3556 = vld [vmem:[#allocation12 + $0x34] sm:$0xf]
    %v3557 = vld [vmem:[#allocation12 + $0x38] sm:$0xf]
    %v3558 = vld [vmem:[#allocation12 + $0x3c] sm:$0xf]
    %v3559 = vld [vmem:[#allocation12 + $0x40] sm:$0xf]
    %v3560 = vld [vmem:[#allocation12 + $0x44] sm:$0xf]
    %v3561 = vld [vmem:[#allocation12 + $0x48] sm:$0xf]
    %v3562 = vld [vmem:[#allocation12 + $0x4c] sm:$0xf]
    %v3563 = vld [vmem:[#allocation12 + $0x50] sm:$0xf]
    %v3564 = vld [vmem:[#allocation12 + $0x54] sm:$0xf]
    %v3565 = vld [vmem:[#allocation12 + $0x58] sm:$0xf]
    %v3566 = vld [vmem:[#allocation12 + $0x5c] sm:$0xf]
    %v3567 = vld [vmem:[#allocation12 + $0x60] sm:$0xf]
    %v3568 = vld [vmem:[#allocation12 + $0x64] sm:$0xf]
    %v3569 = vld [vmem:[#allocation12 + $0x68] sm:$0xf]
    %v3570 = vld [vmem:[#allocation12 + $0x6c] sm:$0xf]
    %v3571 = vld [vmem:[#allocation12 + $0x70] sm:$0xf]
    %v3572 = vld [vmem:[#allocation12 + $0x74] sm:$0xf]
    %v3573 = vld [vmem:[#allocation12 + $0x78] sm:$0xf]
    %v3574 = vld [vmem:[#allocation12 + $0x7c] sm:$0xf]
    %v3575 = vld [vmem:[#allocation12 + $0x80] sm:$0xf]
    %v3576 = vld [vmem:[#allocation12 + $0x84] sm:$0xf]
    %v3577 = vld [vmem:[#allocation12 + $0x88] sm:$0xf]
    %v3578 = vld [vmem:[#allocation12 + $0x8c] sm:$0xf]
    %v3579 = vld [vmem:[#allocation12 + $0x90] sm:$0xf]
    %v3580 = vld [vmem:[#allocation12 + $0x94] sm:$0xf]
    %v3581 = vld [vmem:[#allocation12 + $0x98] sm:$0xf]
    %v3582 = vld [vmem:[#allocation12 + $0x9c] sm:$0xf]
    %v3583 = vld [vmem:[#allocation12 + $0xa0] sm:$0xf]
    %v3584 = vld [vmem:[#allocation12 + $0xa4] sm:$0xf]
    %v3585 = vld [vmem:[#allocation12 + $0xa8] sm:$0xf]
    %v3586 = vld [vmem:[#allocation12 + $0xac] sm:$0xf]
    %v3587 = vld [vmem:[#allocation12 + $0xb0] sm:$0xf]
    %v3588 = vld [vmem:[#allocation12 + $0xb4] sm:$0xf]
    %v3589 = vld [vmem:[#allocation12 + $0xb8] sm:$0xf]
    %v3590 = vld [vmem:[#allocation12 + $0xbc] sm:$0xf]
    %v3591 = vld [vmem:[#allocation12 + $0xc0] sm:$0xf]
    %v3592 = vld [vmem:[#allocation12 + $0xc4] sm:$0xf]
    %v3593 = vld [vmem:[#allocation12 + $0xc8] sm:$0xf]
    %v3594 = vld [vmem:[#allocation12 + $0xcc] sm:$0xf]
    %v3595 = vld [vmem:[#allocation12 + $0xd0] sm:$0xf]
    %v3596 = vld [vmem:[#allocation12 + $0xd4] sm:$0xf]
    %v3597 = vld [vmem:[#allocation12 + $0xd8] sm:$0xf]
    %v3598 = vld [vmem:[#allocation12 + $0xdc] sm:$0xf]
    %v3599 = vld [vmem:[#allocation12 + $0xe0] sm:$0xf]
    %v3600 = vld [vmem:[#allocation12 + $0xe4] sm:$0xf]
    %v3601 = vld [vmem:[#allocation12 + $0xe8] sm:$0xf]
    %v3602 = vld [vmem:[#allocation12 + $0xec] sm:$0xf]
    %v3603 = vld [vmem:[#allocation12 + $0xf0] sm:$0xf]
    %v3604 = vld [vmem:[#allocation12 + $0xf4] sm:$0xf]
    %v3605 = vld [vmem:[#allocation12 + $0xf8] sm:$0xf]
    %v3606 = vld [vmem:[#allocation12 + $0xfc] sm:$0xf]
    %v3671 = vunpack.c.l.b16 %v3543
    %v3672 = vunpack.c.l.b16 %v3544
    %v3673 = vunpack.c.l.b16 %v3545
    %v3674 = vunpack.c.l.b16 %v3546
    %v3675 = vunpack.c.l.b16 %v3547
    %v3676 = vunpack.c.l.b16 %v3548
    %v3677 = vunpack.c.l.b16 %v3549
    %v3678 = vunpack.c.l.b16 %v3550
    %v3679 = vunpack.c.l.b16 %v3551
    %v3680 = vunpack.c.l.b16 %v3552
    %v3681 = vunpack.c.l.b16 %v3553
    %v3682 = vunpack.c.l.b16 %v3554
    %v3683 = vunpack.c.l.b16 %v3555
    %v3684 = vunpack.c.l.b16 %v3556
    %v3685 = vunpack.c.l.b16 %v3557
    %v3686 = vunpack.c.l.b16 %v3558
    %v3687 = vunpack.c.l.b16 %v3559
    %v3688 = vunpack.c.l.b16 %v3560
    %v3689 = vunpack.c.l.b16 %v3561
    %v3690 = vunpack.c.l.b16 %v3562
    %v3691 = vunpack.c.l.b16 %v3563
    %v3692 = vunpack.c.l.b16 %v3564
    %v3693 = vunpack.c.l.b16 %v3565
    %v3694 = vunpack.c.l.b16 %v3566
    %v3695 = vunpack.c.l.b16 %v3567
    %v3696 = vunpack.c.l.b16 %v3568
    %v3697 = vunpack.c.l.b16 %v3569
    %v3698 = vunpack.c.l.b16 %v3570
    %v3699 = vunpack.c.l.b16 %v3571
    %v3700 = vunpack.c.l.b16 %v3572
    %v3701 = vunpack.c.l.b16 %v3573
    %v3702 = vunpack.c.l.b16 %v3574
    %v3703 = vunpack.c.l.b16 %v3575
    %v3704 = vunpack.c.l.b16 %v3576
    %v3705 = vunpack.c.l.b16 %v3577
    %v3706 = vunpack.c.l.b16 %v3578
    %v3707 = vunpack.c.l.b16 %v3579
    %v3708 = vunpack.c.l.b16 %v3580
    %v3709 = vunpack.c.l.b16 %v3581
    %v3710 = vunpack.c.l.b16 %v3582
    %v3711 = vunpack.c.l.b16 %v3583
    %v3712 = vunpack.c.l.b16 %v3584
    %v3713 = vunpack.c.l.b16 %v3585
    %v3714 = vunpack.c.l.b16 %v3586
    %v3715 = vunpack.c.l.b16 %v3587
    %v3716 = vunpack.c.l.b16 %v3588
    %v3717 = vunpack.c.l.b16 %v3589
    %v3718 = vunpack.c.l.b16 %v3590
    %v3719 = vunpack.c.l.b16 %v3591
    %v3720 = vunpack.c.l.b16 %v3592
    %v3721 = vunpack.c.l.b16 %v3593
    %v3722 = vunpack.c.l.b16 %v3594
    %v3723 = vunpack.c.l.b16 %v3595
    %v3724 = vunpack.c.l.b16 %v3596
    %v3725 = vunpack.c.l.b16 %v3597
    %v3726 = vunpack.c.l.b16 %v3598
    %v3727 = vunpack.c.l.b16 %v3599
    %v3728 = vunpack.c.l.b16 %v3600
    %v3729 = vunpack.c.l.b16 %v3601
    %v3730 = vunpack.c.l.b16 %v3602
    %v3731 = vunpack.c.l.b16 %v3603
    %v3732 = vunpack.c.l.b16 %v3604
    %v3733 = vunpack.c.l.b16 %v3605
    %v3734 = vunpack.c.l.b16 %v3606
    %v3735 = vpack.c.b16 %v3672, %v3671
    %v3736 = vpack.c.b16 %v3674, %v3673
    %v3737 = vpack.c.b16 %v3676, %v3675
    %v3738 = vpack.c.b16 %v3678, %v3677
    %v3739 = vpack.c.b16 %v3680, %v3679
    %v3740 = vpack.c.b16 %v3682, %v3681
    %v3741 = vpack.c.b16 %v3684, %v3683
    %v3742 = vpack.c.b16 %v3686, %v3685
    %v3743 = vpack.c.b16 %v3688, %v3687
    %v3744 = vpack.c.b16 %v3690, %v3689
    %v3745 = vpack.c.b16 %v3692, %v3691
    %v3746 = vpack.c.b16 %v3694, %v3693
    %v3747 = vpack.c.b16 %v3696, %v3695
    %v3748 = vpack.c.b16 %v3698, %v3697
    %v3749 = vpack.c.b16 %v3700, %v3699
    %v3750 = vpack.c.b16 %v3702, %v3701
    %v3751 = vpack.c.b16 %v3704, %v3703
    %v3752 = vpack.c.b16 %v3706, %v3705
    %v3753 = vpack.c.b16 %v3708, %v3707
    %v3754 = vpack.c.b16 %v3710, %v3709
    %v3755 = vpack.c.b16 %v3712, %v3711
    %v3756 = vpack.c.b16 %v3714, %v3713
    %v3757 = vpack.c.b16 %v3716, %v3715
    %v3758 = vpack.c.b16 %v3718, %v3717
    %v3759 = vpack.c.b16 %v3720, %v3719
    %v3760 = vpack.c.b16 %v3722, %v3721
    %v3761 = vpack.c.b16 %v3724, %v3723
    %v3762 = vpack.c.b16 %v3726, %v3725
    %v3763 = vpack.c.b16 %v3728, %v3727
    %v3764 = vpack.c.b16 %v3730, %v3729
    %v3765 = vpack.c.b16 %v3732, %v3731
    %v3766 = vpack.c.b16 %v3734, %v3733
    %3799 = vmatprep.subr.bf16.mxu0 0
    %3800 = vmatpush1.bf16.msra.mxu0 %v3735
    %3801 = vmatprep.subr.bf16.mxu0 0
    %3802 = vmatpush1.bf16.msra.mxu0 %v3736
    %3803 = vmatprep.subr.bf16.mxu0 0
    %3804 = vmatpush1.bf16.msra.mxu0 %v3737
    %3805 = vmatprep.subr.bf16.mxu0 0
    %3806 = vmatpush1.bf16.msra.mxu0 %v3738
    %3807 = vmatprep.subr.bf16.mxu0 0
    %3808 = vmatpush1.bf16.msra.mxu0 %v3739
    %3809 = vmatprep.subr.bf16.mxu0 0
    %3810 = vmatpush1.bf16.msra.mxu0 %v3740
    %3811 = vmatprep.subr.bf16.mxu0 0
    %3812 = vmatpush1.bf16.msra.mxu0 %v3741
    %3813 = vmatprep.subr.bf16.mxu0 0
    %3814 = vmatpush1.bf16.msra.mxu0 %v3742
    %3815 = vmatprep.subr.bf16.mxu0 0
    %3816 = vmatpush1.bf16.msra.mxu0 %v3743
    %3817 = vmatprep.subr.bf16.mxu0 0
    %3818 = vmatpush1.bf16.msra.mxu0 %v3744
    %3819 = vmatprep.subr.bf16.mxu0 0
    %3820 = vmatpush1.bf16.msra.mxu0 %v3745
    %3821 = vmatprep.subr.bf16.mxu0 0
    %3822 = vmatpush1.bf16.msra.mxu0 %v3746
    %3823 = vmatprep.subr.bf16.mxu0 0
    %3824 = vmatpush1.bf16.msra.mxu0 %v3747
    %3825 = vmatprep.subr.bf16.mxu0 0
    %3826 = vmatpush1.bf16.msra.mxu0 %v3748
    %3827 = vmatprep.subr.bf16.mxu0 0
    %3828 = vmatpush1.bf16.msra.mxu0 %v3749
    %3829 = vmatprep.subr.bf16.mxu0 0
    %3830 = vmatpush1.bf16.msra.mxu0 %v3750
    %3831 = vmatprep.mubr.bf16.mxu0 %v3476
    %3832 = vmatmul.mubr.bf16.gmra.mrb[0].mxu0 %v3475
    %v3833 = vpop.f32.mrb[0].mxu0
    %v3834 = vadd.f32 0.0, %v3833
    %v3835 = vpop.f32.mrb[0].mxu0
    %v3836 = vpop.f32.mrb[0].mxu0
    %v3837 = vpop.f32.mrb[0].mxu0
    %3838 = vdwg.mxu0
    %3839 = vmatprep.subr.bf16.mxu0 0
    %3840 = vmatpush1.bf16.msra.mxu0 %v3751
    %3841 = vmatprep.subr.bf16.mxu0 0
    %3842 = vmatpush1.bf16.msra.mxu0 %v3752
    %3843 = vmatprep.subr.bf16.mxu0 0
    %3844 = vmatpush1.bf16.msra.mxu0 %v3753
    %3845 = vmatprep.subr.bf16.mxu0 0
    %3846 = vmatpush1.bf16.msra.mxu0 %v3754
    %3847 = vmatprep.subr.bf16.mxu0 0
    %3848 = vmatpush1.bf16.msra.mxu0 %v3755
    %3849 = vmatprep.subr.bf16.mxu0 0
    %3850 = vmatpush1.bf16.msra.mxu0 %v3756
    %3851 = vmatprep.subr.bf16.mxu0 0
    %3852 = vmatpush1.bf16.msra.mxu0 %v3757
    %3853 = vmatprep.subr.bf16.mxu0 0
    %3854 = vmatpush1.bf16.msra.mxu0 %v3758
    %3855 = vmatprep.subr.bf16.mxu0 0
    %3856 = vmatpush1.bf16.msra.mxu0 %v3759
    %3857 = vmatprep.subr.bf16.mxu0 0
    %3858 = vmatpush1.bf16.msra.mxu0 %v3760
    %3859 = vmatprep.subr.bf16.mxu0 0
    %3860 = vmatpush1.bf16.msra.mxu0 %v3761
    %3861 = vmatprep.subr.bf16.mxu0 0
    %3862 = vmatpush1.bf16.msra.mxu0 %v3762
    %3863 = vmatprep.subr.bf16.mxu0 0
    %3864 = vmatpush1.bf16.msra.mxu0 %v3763
    %3865 = vmatprep.subr.bf16.mxu0 0
    %3866 = vmatpush1.bf16.msra.mxu0 %v3764
    %3867 = vmatprep.subr.bf16.mxu0 0
    %3868 = vmatpush1.bf16.msra.mxu0 %v3765
    %3869 = vmatprep.subr.bf16.mxu0 0
    %3870 = vmatpush1.bf16.msra.mxu0 %v3766
    %3871 = vmatprep.mubr.bf16.mxu0 %v3478
    %3872 = vmatmul.mubr.bf16.gmra.mrb[0].mxu0 %v3477
    %v3873 = vpop.f32.mrb[0].mxu0
    %v3874 = vadd.f32 %v3834, %v3873
    %v3875 = vpop.f32.mrb[0].mxu0
    %v3876 = vpop.f32.mrb[0].mxu0
    %v3877 = vpop.f32.mrb[0].mxu0
    %3878 = vdwg.mxu0
    %v3943 = vunpack.c.l.b16 %v3479
    %v3944 = vunpack.c.l.b16 %v3480
    %v3945 = vunpack.c.l.b16 %v3481
    %v3946 = vunpack.c.l.b16 %v3482
    %v3947 = vunpack.c.l.b16 %v3483
    %v3948 = vunpack.c.l.b16 %v3484
    %v3949 = vunpack.c.l.b16 %v3485
    %v3950 = vunpack.c.l.b16 %v3486
    %v3951 = vunpack.c.l.b16 %v3487
    %v3952 = vunpack.c.l.b16 %v3488
    %v3953 = vunpack.c.l.b16 %v3489
    %v3954 = vunpack.c.l.b16 %v3490
    %v3955 = vunpack.c.l.b16 %v3491
    %v3956 = vunpack.c.l.b16 %v3492
    %v3957 = vunpack.c.l.b16 %v3493
    %v3958 = vunpack.c.l.b16 %v3494
    %v3959 = vunpack.c.l.b16 %v3495
    %v3960 = vunpack.c.l.b16 %v3496
    %v3961 = vunpack.c.l.b16 %v3497
    %v3962 = vunpack.c.l.b16 %v3498
    %v3963 = vunpack.c.l.b16 %v3499
    %v3964 = vunpack.c.l.b16 %v3500
    %v3965 = vunpack.c.l.b16 %v3501
    %v3966 = vunpack.c.l.b16 %v3502
    %v3967 = vunpack.c.l.b16 %v3503
    %v3968 = vunpack.c.l.b16 %v3504
    %v3969 = vunpack.c.l.b16 %v3505
    %v3970 = vunpack.c.l.b16 %v3506
    %v3971 = vunpack.c.l.b16 %v3507
    %v3972 = vunpack.c.l.b16 %v3508
    %v3973 = vunpack.c.l.b16 %v3509
    %v3974 = vunpack.c.l.b16 %v3510
    %v3975 = vunpack.c.l.b16 %v3511
    %v3976 = vunpack.c.l.b16 %v3512
    %v3977 = vunpack.c.l.b16 %v3513
    %v3978 = vunpack.c.l.b16 %v3514
    %v3979 = vunpack.c.l.b16 %v3515
    %v3980 = vunpack.c.l.b16 %v3516
    %v3981 = vunpack.c.l.b16 %v3517
    %v3982 = vunpack.c.l.b16 %v3518
    %v3983 = vunpack.c.l.b16 %v3519
    %v3984 = vunpack.c.l.b16 %v3520
    %v3985 = vunpack.c.l.b16 %v3521
    %v3986 = vunpack.c.l.b16 %v3522
    %v3987 = vunpack.c.l.b16 %v3523
    %v3988 = vunpack.c.l.b16 %v3524
    %v3989 = vunpack.c.l.b16 %v3525
    %v3990 = vunpack.c.l.b16 %v3526
    %v3991 = vunpack.c.l.b16 %v3527
    %v3992 = vunpack.c.l.b16 %v3528
    %v3993 = vunpack.c.l.b16 %v3529
    %v3994 = vunpack.c.l.b16 %v3530
    %v3995 = vunpack.c.l.b16 %v3531
    %v3996 = vunpack.c.l.b16 %v3532
    %v3997 = vunpack.c.l.b16 %v3533
    %v3998 = vunpack.c.l.b16 %v3534
    %v3999 = vunpack.c.l.b16 %v3535
    %v4000 = vunpack.c.l.b16 %v3536
    %v4001 = vunpack.c.l.b16 %v3537
    %v4002 = vunpack.c.l.b16 %v3538
    %v4003 = vunpack.c.l.b16 %v3539
    %v4004 = vunpack.c.l.b16 %v3540
    %v4005 = vunpack.c.l.b16 %v3541
    %v4006 = vunpack.c.l.b16 %v3542
    %v4007 = vpack.c.b16 %v3944, %v3943
    %v4008 = vpack.c.b16 %v3946, %v3945
    %v4009 = vpack.c.b16 %v3948, %v3947
    %v4010 = vpack.c.b16 %v3950, %v3949
    %v4011 = vpack.c.b16 %v3952, %v3951
    %v4012 = vpack.c.b16 %v3954, %v3953
    %v4013 = vpack.c.b16 %v3956, %v3955
    %v4014 = vpack.c.b16 %v3958, %v3957
    %v4015 = vpack.c.b16 %v3960, %v3959
    %v4016 = vpack.c.b16 %v3962, %v3961
    %v4017 = vpack.c.b16 %v3964, %v3963
    %v4018 = vpack.c.b16 %v3966, %v3965
    %v4019 = vpack.c.b16 %v3968, %v3967
    %v4020 = vpack.c.b16 %v3970, %v3969
    %v4021 = vpack.c.b16 %v3972, %v3971
    %v4022 = vpack.c.b16 %v3974, %v3973
    %v4023 = vpack.c.b16 %v3976, %v3975
    %v4024 = vpack.c.b16 %v3978, %v3977
    %v4025 = vpack.c.b16 %v3980, %v3979
    %v4026 = vpack.c.b16 %v3982, %v3981
    %v4027 = vpack.c.b16 %v3984, %v3983
    %v4028 = vpack.c.b16 %v3986, %v3985
    %v4029 = vpack.c.b16 %v3988, %v3987
    %v4030 = vpack.c.b16 %v3990, %v3989
    %v4031 = vpack.c.b16 %v3992, %v3991
    %v4032 = vpack.c.b16 %v3994, %v3993
    %v4033 = vpack.c.b16 %v3996, %v3995
    %v4034 = vpack.c.b16 %v3998, %v3997
    %v4035 = vpack.c.b16 %v4000, %v3999
    %v4036 = vpack.c.b16 %v4002, %v4001
    %v4037 = vpack.c.b16 %v4004, %v4003
    %v4038 = vpack.c.b16 %v4006, %v4005
    %4071 = vmatprep.subr.bf16.mxu0 0
    %4072 = vmatpush1.bf16.msra.mxu0 %v4007
    %4073 = vmatprep.subr.bf16.mxu0 0
    %4074 = vmatpush1.bf16.msra.mxu0 %v4008
    %4075 = vmatprep.subr.bf16.mxu0 0
    %4076 = vmatpush1.bf16.msra.mxu0 %v4009
    %4077 = vmatprep.subr.bf16.mxu0 0
    %4078 = vmatpush1.bf16.msra.mxu0 %v4010
    %4079 = vmatprep.subr.bf16.mxu0 0
    %4080 = vmatpush1.bf16.msra.mxu0 %v4011
    %4081 = vmatprep.subr.bf16.mxu0 0
    %4082 = vmatpush1.bf16.msra.mxu0 %v4012
    %4083 = vmatprep.subr.bf16.mxu0 0
    %4084 = vmatpush1.bf16.msra.mxu0 %v4013
    %4085 = vmatprep.subr.bf16.mxu0 0
    %4086 = vmatpush1.bf16.msra.mxu0 %v4014
    %4087 = vmatprep.subr.bf16.mxu0 0
    %4088 = vmatpush1.bf16.msra.mxu0 %v4015
    %4089 = vmatprep.subr.bf16.mxu0 0
    %4090 = vmatpush1.bf16.msra.mxu0 %v4016
    %4091 = vmatprep.subr.bf16.mxu0 0
    %4092 = vmatpush1.bf16.msra.mxu0 %v4017
    %4093 = vmatprep.subr.bf16.mxu0 0
    %4094 = vmatpush1.bf16.msra.mxu0 %v4018
    %4095 = vmatprep.subr.bf16.mxu0 0
    %4096 = vmatpush1.bf16.msra.mxu0 %v4019
    %4097 = vmatprep.subr.bf16.mxu0 0
    %4098 = vmatpush1.bf16.msra.mxu0 %v4020
    %4099 = vmatprep.subr.bf16.mxu0 0
    %4100 = vmatpush1.bf16.msra.mxu0 %v4021
    %4101 = vmatprep.subr.bf16.mxu0 0
    %4102 = vmatpush1.bf16.msra.mxu0 %v4022
    %4103 = vmatprep.mubr.bf16.mxu0 %v3472
    %4104 = vmatmul.mubr.bf16.gmra.mrb[0].mxu0 %v3471
    %v4105 = vpop.f32.mrb[0].mxu0
    %v4106 = vadd.f32 %v3874, %v4105
    %v4107 = vpop.f32.mrb[0].mxu0
    %v4108 = vpop.f32.mrb[0].mxu0
    %v4109 = vpop.f32.mrb[0].mxu0
    %4110 = vdwg.mxu0
    %4111 = vmatprep.subr.bf16.mxu0 0
    %4112 = vmatpush1.bf16.msra.mxu0 %v4023
    %4113 = vmatprep.subr.bf16.mxu0 0
    %4114 = vmatpush1.bf16.msra.mxu0 %v4024
    %4115 = vmatprep.subr.bf16.mxu0 0
    %4116 = vmatpush1.bf16.msra.mxu0 %v4025
    %4117 = vmatprep.subr.bf16.mxu0 0
    %4118 = vmatpush1.bf16.msra.mxu0 %v4026
    %4119 = vmatprep.subr.bf16.mxu0 0
    %4120 = vmatpush1.bf16.msra.mxu0 %v4027
    %4121 = vmatprep.subr.bf16.mxu0 0
    %4122 = vmatpush1.bf16.msra.mxu0 %v4028
    %4123 = vmatprep.subr.bf16.mxu0 0
    %4124 = vmatpush1.bf16.msra.mxu0 %v4029
    %4125 = vmatprep.subr.bf16.mxu0 0
    %4126 = vmatpush1.bf16.msra.mxu0 %v4030
    %4127 = vmatprep.subr.bf16.mxu0 0
    %4128 = vmatpush1.bf16.msra.mxu0 %v4031
    %4129 = vmatprep.subr.bf16.mxu0 0
    %4130 = vmatpush1.bf16.msra.mxu0 %v4032
    %4131 = vmatprep.subr.bf16.mxu0 0
    %4132 = vmatpush1.bf16.msra.mxu0 %v4033
    %4133 = vmatprep.subr.bf16.mxu0 0
    %4134 = vmatpush1.bf16.msra.mxu0 %v4034
    %4135 = vmatprep.subr.bf16.mxu0 0
    %4136 = vmatpush1.bf16.msra.mxu0 %v4035
    %4137 = vmatprep.subr.bf16.mxu0 0
    %4138 = vmatpush1.bf16.msra.mxu0 %v4036
    %4139 = vmatprep.subr.bf16.mxu0 0
    %4140 = vmatpush1.bf16.msra.mxu0 %v4037
    %4141 = vmatprep.subr.bf16.mxu0 0
    %4142 = vmatpush1.bf16.msra.mxu0 %v4038
    %4143 = vmatprep.mubr.bf16.mxu0 %v3474
    %4144 = vmatmul.mubr.bf16.gmra.mrb[0].mxu0 %v3473
    %v4145 = vpop.f32.mrb[0].mxu0
    %v4146 = vadd.f32 %v4106, %v4145
    %v4147 = vpop.f32.mrb[0].mxu0
    %v4148 = vpop.f32.mrb[0].mxu0
    %v4149 = vpop.f32.mrb[0].mxu0
    %4150 = vdwg.mxu0
    %v4151 = vld [vmem:[%s8] sm:$0x1]
    %v4153 = vlaneseq
    %v4154 = vshrl.u32 %v4153, 7
    %v4155 = vsub.s32 0, %v4154
    %v4156 = vrot.slane %v4151, %v4155
    %v4158 = vadd.f32 %v4146, %v4156
    %4159 = vst [vmem:[#allocation17] sm:$0xff] %v4158
    %4160 = vmatprep.subr.bf16.mxu0 %v3476
    %4161 = vmatpush1.bf16.xpose.msra.mxu0 %v3475
    %4162 = vmatprep.subr.bf16.mxu0 0
    %4163 = vmatpush1.bf16.xpose.msra.mxu0 0
    %4164 = vmatprep.subr.bf16.mxu0 0
    %4165 = vmatpush1.bf16.xpose.msra.mxu0 0
    %4166 = vmatprep.subr.bf16.mxu0 0
    %4167 = vmatpush1.bf16.xpose.msra.mxu0 0
    %4168 = vmatprep.subr.bf16.mxu0 0
    %4169 = vmatpush1.bf16.xpose.msra.mxu0 0
    %4170 = vmatprep.subr.bf16.mxu0 0
    %4171 = vmatpush1.bf16.xpose.msra.mxu0 0
    %4172 = vmatprep.subr.bf16.mxu0 0
    %4173 = vmatpush1.bf16.xpose.msra.mxu0 0
    %4174 = vmatprep.subr.bf16.mxu0 0
    %4175 = vmatpush1.bf16.xpose.msra.mxu0 0
    %4176 = vmatprep.subr.bf16.mxu0 0
    %4177 = vmatpush1.bf16.xpose.msra.mxu0 0
    %4178 = vmatprep.subr.bf16.mxu0 0
    %4179 = vmatpush1.bf16.xpose.msra.mxu0 0
    %4180 = vmatprep.subr.bf16.mxu0 0
    %4181 = vmatpush1.bf16.xpose.msra.mxu0 0
    %4182 = vmatprep.subr.bf16.mxu0 0
    %4183 = vmatpush1.bf16.xpose.msra.mxu0 0
    %4184 = vmatprep.subr.bf16.mxu0 0
    %4185 = vmatpush1.bf16.xpose.msra.mxu0 0
    %4186 = vmatprep.subr.bf16.mxu0 0
    %4187 = vmatpush1.bf16.xpose.msra.mxu0 0
    %4188 = vmatprep.subr.bf16.mxu0 0
    %4189 = vmatpush1.bf16.xpose.msra.mxu0 0
    %4190 = vmatprep.subr.bf16.mxu0 0
    %4191 = vmatpush1.bf16.xpose.msra.mxu0 0
    %4192 = vmatprep.mubr.bf16.mxu0 %v3472
    %4193 = vmatmul.mubr.bf16.gmra.mrb[0].mxu0 %v3471
    %v4194 = vpop.f32.mrb[0].mxu0
    %v4195 = vadd.f32 0.0, %v4194
    %v4196 = vpop.f32.mrb[0].mxu0
    %v4197 = vpop.f32.mrb[0].mxu0
    %v4198 = vpop.f32.mrb[0].mxu0
    %4199 = vdwg.mxu0
    %4200 = vmatprep.subr.bf16.mxu0 %v3478
    %4201 = vmatpush1.bf16.xpose.msra.mxu0 %v3477
    %4202 = vmatprep.subr.bf16.mxu0 0
    %4203 = vmatpush1.bf16.xpose.msra.mxu0 0
    %4204 = vmatprep.subr.bf16.mxu0 0
    %4205 = vmatpush1.bf16.xpose.msra.mxu0 0
    %4206 = vmatprep.subr.bf16.mxu0 0
    %4207 = vmatpush1.bf16.xpose.msra.mxu0 0
    %4208 = vmatprep.subr.bf16.mxu0 0
    %4209 = vmatpush1.bf16.xpose.msra.mxu0 0
    %4210 = vmatprep.subr.bf16.mxu0 0
    %4211 = vmatpush1.bf16.xpose.msra.mxu0 0
    %4212 = vmatprep.subr.bf16.mxu0 0
    %4213 = vmatpush1.bf16.xpose.msra.mxu0 0
    %4214 = vmatprep.subr.bf16.mxu0 0
    %4215 = vmatpush1.bf16.xpose.msra.mxu0 0
    %4216 = vmatprep.subr.bf16.mxu0 0
    %4217 = vmatpush1.bf16.xpose.msra.mxu0 0
    %4218 = vmatprep.subr.bf16.mxu0 0
    %4219 = vmatpush1.bf16.xpose.msra.mxu0 0
    %4220 = vmatprep.subr.bf16.mxu0 0
    %4221 = vmatpush1.bf16.xpose.msra.mxu0 0
    %4222 = vmatprep.subr.bf16.mxu0 0
    %4223 = vmatpush1.bf16.xpose.msra.mxu0 0
    %4224 = vmatprep.subr.bf16.mxu0 0
    %4225 = vmatpush1.bf16.xpose.msra.mxu0 0
    %4226 = vmatprep.subr.bf16.mxu0 0
    %4227 = vmatpush1.bf16.xpose.msra.mxu0 0
    %4228 = vmatprep.subr.bf16.mxu0 0
    %4229 = vmatpush1.bf16.xpose.msra.mxu0 0
    %4230 = vmatprep.subr.bf16.mxu0 0
    %4231 = vmatpush1.bf16.xpose.msra.mxu0 0
    %4232 = vmatprep.mubr.bf16.mxu0 %v3474
    %4233 = vmatmul.mubr.bf16.gmra.mrb[0].mxu0 %v3473
    %v4234 = vpop.f32.mrb[0].mxu0
    %v4235 = vadd.f32 %v4195, %v4234
    %v4236 = vpop.f32.mrb[0].mxu0
    %v4237 = vpop.f32.mrb[0].mxu0
    %v4238 = vpop.f32.mrb[0].mxu0
    %4239 = vdwg.mxu0
    %4240 = vmatprep.subr.bf16.mxu0 %v3472
    %4241 = vmatpush1.bf16.xpose.msra.mxu0 %v3471
    %4242 = vmatprep.subr.bf16.mxu0 0
    %4243 = vmatpush1.bf16.xpose.msra.mxu0 0
    %4244 = vmatprep.subr.bf16.mxu0 0
    %4245 = vmatpush1.bf16.xpose.msra.mxu0 0
    %4246 = vmatprep.subr.bf16.mxu0 0
    %4247 = vmatpush1.bf16.xpose.msra.mxu0 0
    %4248 = vmatprep.subr.bf16.mxu0 0
    %4249 = vmatpush1.bf16.xpose.msra.mxu0 0
    %4250 = vmatprep.subr.bf16.mxu0 0
    %4251 = vmatpush1.bf16.xpose.msra.mxu0 0
    %4252 = vmatprep.subr.bf16.mxu0 0
    %4253 = vmatpush1.bf16.xpose.msra.mxu0 0
    %4254 = vmatprep.subr.bf16.mxu0 0
    %4255 = vmatpush1.bf16.xpose.msra.mxu0 0
    %4256 = vmatprep.subr.bf16.mxu0 0
    %4257 = vmatpush1.bf16.xpose.msra.mxu0 0
    %4258 = vmatprep.subr.bf16.mxu0 0
    %4259 = vmatpush1.bf16.xpose.msra.mxu0 0
    %4260 = vmatprep.subr.bf16.mxu0 0
    %4261 = vmatpush1.bf16.xpose.msra.mxu0 0
    %4262 = vmatprep.subr.bf16.mxu0 0
    %4263 = vmatpush1.bf16.xpose.msra.mxu0 0
    %4264 = vmatprep.subr.bf16.mxu0 0
    %4265 = vmatpush1.bf16.xpose.msra.mxu0 0
    %4266 = vmatprep.subr.bf16.mxu0 0
    %4267 = vmatpush1.bf16.xpose.msra.mxu0 0
    %4268 = vmatprep.subr.bf16.mxu0 0
    %4269 = vmatpush1.bf16.xpose.msra.mxu0 0
    %4270 = vmatprep.subr.bf16.mxu0 0
    %4271 = vmatpush1.bf16.xpose.msra.mxu0 0
    %4272 = vmatprep.mubr.bf16.mxu0 %v3476
    %4273 = vmatmul.mubr.bf16.gmra.mrb[0].mxu0 %v3475
    %v4274 = vpop.f32.mrb[0].mxu0
    %v4275 = vadd.f32 0.0, %v4274
    %v4276 = vpop.f32.mrb[0].mxu0
    %v4277 = vpop.f32.mrb[0].mxu0
    %v4278 = vpop.f32.mrb[0].mxu0
    %4279 = vdwg.mxu0
    %4280 = vmatprep.subr.bf16.mxu0 %v3474
    %4281 = vmatpush1.bf16.xpose.msra.mxu0 %v3473
    %4282 = vmatprep.subr.bf16.mxu0 0
    %4283 = vmatpush1.bf16.xpose.msra.mxu0 0
    %4284 = vmatprep.subr.bf16.mxu0 0
    %4285 = vmatpush1.bf16.xpose.msra.mxu0 0
    %4286 = vmatprep.subr.bf16.mxu0 0
    %4287 = vmatpush1.bf16.xpose.msra.mxu0 0
    %4288 = vmatprep.subr.bf16.mxu0 0
    %4289 = vmatpush1.bf16.xpose.msra.mxu0 0
    %4290 = vmatprep.subr.bf16.mxu0 0
    %4291 = vmatpush1.bf16.xpose.msra.mxu0 0
    %4292 = vmatprep.subr.bf16.mxu0 0
    %4293 = vmatpush1.bf16.xpose.msra.mxu0 0
    %4294 = vmatprep.subr.bf16.mxu0 0
    %4295 = vmatpush1.bf16.xpose.msra.mxu0 0
    %4296 = vmatprep.subr.bf16.mxu0 0
    %4297 = vmatpush1.bf16.xpose.msra.mxu0 0
    %4298 = vmatprep.subr.bf16.mxu0 0
    %4299 = vmatpush1.bf16.xpose.msra.mxu0 0
    %4300 = vmatprep.subr.bf16.mxu0 0
    %4301 = vmatpush1.bf16.xpose.msra.mxu0 0
    %4302 = vmatprep.subr.bf16.mxu0 0
    %4303 = vmatpush1.bf16.xpose.msra.mxu0 0
    %4304 = vmatprep.subr.bf16.mxu0 0
    %4305 = vmatpush1.bf16.xpose.msra.mxu0 0
    %4306 = vmatprep.subr.bf16.mxu0 0
    %4307 = vmatpush1.bf16.xpose.msra.mxu0 0
    %4308 = vmatprep.subr.bf16.mxu0 0
    %4309 = vmatpush1.bf16.xpose.msra.mxu0 0
    %4310 = vmatprep.subr.bf16.mxu0 0
    %4311 = vmatpush1.bf16.xpose.msra.mxu0 0
    %4312 = vmatprep.mubr.bf16.mxu0 %v3478
    %4313 = vmatmul.mubr.bf16.gmra.mrb[0].mxu0 %v3477
    %v4314 = vpop.f32.mrb[0].mxu0
    %v4315 = vadd.f32 %v4275, %v4314
    %v4316 = vpop.f32.mrb[0].mxu0
    %v4317 = vpop.f32.mrb[0].mxu0
    %v4318 = vpop.f32.mrb[0].mxu0
    %4319 = vdwg.mxu0
    %v4320 = vmul.f32 %v4235, 1.442695
    %v4321 = vpow.pop %v4320
    %vm4322 = vcmask 64512
    %v4323 = vsel %vm4322, %v4321, 0.0
    %4324 = vadd.xlane.f32.xlu0 %v4323
    %v4325 = vpop.xlane.xlu0 %4324
    %v4326 = vlog2.pop %v4325
    %v4327 = vmul.f32 %v4326, 0.6931472
    %v4328 = vmul.f32 %v4315, 1.442695
    %v4329 = vpow.pop %v4328
    %v4330 = vsel %vm4322, %v4329, 0.0
    %4331 = vadd.xlane.f32.xlu0 %v4330
    %v4332 = vpop.xlane.xlu0 %4331
    %v4333 = vlog2.pop %v4332
    %v4334 = vmul.f32 %v4333, 0.6931472
    %v4335 = vmul.f32 %v1577, %v3463
    %v4336 = vmul.f32 %v1578, %v3464
    %v4337 = vmul.f32 %v1579, %v3465
    %v4338 = vmul.f32 %v1580, %v3466
    %v4339 = vadd.f32 %v4335, %v4336
    %v4340 = vadd.f32 %v4339, %v4337
    %v4341 = vadd.f32 %v4340, %v4338
    %4342 = vadd.xlane.f32.xlu0 %v4341
    %v4343 = vpop.xlane.xlu0 %4342
    %vm4344 = vcmask 7168
    %v4345 = vsel %vm4344, %v4327, 0.0
    %4346 = vadd.xlane.f32.xlu0 %v4345
    %v4347 = vpop.xlane.xlu0 %4346
    %v4348 = vrot.slane %v4347, 4
    %v4349 = vadd.f32 %v4347, %v4348
    %v4350 = vrot.slane %v4349, 2
    %v4351 = vadd.f32 %v4349, %v4350
    %v4352 = vrot.slane %v4351, 1
    %v4353 = vadd.f32 %v4351, %v4352
    %s4354 = vtos %v4353
    %v4355 = vsel %vm4344, %v4334, 0.0
    %4356 = vadd.xlane.f32.xlu0 %v4355
    %v4357 = vpop.xlane.xlu0 %4356
    %v4358 = vrot.slane %v4357, 4
    %v4359 = vadd.f32 %v4357, %v4358
    %v4360 = vrot.slane %v4359, 2
    %v4361 = vadd.f32 %v4359, %v4360
    %v4362 = vrot.slane %v4361, 1
    %v4363 = vadd.f32 %v4361, %v4362
    %s4364 = vtos %v4363
    %s4365 = sadd.f32 %s4354, %s4364
    %v4366 = vsel %vm4344, %v4343, 0.0
    %4367 = vadd.xlane.f32.xlu0 %v4366
    %v4368 = vpop.xlane.xlu0 %4367
    %v4369 = vrot.slane %v4368, 4
    %v4370 = vadd.f32 %v4368, %v4369
    %v4371 = vrot.slane %v4370, 2
    %v4372 = vadd.f32 %v4370, %v4371
    %v4373 = vrot.slane %v4372, 1
    %v4374 = vadd.f32 %v4372, %v4373
    %s4375 = vtos %v4374
    %s4376 = smul.f32 %s4375, 2.0
    %s4377 = ssub.f32 %s4365, %s4376
    %v4378 = vrcp.pop 16.0
    %s4379 = vtos %v4378
    %s4380 = smul.f32 %s4377, %s4379
    %s4381 = scalar_lea.smem [#allocation18], 0
    %4382 = sst [smem:[%s4381]] %s4380
    // Predicated region
    $region62: #{constractive_forward.1} parent=1 // pred_check
      _
    $region63: #{constractive_forward.1} parent=1 // pred_check_branch
      %4384 = sbr.rel (0) target = $region65
    $region64: #{constractive_forward.1} parent=1 // pred_region
      %s4386 = ssub.s32 512, 512
      %4387 = vsyncadd [#allocation4], %s4386
      %s4389 = sshll.u32 [#allocation14], 4
      %s4390 = int_to_ptr.vmem [resolvable:$true] %s4389
      %4392 = dma.vmem_to_hbm [thread:$0]  %s4390, 512, %s9, [#allocation4]
    $region65: #{constractive_forward.1} parent=1 // pred_fallthru
      _
    // Predicated region
    $region66: #{constractive_forward.1} parent=1 // pred_check
      _
    $region67: #{constractive_forward.1} parent=1 // pred_check_branch
      %4394 = sbr.rel (0) target = $region69
    $region68: #{constractive_forward.1} parent=1 // pred_region
      %s4396 = ssub.s32 512, 512
      %4397 = vsyncadd [#allocation16], %s4396
      %s4399 = sshll.u32 [#allocation15], 4
      %s4400 = int_to_ptr.vmem [resolvable:$true] %s4399
      %4402 = dma.vmem_to_hbm [thread:$0]  %s4400, 512, %s10, [#allocation16]
    $region69: #{constractive_forward.1} parent=1 // pred_fallthru
      _
    // Predicated region
    $region70: #{constractive_forward.1} parent=1 // pred_check
      _
    $region71: #{constractive_forward.1} parent=1 // pred_check_branch
      %4404 = sbr.rel (0) target = $region73
    $region72: #{constractive_forward.1} parent=1 // pred_region
      %s4406 = ssub.s32 128, 128
      %4407 = vsyncadd [#allocation16], %s4406
      %s4409 = sshll.u32 [#allocation17], 4
      %s4410 = int_to_ptr.vmem [resolvable:$true] %s4409
      %4412 = dma.vmem_to_hbm [thread:$0]  %s4410, 128, %s11, [#allocation16]
    $region73: #{constractive_forward.1} parent=1 // pred_fallthru
      _
    // Predicated region
    $region74: #{constractive_forward.1} parent=1 // pred_check
      _
    $region75: #{constractive_forward.1} parent=1 // pred_check_branch
      %4414 = sbr.rel (0) target = $region77
    $region76: #{constractive_forward.1} parent=1 // pred_region
      %s4416 = ssub.s32 16, 16
      %4417 = vsyncadd [#allocation5], %s4416
      %4420 = dma.smem_to_hbm [#allocation18], 16, %s12, [#allocation5]
    $region77: #{constractive_forward.1} parent=1 // pred_fallthru
      _
    // Predicated region
    $region78: #{constractive_forward.1} parent=1 // pred_check
      _
    $region79: #{constractive_forward.1} parent=1 // pred_check_branch
      %4422 = sbr.rel (0) target = $region81
    $region80: #{constractive_forward.1} parent=1 // pred_region
      %4423 = dma.done [#allocation4], 512
    $region81: #{constractive_forward.1} parent=1 // pred_fallthru
      _
    // Predicated region
    $region82: #{constractive_forward.1} parent=1 // pred_check
      _
    $region83: #{constractive_forward.1} parent=1 // pred_check_branch
      %4425 = sbr.rel (0) target = $region85
    $region84: #{constractive_forward.1} parent=1 // pred_region
      %4426 = dma.done [#allocation16], 512
    $region85: #{constractive_forward.1} parent=1 // pred_fallthru
      _
    // Predicated region
    $region86: #{constractive_forward.1} parent=1 // pred_check
      _
    $region87: #{constractive_forward.1} parent=1 // pred_check_branch
      %4428 = sbr.rel (0) target = $region89
    $region88: #{constractive_forward.1} parent=1 // pred_region
      %4429 = dma.done [#allocation16], 128
    $region89: #{constractive_forward.1} parent=1 // pred_fallthru
      _
    // Predicated region
    $region90: #{constractive_forward.1} parent=1 // pred_check
      _
    $region91: #{constractive_forward.1} parent=1 // pred_check_branch
      %4431 = sbr.rel (0) target = $region93
    $region92: #{constractive_forward.1} parent=1 // pred_region
      %4432 = dma.done [#allocation5], 16
    $region93: #{constractive_forward.1} parent=1 // pred_fallthru
      _
    %4433 = sfence
    %4434 = vsyncpa [#allocation3], 1
    %4435 = vsyncpa [#allocation7], 1
    %4436 = vsyncpa [#allocation10], 1
    %4437 = vsyncpa [#allocation13], 1
    %4438 = vsyncpa [#allocation4], 1
    %4439 = vsyncpa [#allocation16], 1
    %4440 = vsyncpa [#allocation5], 1

</llo_original>
